<compile_context>
chip_gen: v7x
topology: tpu7x:2x2x1
jax: 0.10.0
libtpu: 0.0.40
codegen_flags: <defaults>
</compile_context>

<pallas_src>
import jax
import jax.numpy as jnp
from jax import lax
from jax.experimental import pallas as pl
from jax.experimental.pallas import tpu as pltpu

HIDDEN = 128
INPUT_SIZE = 1
OUTPUT_SIZE = 1


def _sigmoid(x):
    # exp (EUP) + approximate reciprocal (EUP) -> no VPU divide sequence.
    return pl.reciprocal(1.0 + jnp.exp(-x), approx=True)


def lstm_kernel(x_ref, wih0_ref, whh0_ref, b0_ref,
                w1_ref, b1_ref, wlin_ref, blin_ref,
                out_ref, xproj_ref):
    """Full 2-layer LSTM recurrence + final Linear.

    x_ref    : (L, 1)    f32   univariate input sequence
    wih0_ref : (1, 4H)   f32   W_ih_l0^T, gate columns ordered [i, f, o, g]
    whh0_ref : (H, 4H)   bf16  W_hh_l0^T,      "        "
    b0_ref   : (1, 4H)   f32   b_ih_l0 + b_hh_l0
    w1_ref   : (2H, 4H)  bf16  [W_ih_l1^T ; W_hh_l1^T] stacked along K
    b1_ref   : (1, 4H)   f32   b_ih_l1 + b_hh_l1
    wlin_ref : (H, 1)    f32   linear.weight^T
    blin_ref : (1, 1)    f32
    out_ref  : (1, 1)    f32
    xproj_ref: (L, 4H)   f32   scratch: precomputed layer-0 input projection
    """
    L = x_ref.shape[0]
    H = HIDDEN

    # --- Preamble: layer-0 input projection for every timestep at once.
    # input_size == 1, so x @ W_ih_l0^T is an outer product -> VPU broadcast,
    # no degenerate K=1 MXU push, and it fixes the lane-sparse (L, 1) layout.
    xproj_ref[...] = x_ref[...] * wih0_ref[...] + b0_ref[...]

    # Hoist weight loads out of the recurrence loop.
    whh0 = whh0_ref[...]          # (H, 4H)  bf16
    w1 = w1_ref[...]              # (2H, 4H) bf16
    b1 = b1_ref[...]              # (1, 4H)  f32

    def cell(gates, c_prev):
        # Gate columns packed wrapper-side as [i, f, o, g]:
        # one wide sigmoid over (1, 3H), one tanh over (1, H).
        sig = _sigmoid(gates[:, 0:3 * H])
        g = jnp.tanh(gates[:, 3 * H:4 * H])
        i = sig[:, 0 * H:1 * H]
        f = sig[:, 1 * H:2 * H]
        o = sig[:, 2 * H:3 * H]
        c_new = f * c_prev + i * g
        h_new = o * jnp.tanh(c_new)
        return h_new, c_new

    def step(t, carry):
        h1, c1, h2, c2 = carry
        # Layer 0: only the recurrent matmul is left on the per-step path.
        g1 = (xproj_ref[pl.ds(t, 1), :]
              + jnp.dot(h1.astype(jnp.bfloat16), whh0,
                        preferred_element_type=jnp.float32))     # (1, 4H) f32
        h1n, c1n = cell(g1, c1)
        # Layer 1: single fused matmul with K = 2H.
        hcat = jnp.concatenate([h1n, h2], axis=1).astype(jnp.bfloat16)  # (1, 2H)
        g2 = jnp.dot(hcat, w1, preferred_element_type=jnp.float32) + b1  # (1, 4H)
        h2n, c2n = cell(g2, c2)
        return (h1n, c1n, h2n, c2n)

    zeros = jnp.zeros((1, H), jnp.float32)
    # Fully unrolled: L is a small static constant, and unrolling lets the
    # scheduler interleave layer-0(t+1) MXU work with layer-1(t) EUP/VPU work.
    _, _, h2, _ = lax.fori_loop(0, L, step, (zeros, zeros, zeros, zeros),
                                unroll=True)

    # Final Linear on the last timestep's layer-2 hidden state (f32).
    out_ref[...] = (jnp.dot(h2, wlin_ref[...],
                            preferred_element_type=jnp.float32)
                    + blin_ref[...])


def _reorder_gates(w, axis=0):
    """PyTorch gate stacking [i, f, g, o] -> kernel order [i, f, o, g]."""
    i, f, g, o = jnp.split(w, 4, axis=axis)
    return jnp.concatenate([i, f, o, g], axis=axis)


def init_params(key, hidden=HIDDEN, input_size=INPUT_SIZE,
                output_size=OUTPUT_SIZE):
    """PyTorch-shaped init (uniform(-1/sqrt(H), 1/sqrt(H))), packed for the kernel."""
    k = 1.0 / jnp.sqrt(jnp.float32(hidden))
    keys = jax.random.split(key, 10)

    def u(rk, shape):
        return jax.random.uniform(rk, shape, jnp.float32, -k, k)

    # Layer 0: W_ih_l0 (4H, in), W_hh_l0 (4H, H), biases (4H,)
    wih0 = u(keys[0], (4 * hidden, input_size))
    whh0 = u(keys[1], (4 * hidden, hidden))
    bih0 = u(keys[2], (4 * hidden,))
    bhh0 = u(keys[3], (4 * hidden,))
    # Layer 1: W_ih_l1 (4H, H), W_hh_l1 (4H, H)
    wih1 = u(keys[4], (4 * hidden, hidden))
    whh1 = u(keys[5], (4 * hidden, hidden))
    bih1 = u(keys[6], (4 * hidden,))
    bhh1 = u(keys[7], (4 * hidden,))
    # Linear: weight (out, H), bias (out,)
    wlin = u(keys[8], (output_size, hidden))
    blin = u(keys[9], (output_size,))

    r = _reorder_gates
    return {
        # Layer 0
        "wih0_t": r(wih0).T,                                       # (in, 4H) f32
        "whh0_t": r(whh0).T.astype(jnp.bfloat16),                  # (H, 4H) bf16
        "b0": (r(bih0) + r(bhh0)).reshape(1, 4 * hidden),          # (1, 4H) f32
        # Layer 1: [W_ih^T ; W_hh^T] stacked along the contraction dim
        "w1": jnp.concatenate([r(wih1).T, r(whh1).T],
                              axis=0).astype(jnp.bfloat16),        # (2H, 4H) bf16
        "b1": (r(bih1) + r(bhh1)).reshape(1, 4 * hidden),          # (1, 4H) f32
        # Linear
        "wlin_t": wlin.T,                                          # (H, out) f32
        "blin": blin.reshape(1, output_size),                      # (1, out) f32
    }


def lstm_forward(x, params):
    """x: (seq_len, INPUT_SIZE) f32. Returns (OUTPUT_SIZE,) — PyTorch predictions[-1]."""
    L = x.shape[0]
    vmem = pl.BlockSpec(memory_space=pltpu.MemorySpace.VMEM)
    args = (x,
            params["wih0_t"], params["whh0_t"], params["b0"],
            params["w1"], params["b1"],
            params["wlin_t"], params["blin"])
    out = pl.pallas_call(
        lstm_kernel,
        out_shape=jax.ShapeDtypeStruct((1, OUTPUT_SIZE), jnp.float32),
        in_specs=[vmem] * len(args),
        out_specs=vmem,
        scratch_shapes=[pltpu.VMEM((L, 4 * HIDDEN), jnp.float32)],
    )(*args)
    return out.reshape(OUTPUT_SIZE)


if __name__ == "__main__":
    key = jax.random.PRNGKey(0)
    pkey, xkey = jax.random.split(key)

    params = init_params(pkey)

    seq_len = 8
    # Univariate series, as in the AirPassengers example: (L,) -> (L, 1)
    input_seq = jax.random.normal(xkey, (seq_len,), jnp.float32)
    x = input_seq.reshape(seq_len, INPUT_SIZE)

    pred = lstm_forward(x, params)
    jax.block_until_ready(pred)
    assert pred.shape == (OUTPUT_SIZE,)
    print("KERNEL_OK")
</pallas_src>

<mosaic_0001>
module attributes {stable_mosaic.version = 11 : i64} {
  func.func @lstm_kernel(%arg0: memref<8x1xf32, #tpu.memory_space<vmem>>, %arg1: memref<1x512xf32, #tpu.memory_space<vmem>>, %arg2: memref<128x512xbf16, #tpu.memory_space<vmem>>, %arg3: memref<1x512xf32, #tpu.memory_space<vmem>>, %arg4: memref<256x512xbf16, #tpu.memory_space<vmem>>, %arg5: memref<1x512xf32, #tpu.memory_space<vmem>>, %arg6: memref<128x1xf32, #tpu.memory_space<vmem>>, %arg7: memref<1x1xf32, #tpu.memory_space<vmem>>, %arg8: memref<1x1xf32, #tpu.memory_space<vmem>>, %arg9: memref<8x512xf32, #tpu.memory_space<vmem>>) attributes {dimension_semantics = [], scalar_prefetch = 0 : i64, scratch_operands = 1 : i64, tpu.core_type = #tpu.core_type<tc>} {
    %c0 = arith.constant 0 : index
    %c0_0 = arith.constant 0 : index
    %0 = vector.load %arg0[%c0, %c0_0] : memref<8x1xf32, #tpu.memory_space<vmem>>, vector<8x1xf32>
    %c0_1 = arith.constant 0 : index
    %c0_2 = arith.constant 0 : index
    %1 = vector.load %arg1[%c0_1, %c0_2] : memref<1x512xf32, #tpu.memory_space<vmem>>, vector<1x512xf32>
    %2 = vector.broadcast %0 : vector<8x1xf32> to vector<8x512xf32>
    %3 = vector.broadcast %1 : vector<1x512xf32> to vector<8x512xf32>
    %4 = arith.mulf %2, %3 : vector<8x512xf32>
    %c0_3 = arith.constant 0 : index
    %c0_4 = arith.constant 0 : index
    %5 = vector.load %arg3[%c0_3, %c0_4] : memref<1x512xf32, #tpu.memory_space<vmem>>, vector<1x512xf32>
    %6 = vector.broadcast %5 : vector<1x512xf32> to vector<8x512xf32>
    %7 = arith.addf %4, %6 : vector<8x512xf32>
    %c0_5 = arith.constant 0 : index
    %c0_6 = arith.constant 0 : index
    %8 = vector.load %arg9[%c0_5, %c0_6] : memref<8x512xf32, #tpu.memory_space<vmem>>, vector<8x512xf32>
    tpu.vector_store %arg9[%c0_5, %c0_6], %7 {strides = array<i32>} : memref<8x512xf32, #tpu.memory_space<vmem>>, vector<8x512xf32>,
    %c0_7 = arith.constant 0 : index
    %c0_8 = arith.constant 0 : index
    %9 = vector.load %arg2[%c0_7, %c0_8] : memref<128x512xbf16, #tpu.memory_space<vmem>>, vector<128x512xbf16>
    %c0_9 = arith.constant 0 : index
    %c0_10 = arith.constant 0 : index
    %10 = vector.load %arg4[%c0_9, %c0_10] : memref<256x512xbf16, #tpu.memory_space<vmem>>, vector<256x512xbf16>
    %c0_11 = arith.constant 0 : index
    %c0_12 = arith.constant 0 : index
    %11 = vector.load %arg5[%c0_11, %c0_12] : memref<1x512xf32, #tpu.memory_space<vmem>>, vector<1x512xf32>
    %cst = arith.constant 0.000000e+00 : f32
    %12 = vector.broadcast %cst : f32 to vector<1x128xf32>
    %c0_i32 = arith.constant 0 : i32
    %13 = arith.index_cast %c0_i32 : i32 to index
    %c0_13 = arith.constant 0 : index
    %14 = vector.load %arg9[%13, %c0_13] : memref<8x512xf32, #tpu.memory_space<vmem>>, vector<1x512xf32>
    %15 = arith.truncf %12 : vector<1x128xf32> to vector<1x128xbf16>
    %cst_14 = arith.constant dense<0.000000e+00> : vector<1x512xf32>
    %16 = tpu.matmul %15, %9, %cst_14 {dimension_numbers = #tpu.dot_dimension_numbers<[1], [0], [0], [1], [0, 0, 1, 1], [], []>} : vector<1x128xbf16>, vector<128x512xbf16>, vector<1x512xf32> -> vector<1x512xf32>
    %17 = arith.addf %14, %16 : vector<1x512xf32>
    %18 = vector.extract_strided_slice %17 {offsets = [0, 0], sizes = [1, 384], strides = [1, 1]} : vector<1x512xf32> to vector<1x384xf32>
    %cst_15 = arith.constant 0.000000e+00 : f32
    %19 = vector.broadcast %cst_15 : f32 to vector<1x384xf32>
    %20 = arith.subf %19, %18 : vector<1x384xf32>
    %21 = math.exp %20 : vector<1x384xf32>
    %cst_16 = arith.constant 1.000000e+00 : f32
    %22 = vector.broadcast %cst_16 : f32 to vector<1x384xf32>
    %23 = arith.addf %22, %21 : vector<1x384xf32>
    %24 = tpu.reciprocal %23 {approx = true} : vector<1x384xf32> -> vector<1x384xf32>
    %25 = vector.extract_strided_slice %17 {offsets = [0, 384], sizes = [1, 128], strides = [1, 1]} : vector<1x512xf32> to vector<1x128xf32>
    %26 = math.tanh %25 : vector<1x128xf32>
    %27 = vector.extract_strided_slice %24 {offsets = [0, 0], sizes = [1, 128], strides = [1, 1]} : vector<1x384xf32> to vector<1x128xf32>
    %28 = vector.extract_strided_slice %24 {offsets = [0, 128], sizes = [1, 128], strides = [1, 1]} : vector<1x384xf32> to vector<1x128xf32>
    %29 = vector.extract_strided_slice %24 {offsets = [0, 256], sizes = [1, 128], strides = [1, 1]} : vector<1x384xf32> to vector<1x128xf32>
    %30 = arith.mulf %28, %12 : vector<1x128xf32>
    %31 = arith.mulf %27, %26 : vector<1x128xf32>
    %32 = arith.addf %30, %31 : vector<1x128xf32>
    %33 = math.tanh %32 : vector<1x128xf32>
    %34 = arith.mulf %29, %33 : vector<1x128xf32>
    %35 = tpu.concatenate %34, %12 in 1 : vector<1x128xf32>, vector<1x128xf32> -> vector<1x256xf32>
    %36 = arith.truncf %35 : vector<1x256xf32> to vector<1x256xbf16>
    %cst_17 = arith.constant dense<0.000000e+00> : vector<1x512xf32>
    %37 = tpu.matmul %36, %10, %cst_17 {dimension_numbers = #tpu.dot_dimension_numbers<[1], [0], [0], [1], [0, 0, 1, 1], [], []>} : vector<1x256xbf16>, vector<256x512xbf16>, vector<1x512xf32> -> vector<1x512xf32>
    %38 = arith.addf %37, %11 : vector<1x512xf32>
    %39 = vector.extract_strided_slice %38 {offsets = [0, 0], sizes = [1, 384], strides = [1, 1]} : vector<1x512xf32> to vector<1x384xf32>
    %cst_18 = arith.constant 0.000000e+00 : f32
    %40 = vector.broadcast %cst_18 : f32 to vector<1x384xf32>
    %41 = arith.subf %40, %39 : vector<1x384xf32>
    %42 = math.exp %41 : vector<1x384xf32>
    %cst_19 = arith.constant 1.000000e+00 : f32
    %43 = vector.broadcast %cst_19 : f32 to vector<1x384xf32>
    %44 = arith.addf %43, %42 : vector<1x384xf32>
    %45 = tpu.reciprocal %44 {approx = true} : vector<1x384xf32> -> vector<1x384xf32>
    %46 = vector.extract_strided_slice %38 {offsets = [0, 384], sizes = [1, 128], strides = [1, 1]} : vector<1x512xf32> to vector<1x128xf32>
    %47 = math.tanh %46 : vector<1x128xf32>
    %48 = vector.extract_strided_slice %45 {offsets = [0, 0], sizes = [1, 128], strides = [1, 1]} : vector<1x384xf32> to vector<1x128xf32>
    %49 = vector.extract_strided_slice %45 {offsets = [0, 128], sizes = [1, 128], strides = [1, 1]} : vector<1x384xf32> to vector<1x128xf32>
    %50 = vector.extract_strided_slice %45 {offsets = [0, 256], sizes = [1, 128], strides = [1, 1]} : vector<1x384xf32> to vector<1x128xf32>
    %51 = arith.mulf %49, %12 : vector<1x128xf32>
    %52 = arith.mulf %48, %47 : vector<1x128xf32>
    %53 = arith.addf %51, %52 : vector<1x128xf32>
    %54 = math.tanh %53 : vector<1x128xf32>
    %55 = arith.mulf %50, %54 : vector<1x128xf32>
    %c1_i32 = arith.constant 1 : i32
    %56 = arith.index_cast %c1_i32 : i32 to index
    %c0_20 = arith.constant 0 : index
    %57 = vector.load %arg9[%56, %c0_20] : memref<8x512xf32, #tpu.memory_space<vmem>>, vector<1x512xf32>
    %58 = arith.truncf %34 : vector<1x128xf32> to vector<1x128xbf16>
    %cst_21 = arith.constant dense<0.000000e+00> : vector<1x512xf32>
    %59 = tpu.matmul %58, %9, %cst_21 {dimension_numbers = #tpu.dot_dimension_numbers<[1], [0], [0], [1], [0, 0, 1, 1], [], []>} : vector<1x128xbf16>, vector<128x512xbf16>, vector<1x512xf32> -> vector<1x512xf32>
    %60 = arith.addf %57, %59 : vector<1x512xf32>
    %61 = vector.extract_strided_slice %60 {offsets = [0, 0], sizes = [1, 384], strides = [1, 1]} : vector<1x512xf32> to vector<1x384xf32>
    %cst_22 = arith.constant 0.000000e+00 : f32
    %62 = vector.broadcast %cst_22 : f32 to vector<1x384xf32>
    %63 = arith.subf %62, %61 : vector<1x384xf32>
    %64 = math.exp %63 : vector<1x384xf32>
    %cst_23 = arith.constant 1.000000e+00 : f32
    %65 = vector.broadcast %cst_23 : f32 to vector<1x384xf32>
    %66 = arith.addf %65, %64 : vector<1x384xf32>
    %67 = tpu.reciprocal %66 {approx = true} : vector<1x384xf32> -> vector<1x384xf32>
    %68 = vector.extract_strided_slice %60 {offsets = [0, 384], sizes = [1, 128], strides = [1, 1]} : vector<1x512xf32> to vector<1x128xf32>
    %69 = math.tanh %68 : vector<1x128xf32>
    %70 = vector.extract_strided_slice %67 {offsets = [0, 0], sizes = [1, 128], strides = [1, 1]} : vector<1x384xf32> to vector<1x128xf32>
    %71 = vector.extract_strided_slice %67 {offsets = [0, 128], sizes = [1, 128], strides = [1, 1]} : vector<1x384xf32> to vector<1x128xf32>
    %72 = vector.extract_strided_slice %67 {offsets = [0, 256], sizes = [1, 128], strides = [1, 1]} : vector<1x384xf32> to vector<1x128xf32>
    %73 = arith.mulf %71, %32 : vector<1x128xf32>
    %74 = arith.mulf %70, %69 : vector<1x128xf32>
    %75 = arith.addf %73, %74 : vector<1x128xf32>
    %76 = math.tanh %75 : vector<1x128xf32>
    %77 = arith.mulf %72, %76 : vector<1x128xf32>
    %78 = tpu.concatenate %77, %55 in 1 : vector<1x128xf32>, vector<1x128xf32> -> vector<1x256xf32>
    %79 = arith.truncf %78 : vector<1x256xf32> to vector<1x256xbf16>
    %cst_24 = arith.constant dense<0.000000e+00> : vector<1x512xf32>
    %80 = tpu.matmul %79, %10, %cst_24 {dimension_numbers = #tpu.dot_dimension_numbers<[1], [0], [0], [1], [0, 0, 1, 1], [], []>} : vector<1x256xbf16>, vector<256x512xbf16>, vector<1x512xf32> -> vector<1x512xf32>
    %81 = arith.addf %80, %11 : vector<1x512xf32>
    %82 = vector.extract_strided_slice %81 {offsets = [0, 0], sizes = [1, 384], strides = [1, 1]} : vector<1x512xf32> to vector<1x384xf32>
    %cst_25 = arith.constant 0.000000e+00 : f32
    %83 = vector.broadcast %cst_25 : f32 to vector<1x384xf32>
    %84 = arith.subf %83, %82 : vector<1x384xf32>
    %85 = math.exp %84 : vector<1x384xf32>
    %cst_26 = arith.constant 1.000000e+00 : f32
    %86 = vector.broadcast %cst_26 : f32 to vector<1x384xf32>
    %87 = arith.addf %86, %85 : vector<1x384xf32>
    %88 = tpu.reciprocal %87 {approx = true} : vector<1x384xf32> -> vector<1x384xf32>
    %89 = vector.extract_strided_slice %81 {offsets = [0, 384], sizes = [1, 128], strides = [1, 1]} : vector<1x512xf32> to vector<1x128xf32>
    %90 = math.tanh %89 : vector<1x128xf32>
    %91 = vector.extract_strided_slice %88 {offsets = [0, 0], sizes = [1, 128], strides = [1, 1]} : vector<1x384xf32> to vector<1x128xf32>
    %92 = vector.extract_strided_slice %88 {offsets = [0, 128], sizes = [1, 128], strides = [1, 1]} : vector<1x384xf32> to vector<1x128xf32>
    %93 = vector.extract_strided_slice %88 {offsets = [0, 256], sizes = [1, 128], strides = [1, 1]} : vector<1x384xf32> to vector<1x128xf32>
    %94 = arith.mulf %92, %53 : vector<1x128xf32>
    %95 = arith.mulf %91, %90 : vector<1x128xf32>
    %96 = arith.addf %94, %95 : vector<1x128xf32>
    %97 = math.tanh %96 : vector<1x128xf32>
    %98 = arith.mulf %93, %97 : vector<1x128xf32>
    %c2_i32 = arith.constant 2 : i32
    %99 = arith.index_cast %c2_i32 : i32 to index
    %c0_27 = arith.constant 0 : index
    %100 = vector.load %arg9[%99, %c0_27] : memref<8x512xf32, #tpu.memory_space<vmem>>, vector<1x512xf32>
    %101 = arith.truncf %77 : vector<1x128xf32> to vector<1x128xbf16>
    %cst_28 = arith.constant dense<0.000000e+00> : vector<1x512xf32>
    %102 = tpu.matmul %101, %9, %cst_28 {dimension_numbers = #tpu.dot_dimension_numbers<[1], [0], [0], [1], [0, 0, 1, 1], [], []>} : vector<1x128xbf16>, vector<128x512xbf16>, vector<1x512xf32> -> vector<1x512xf32>
    %103 = arith.addf %100, %102 : vector<1x512xf32>
    %104 = vector.extract_strided_slice %103 {offsets = [0, 0], sizes = [1, 384], strides = [1, 1]} : vector<1x512xf32> to vector<1x384xf32>
    %cst_29 = arith.constant 0.000000e+00 : f32
    %105 = vector.broadcast %cst_29 : f32 to vector<1x384xf32>
    %106 = arith.subf %105, %104 : vector<1x384xf32>
    %107 = math.exp %106 : vector<1x384xf32>
    %cst_30 = arith.constant 1.000000e+00 : f32
    %108 = vector.broadcast %cst_30 : f32 to vector<1x384xf32>
    %109 = arith.addf %108, %107 : vector<1x384xf32>
    %110 = tpu.reciprocal %109 {approx = true} : vector<1x384xf32> -> vector<1x384xf32>
    %111 = vector.extract_strided_slice %103 {offsets = [0, 384], sizes = [1, 128], strides = [1, 1]} : vector<1x512xf32> to vector<1x128xf32>
    %112 = math.tanh %111 : vector<1x128xf32>
    %113 = vector.extract_strided_slice %110 {offsets = [0, 0], sizes = [1, 128], strides = [1, 1]} : vector<1x384xf32> to vector<1x128xf32>
    %114 = vector.extract_strided_slice %110 {offsets = [0, 128], sizes = [1, 128], strides = [1, 1]} : vector<1x384xf32> to vector<1x128xf32>
    %115 = vector.extract_strided_slice %110 {offsets = [0, 256], sizes = [1, 128], strides = [1, 1]} : vector<1x384xf32> to vector<1x128xf32>
    %116 = arith.mulf %114, %75 : vector<1x128xf32>
    %117 = arith.mulf %113, %112 : vector<1x128xf32>
    %118 = arith.addf %116, %117 : vector<1x128xf32>
    %119 = math.tanh %118 : vector<1x128xf32>
    %120 = arith.mulf %115, %119 : vector<1x128xf32>
    %121 = tpu.concatenate %120, %98 in 1 : vector<1x128xf32>, vector<1x128xf32> -> vector<1x256xf32>
    %122 = arith.truncf %121 : vector<1x256xf32> to vector<1x256xbf16>
    %cst_31 = arith.constant dense<0.000000e+00> : vector<1x512xf32>
    %123 = tpu.matmul %122, %10, %cst_31 {dimension_numbers = #tpu.dot_dimension_numbers<[1], [0], [0], [1], [0, 0, 1, 1], [], []>} : vector<1x256xbf16>, vector<256x512xbf16>, vector<1x512xf32> -> vector<1x512xf32>
    %124 = arith.addf %123, %11 : vector<1x512xf32>
    %125 = vector.extract_strided_slice %124 {offsets = [0, 0], sizes = [1, 384], strides = [1, 1]} : vector<1x512xf32> to vector<1x384xf32>
    %cst_32 = arith.constant 0.000000e+00 : f32
    %126 = vector.broadcast %cst_32 : f32 to vector<1x384xf32>
    %127 = arith.subf %126, %125 : vector<1x384xf32>
    %128 = math.exp %127 : vector<1x384xf32>
    %cst_33 = arith.constant 1.000000e+00 : f32
    %129 = vector.broadcast %cst_33 : f32 to vector<1x384xf32>
    %130 = arith.addf %129, %128 : vector<1x384xf32>
    %131 = tpu.reciprocal %130 {approx = true} : vector<1x384xf32> -> vector<1x384xf32>
    %132 = vector.extract_strided_slice %124 {offsets = [0, 384], sizes = [1, 128], strides = [1, 1]} : vector<1x512xf32> to vector<1x128xf32>
    %133 = math.tanh %132 : vector<1x128xf32>
    %134 = vector.extract_strided_slice %131 {offsets = [0, 0], sizes = [1, 128], strides = [1, 1]} : vector<1x384xf32> to vector<1x128xf32>
    %135 = vector.extract_strided_slice %131 {offsets = [0, 128], sizes = [1, 128], strides = [1, 1]} : vector<1x384xf32> to vector<1x128xf32>
    %136 = vector.extract_strided_slice %131 {offsets = [0, 256], sizes = [1, 128], strides = [1, 1]} : vector<1x384xf32> to vector<1x128xf32>
    %137 = arith.mulf %135, %96 : vector<1x128xf32>
    %138 = arith.mulf %134, %133 : vector<1x128xf32>
    %139 = arith.addf %137, %138 : vector<1x128xf32>
    %140 = math.tanh %139 : vector<1x128xf32>
    %141 = arith.mulf %136, %140 : vector<1x128xf32>
    %c3_i32 = arith.constant 3 : i32
    %142 = arith.index_cast %c3_i32 : i32 to index
    %c0_34 = arith.constant 0 : index
    %143 = vector.load %arg9[%142, %c0_34] : memref<8x512xf32, #tpu.memory_space<vmem>>, vector<1x512xf32>
    %144 = arith.truncf %120 : vector<1x128xf32> to vector<1x128xbf16>
    %cst_35 = arith.constant dense<0.000000e+00> : vector<1x512xf32>
    %145 = tpu.matmul %144, %9, %cst_35 {dimension_numbers = #tpu.dot_dimension_numbers<[1], [0], [0], [1], [0, 0, 1, 1], [], []>} : vector<1x128xbf16>, vector<128x512xbf16>, vector<1x512xf32> -> vector<1x512xf32>
    %146 = arith.addf %143, %145 : vector<1x512xf32>
    %147 = vector.extract_strided_slice %146 {offsets = [0, 0], sizes = [1, 384], strides = [1, 1]} : vector<1x512xf32> to vector<1x384xf32>
    %cst_36 = arith.constant 0.000000e+00 : f32
    %148 = vector.broadcast %cst_36 : f32 to vector<1x384xf32>
    %149 = arith.subf %148, %147 : vector<1x384xf32>
    %150 = math.exp %149 : vector<1x384xf32>
    %cst_37 = arith.constant 1.000000e+00 : f32
    %151 = vector.broadcast %cst_37 : f32 to vector<1x384xf32>
    %152 = arith.addf %151, %150 : vector<1x384xf32>
    %153 = tpu.reciprocal %152 {approx = true} : vector<1x384xf32> -> vector<1x384xf32>
    %154 = vector.extract_strided_slice %146 {offsets = [0, 384], sizes = [1, 128], strides = [1, 1]} : vector<1x512xf32> to vector<1x128xf32>
    %155 = math.tanh %154 : vector<1x128xf32>
    %156 = vector.extract_strided_slice %153 {offsets = [0, 0], sizes = [1, 128], strides = [1, 1]} : vector<1x384xf32> to vector<1x128xf32>
    %157 = vector.extract_strided_slice %153 {offsets = [0, 128], sizes = [1, 128], strides = [1, 1]} : vector<1x384xf32> to vector<1x128xf32>
    %158 = vector.extract_strided_slice %153 {offsets = [0, 256], sizes = [1, 128], strides = [1, 1]} : vector<1x384xf32> to vector<1x128xf32>
    %159 = arith.mulf %157, %118 : vector<1x128xf32>
    %160 = arith.mulf %156, %155 : vector<1x128xf32>
    %161 = arith.addf %159, %160 : vector<1x128xf32>
    %162 = math.tanh %161 : vector<1x128xf32>
    %163 = arith.mulf %158, %162 : vector<1x128xf32>
    %164 = tpu.concatenate %163, %141 in 1 : vector<1x128xf32>, vector<1x128xf32> -> vector<1x256xf32>
    %165 = arith.truncf %164 : vector<1x256xf32> to vector<1x256xbf16>
    %cst_38 = arith.constant dense<0.000000e+00> : vector<1x512xf32>
    %166 = tpu.matmul %165, %10, %cst_38 {dimension_numbers = #tpu.dot_dimension_numbers<[1], [0], [0], [1], [0, 0, 1, 1], [], []>} : vector<1x256xbf16>, vector<256x512xbf16>, vector<1x512xf32> -> vector<1x512xf32>
    %167 = arith.addf %166, %11 : vector<1x512xf32>
    %168 = vector.extract_strided_slice %167 {offsets = [0, 0], sizes = [1, 384], strides = [1, 1]} : vector<1x512xf32> to vector<1x384xf32>
    %cst_39 = arith.constant 0.000000e+00 : f32
    %169 = vector.broadcast %cst_39 : f32 to vector<1x384xf32>
    %170 = arith.subf %169, %168 : vector<1x384xf32>
    %171 = math.exp %170 : vector<1x384xf32>
    %cst_40 = arith.constant 1.000000e+00 : f32
    %172 = vector.broadcast %cst_40 : f32 to vector<1x384xf32>
    %173 = arith.addf %172, %171 : vector<1x384xf32>
    %174 = tpu.reciprocal %173 {approx = true} : vector<1x384xf32> -> vector<1x384xf32>
    %175 = vector.extract_strided_slice %167 {offsets = [0, 384], sizes = [1, 128], strides = [1, 1]} : vector<1x512xf32> to vector<1x128xf32>
    %176 = math.tanh %175 : vector<1x128xf32>
    %177 = vector.extract_strided_slice %174 {offsets = [0, 0], sizes = [1, 128], strides = [1, 1]} : vector<1x384xf32> to vector<1x128xf32>
    %178 = vector.extract_strided_slice %174 {offsets = [0, 128], sizes = [1, 128], strides = [1, 1]} : vector<1x384xf32> to vector<1x128xf32>
    %179 = vector.extract_strided_slice %174 {offsets = [0, 256], sizes = [1, 128], strides = [1, 1]} : vector<1x384xf32> to vector<1x128xf32>
    %180 = arith.mulf %178, %139 : vector<1x128xf32>
    %181 = arith.mulf %177, %176 : vector<1x128xf32>
    %182 = arith.addf %180, %181 : vector<1x128xf32>
    %183 = math.tanh %182 : vector<1x128xf32>
    %184 = arith.mulf %179, %183 : vector<1x128xf32>
    %c4_i32 = arith.constant 4 : i32
    %185 = arith.index_cast %c4_i32 : i32 to index
    %c0_41 = arith.constant 0 : index
    %186 = vector.load %arg9[%185, %c0_41] : memref<8x512xf32, #tpu.memory_space<vmem>>, vector<1x512xf32>
    %187 = arith.truncf %163 : vector<1x128xf32> to vector<1x128xbf16>
    %cst_42 = arith.constant dense<0.000000e+00> : vector<1x512xf32>
    %188 = tpu.matmul %187, %9, %cst_42 {dimension_numbers = #tpu.dot_dimension_numbers<[1], [0], [0], [1], [0, 0, 1, 1], [], []>} : vector<1x128xbf16>, vector<128x512xbf16>, vector<1x512xf32> -> vector<1x512xf32>
    %189 = arith.addf %186, %188 : vector<1x512xf32>
    %190 = vector.extract_strided_slice %189 {offsets = [0, 0], sizes = [1, 384], strides = [1, 1]} : vector<1x512xf32> to vector<1x384xf32>
    %cst_43 = arith.constant 0.000000e+00 : f32
    %191 = vector.broadcast %cst_43 : f32 to vector<1x384xf32>
    %192 = arith.subf %191, %190 : vector<1x384xf32>
    %193 = math.exp %192 : vector<1x384xf32>
    %cst_44 = arith.constant 1.000000e+00 : f32
    %194 = vector.broadcast %cst_44 : f32 to vector<1x384xf32>
    %195 = arith.addf %194, %193 : vector<1x384xf32>
    %196 = tpu.reciprocal %195 {approx = true} : vector<1x384xf32> -> vector<1x384xf32>
    %197 = vector.extract_strided_slice %189 {offsets = [0, 384], sizes = [1, 128], strides = [1, 1]} : vector<1x512xf32> to vector<1x128xf32>
    %198 = math.tanh %197 : vector<1x128xf32>
    %199 = vector.extract_strided_slice %196 {offsets = [0, 0], sizes = [1, 128], strides = [1, 1]} : vector<1x384xf32> to vector<1x128xf32>
    %200 = vector.extract_strided_slice %196 {offsets = [0, 128], sizes = [1, 128], strides = [1, 1]} : vector<1x384xf32> to vector<1x128xf32>
    %201 = vector.extract_strided_slice %196 {offsets = [0, 256], sizes = [1, 128], strides = [1, 1]} : vector<1x384xf32> to vector<1x128xf32>
    %202 = arith.mulf %200, %161 : vector<1x128xf32>
    %203 = arith.mulf %199, %198 : vector<1x128xf32>
    %204 = arith.addf %202, %203 : vector<1x128xf32>
    %205 = math.tanh %204 : vector<1x128xf32>
    %206 = arith.mulf %201, %205 : vector<1x128xf32>
    %207 = tpu.concatenate %206, %184 in 1 : vector<1x128xf32>, vector<1x128xf32> -> vector<1x256xf32>
    %208 = arith.truncf %207 : vector<1x256xf32> to vector<1x256xbf16>
    %cst_45 = arith.constant dense<0.000000e+00> : vector<1x512xf32>
    %209 = tpu.matmul %208, %10, %cst_45 {dimension_numbers = #tpu.dot_dimension_numbers<[1], [0], [0], [1], [0, 0, 1, 1], [], []>} : vector<1x256xbf16>, vector<256x512xbf16>, vector<1x512xf32> -> vector<1x512xf32>
    %210 = arith.addf %209, %11 : vector<1x512xf32>
    %211 = vector.extract_strided_slice %210 {offsets = [0, 0], sizes = [1, 384], strides = [1, 1]} : vector<1x512xf32> to vector<1x384xf32>
    %cst_46 = arith.constant 0.000000e+00 : f32
    %212 = vector.broadcast %cst_46 : f32 to vector<1x384xf32>
    %213 = arith.subf %212, %211 : vector<1x384xf32>
    %214 = math.exp %213 : vector<1x384xf32>
    %cst_47 = arith.constant 1.000000e+00 : f32
    %215 = vector.broadcast %cst_47 : f32 to vector<1x384xf32>
    %216 = arith.addf %215, %214 : vector<1x384xf32>
    %217 = tpu.reciprocal %216 {approx = true} : vector<1x384xf32> -> vector<1x384xf32>
    %218 = vector.extract_strided_slice %210 {offsets = [0, 384], sizes = [1, 128], strides = [1, 1]} : vector<1x512xf32> to vector<1x128xf32>
    %219 = math.tanh %218 : vector<1x128xf32>
    %220 = vector.extract_strided_slice %217 {offsets = [0, 0], sizes = [1, 128], strides = [1, 1]} : vector<1x384xf32> to vector<1x128xf32>
    %221 = vector.extract_strided_slice %217 {offsets = [0, 128], sizes = [1, 128], strides = [1, 1]} : vector<1x384xf32> to vector<1x128xf32>
    %222 = vector.extract_strided_slice %217 {offsets = [0, 256], sizes = [1, 128], strides = [1, 1]} : vector<1x384xf32> to vector<1x128xf32>
    %223 = arith.mulf %221, %182 : vector<1x128xf32>
    %224 = arith.mulf %220, %219 : vector<1x128xf32>
    %225 = arith.addf %223, %224 : vector<1x128xf32>
    %226 = math.tanh %225 : vector<1x128xf32>
    %227 = arith.mulf %222, %226 : vector<1x128xf32>
    %c5_i32 = arith.constant 5 : i32
    %228 = arith.index_cast %c5_i32 : i32 to index
    %c0_48 = arith.constant 0 : index
    %229 = vector.load %arg9[%228, %c0_48] : memref<8x512xf32, #tpu.memory_space<vmem>>, vector<1x512xf32>
    %230 = arith.truncf %206 : vector<1x128xf32> to vector<1x128xbf16>
    %cst_49 = arith.constant dense<0.000000e+00> : vector<1x512xf32>
    %231 = tpu.matmul %230, %9, %cst_49 {dimension_numbers = #tpu.dot_dimension_numbers<[1], [0], [0], [1], [0, 0, 1, 1], [], []>} : vector<1x128xbf16>, vector<128x512xbf16>, vector<1x512xf32> -> vector<1x512xf32>
    %232 = arith.addf %229, %231 : vector<1x512xf32>
    %233 = vector.extract_strided_slice %232 {offsets = [0, 0], sizes = [1, 384], strides = [1, 1]} : vector<1x512xf32> to vector<1x384xf32>
    %cst_50 = arith.constant 0.000000e+00 : f32
    %234 = vector.broadcast %cst_50 : f32 to vector<1x384xf32>
    %235 = arith.subf %234, %233 : vector<1x384xf32>
    %236 = math.exp %235 : vector<1x384xf32>
    %cst_51 = arith.constant 1.000000e+00 : f32
    %237 = vector.broadcast %cst_51 : f32 to vector<1x384xf32>
    %238 = arith.addf %237, %236 : vector<1x384xf32>
    %239 = tpu.reciprocal %238 {approx = true} : vector<1x384xf32> -> vector<1x384xf32>
    %240 = vector.extract_strided_slice %232 {offsets = [0, 384], sizes = [1, 128], strides = [1, 1]} : vector<1x512xf32> to vector<1x128xf32>
    %241 = math.tanh %240 : vector<1x128xf32>
    %242 = vector.extract_strided_slice %239 {offsets = [0, 0], sizes = [1, 128], strides = [1, 1]} : vector<1x384xf32> to vector<1x128xf32>
    %243 = vector.extract_strided_slice %239 {offsets = [0, 128], sizes = [1, 128], strides = [1, 1]} : vector<1x384xf32> to vector<1x128xf32>
    %244 = vector.extract_strided_slice %239 {offsets = [0, 256], sizes = [1, 128], strides = [1, 1]} : vector<1x384xf32> to vector<1x128xf32>
    %245 = arith.mulf %243, %204 : vector<1x128xf32>
    %246 = arith.mulf %242, %241 : vector<1x128xf32>
    %247 = arith.addf %245, %246 : vector<1x128xf32>
    %248 = math.tanh %247 : vector<1x128xf32>
    %249 = arith.mulf %244, %248 : vector<1x128xf32>
    %250 = tpu.concatenate %249, %227 in 1 : vector<1x128xf32>, vector<1x128xf32> -> vector<1x256xf32>
    %251 = arith.truncf %250 : vector<1x256xf32> to vector<1x256xbf16>
    %cst_52 = arith.constant dense<0.000000e+00> : vector<1x512xf32>
    %252 = tpu.matmul %251, %10, %cst_52 {dimension_numbers = #tpu.dot_dimension_numbers<[1], [0], [0], [1], [0, 0, 1, 1], [], []>} : vector<1x256xbf16>, vector<256x512xbf16>, vector<1x512xf32> -> vector<1x512xf32>
    %253 = arith.addf %252, %11 : vector<1x512xf32>
    %254 = vector.extract_strided_slice %253 {offsets = [0, 0], sizes = [1, 384], strides = [1, 1]} : vector<1x512xf32> to vector<1x384xf32>
    %cst_53 = arith.constant 0.000000e+00 : f32
    %255 = vector.broadcast %cst_53 : f32 to vector<1x384xf32>
    %256 = arith.subf %255, %254 : vector<1x384xf32>
    %257 = math.exp %256 : vector<1x384xf32>
    %cst_54 = arith.constant 1.000000e+00 : f32
    %258 = vector.broadcast %cst_54 : f32 to vector<1x384xf32>
    %259 = arith.addf %258, %257 : vector<1x384xf32>
    %260 = tpu.reciprocal %259 {approx = true} : vector<1x384xf32> -> vector<1x384xf32>
    %261 = vector.extract_strided_slice %253 {offsets = [0, 384], sizes = [1, 128], strides = [1, 1]} : vector<1x512xf32> to vector<1x128xf32>
    %262 = math.tanh %261 : vector<1x128xf32>
    %263 = vector.extract_strided_slice %260 {offsets = [0, 0], sizes = [1, 128], strides = [1, 1]} : vector<1x384xf32> to vector<1x128xf32>
    %264 = vector.extract_strided_slice %260 {offsets = [0, 128], sizes = [1, 128], strides = [1, 1]} : vector<1x384xf32> to vector<1x128xf32>
    %265 = vector.extract_strided_slice %260 {offsets = [0, 256], sizes = [1, 128], strides = [1, 1]} : vector<1x384xf32> to vector<1x128xf32>
    %266 = arith.mulf %264, %225 : vector<1x128xf32>
    %267 = arith.mulf %263, %262 : vector<1x128xf32>
    %268 = arith.addf %266, %267 : vector<1x128xf32>
    %269 = math.tanh %268 : vector<1x128xf32>
    %270 = arith.mulf %265, %269 : vector<1x128xf32>
    %c6_i32 = arith.constant 6 : i32
    %271 = arith.index_cast %c6_i32 : i32 to index
    %c0_55 = arith.constant 0 : index
    %272 = vector.load %arg9[%271, %c0_55] : memref<8x512xf32, #tpu.memory_space<vmem>>, vector<1x512xf32>
    %273 = arith.truncf %249 : vector<1x128xf32> to vector<1x128xbf16>
    %cst_56 = arith.constant dense<0.000000e+00> : vector<1x512xf32>
    %274 = tpu.matmul %273, %9, %cst_56 {dimension_numbers = #tpu.dot_dimension_numbers<[1], [0], [0], [1], [0, 0, 1, 1], [], []>} : vector<1x128xbf16>, vector<128x512xbf16>, vector<1x512xf32> -> vector<1x512xf32>
    %275 = arith.addf %272, %274 : vector<1x512xf32>
    %276 = vector.extract_strided_slice %275 {offsets = [0, 0], sizes = [1, 384], strides = [1, 1]} : vector<1x512xf32> to vector<1x384xf32>
    %cst_57 = arith.constant 0.000000e+00 : f32
    %277 = vector.broadcast %cst_57 : f32 to vector<1x384xf32>
    %278 = arith.subf %277, %276 : vector<1x384xf32>
    %279 = math.exp %278 : vector<1x384xf32>
    %cst_58 = arith.constant 1.000000e+00 : f32
    %280 = vector.broadcast %cst_58 : f32 to vector<1x384xf32>
    %281 = arith.addf %280, %279 : vector<1x384xf32>
    %282 = tpu.reciprocal %281 {approx = true} : vector<1x384xf32> -> vector<1x384xf32>
    %283 = vector.extract_strided_slice %275 {offsets = [0, 384], sizes = [1, 128], strides = [1, 1]} : vector<1x512xf32> to vector<1x128xf32>
    %284 = math.tanh %283 : vector<1x128xf32>
    %285 = vector.extract_strided_slice %282 {offsets = [0, 0], sizes = [1, 128], strides = [1, 1]} : vector<1x384xf32> to vector<1x128xf32>
    %286 = vector.extract_strided_slice %282 {offsets = [0, 128], sizes = [1, 128], strides = [1, 1]} : vector<1x384xf32> to vector<1x128xf32>
    %287 = vector.extract_strided_slice %282 {offsets = [0, 256], sizes = [1, 128], strides = [1, 1]} : vector<1x384xf32> to vector<1x128xf32>
    %288 = arith.mulf %286, %247 : vector<1x128xf32>
    %289 = arith.mulf %285, %284 : vector<1x128xf32>
    %290 = arith.addf %288, %289 : vector<1x128xf32>
    %291 = math.tanh %290 : vector<1x128xf32>
    %292 = arith.mulf %287, %291 : vector<1x128xf32>
    %293 = tpu.concatenate %292, %270 in 1 : vector<1x128xf32>, vector<1x128xf32> -> vector<1x256xf32>
    %294 = arith.truncf %293 : vector<1x256xf32> to vector<1x256xbf16>
    %cst_59 = arith.constant dense<0.000000e+00> : vector<1x512xf32>
    %295 = tpu.matmul %294, %10, %cst_59 {dimension_numbers = #tpu.dot_dimension_numbers<[1], [0], [0], [1], [0, 0, 1, 1], [], []>} : vector<1x256xbf16>, vector<256x512xbf16>, vector<1x512xf32> -> vector<1x512xf32>
    %296 = arith.addf %295, %11 : vector<1x512xf32>
    %297 = vector.extract_strided_slice %296 {offsets = [0, 0], sizes = [1, 384], strides = [1, 1]} : vector<1x512xf32> to vector<1x384xf32>
    %cst_60 = arith.constant 0.000000e+00 : f32
    %298 = vector.broadcast %cst_60 : f32 to vector<1x384xf32>
    %299 = arith.subf %298, %297 : vector<1x384xf32>
    %300 = math.exp %299 : vector<1x384xf32>
    %cst_61 = arith.constant 1.000000e+00 : f32
    %301 = vector.broadcast %cst_61 : f32 to vector<1x384xf32>
    %302 = arith.addf %301, %300 : vector<1x384xf32>
    %303 = tpu.reciprocal %302 {approx = true} : vector<1x384xf32> -> vector<1x384xf32>
    %304 = vector.extract_strided_slice %296 {offsets = [0, 384], sizes = [1, 128], strides = [1, 1]} : vector<1x512xf32> to vector<1x128xf32>
    %305 = math.tanh %304 : vector<1x128xf32>
    %306 = vector.extract_strided_slice %303 {offsets = [0, 0], sizes = [1, 128], strides = [1, 1]} : vector<1x384xf32> to vector<1x128xf32>
    %307 = vector.extract_strided_slice %303 {offsets = [0, 128], sizes = [1, 128], strides = [1, 1]} : vector<1x384xf32> to vector<1x128xf32>
    %308 = vector.extract_strided_slice %303 {offsets = [0, 256], sizes = [1, 128], strides = [1, 1]} : vector<1x384xf32> to vector<1x128xf32>
    %309 = arith.mulf %307, %268 : vector<1x128xf32>
    %310 = arith.mulf %306, %305 : vector<1x128xf32>
    %311 = arith.addf %309, %310 : vector<1x128xf32>
    %312 = math.tanh %311 : vector<1x128xf32>
    %313 = arith.mulf %308, %312 : vector<1x128xf32>
    %c7_i32 = arith.constant 7 : i32
    %314 = arith.index_cast %c7_i32 : i32 to index
    %c0_62 = arith.constant 0 : index
    %315 = vector.load %arg9[%314, %c0_62] : memref<8x512xf32, #tpu.memory_space<vmem>>, vector<1x512xf32>
    %316 = arith.truncf %292 : vector<1x128xf32> to vector<1x128xbf16>
    %cst_63 = arith.constant dense<0.000000e+00> : vector<1x512xf32>
    %317 = tpu.matmul %316, %9, %cst_63 {dimension_numbers = #tpu.dot_dimension_numbers<[1], [0], [0], [1], [0, 0, 1, 1], [], []>} : vector<1x128xbf16>, vector<128x512xbf16>, vector<1x512xf32> -> vector<1x512xf32>
    %318 = arith.addf %315, %317 : vector<1x512xf32>
    %319 = vector.extract_strided_slice %318 {offsets = [0, 0], sizes = [1, 384], strides = [1, 1]} : vector<1x512xf32> to vector<1x384xf32>
    %cst_64 = arith.constant 0.000000e+00 : f32
    %320 = vector.broadcast %cst_64 : f32 to vector<1x384xf32>
    %321 = arith.subf %320, %319 : vector<1x384xf32>
    %322 = math.exp %321 : vector<1x384xf32>
    %cst_65 = arith.constant 1.000000e+00 : f32
    %323 = vector.broadcast %cst_65 : f32 to vector<1x384xf32>
    %324 = arith.addf %323, %322 : vector<1x384xf32>
    %325 = tpu.reciprocal %324 {approx = true} : vector<1x384xf32> -> vector<1x384xf32>
    %326 = vector.extract_strided_slice %318 {offsets = [0, 384], sizes = [1, 128], strides = [1, 1]} : vector<1x512xf32> to vector<1x128xf32>
    %327 = math.tanh %326 : vector<1x128xf32>
    %328 = vector.extract_strided_slice %325 {offsets = [0, 0], sizes = [1, 128], strides = [1, 1]} : vector<1x384xf32> to vector<1x128xf32>
    %329 = vector.extract_strided_slice %325 {offsets = [0, 128], sizes = [1, 128], strides = [1, 1]} : vector<1x384xf32> to vector<1x128xf32>
    %330 = vector.extract_strided_slice %325 {offsets = [0, 256], sizes = [1, 128], strides = [1, 1]} : vector<1x384xf32> to vector<1x128xf32>
    %331 = arith.mulf %329, %290 : vector<1x128xf32>
    %332 = arith.mulf %328, %327 : vector<1x128xf32>
    %333 = arith.addf %331, %332 : vector<1x128xf32>
    %334 = math.tanh %333 : vector<1x128xf32>
    %335 = arith.mulf %330, %334 : vector<1x128xf32>
    %336 = tpu.concatenate %335, %313 in 1 : vector<1x128xf32>, vector<1x128xf32> -> vector<1x256xf32>
    %337 = arith.truncf %336 : vector<1x256xf32> to vector<1x256xbf16>
    %cst_66 = arith.constant dense<0.000000e+00> : vector<1x512xf32>
    %338 = tpu.matmul %337, %10, %cst_66 {dimension_numbers = #tpu.dot_dimension_numbers<[1], [0], [0], [1], [0, 0, 1, 1], [], []>} : vector<1x256xbf16>, vector<256x512xbf16>, vector<1x512xf32> -> vector<1x512xf32>
    %339 = arith.addf %338, %11 : vector<1x512xf32>
    %340 = vector.extract_strided_slice %339 {offsets = [0, 0], sizes = [1, 384], strides = [1, 1]} : vector<1x512xf32> to vector<1x384xf32>
    %cst_67 = arith.constant 0.000000e+00 : f32
    %341 = vector.broadcast %cst_67 : f32 to vector<1x384xf32>
    %342 = arith.subf %341, %340 : vector<1x384xf32>
    %343 = math.exp %342 : vector<1x384xf32>
    %cst_68 = arith.constant 1.000000e+00 : f32
    %344 = vector.broadcast %cst_68 : f32 to vector<1x384xf32>
    %345 = arith.addf %344, %343 : vector<1x384xf32>
    %346 = tpu.reciprocal %345 {approx = true} : vector<1x384xf32> -> vector<1x384xf32>
    %347 = vector.extract_strided_slice %339 {offsets = [0, 384], sizes = [1, 128], strides = [1, 1]} : vector<1x512xf32> to vector<1x128xf32>
    %348 = math.tanh %347 : vector<1x128xf32>
    %349 = vector.extract_strided_slice %346 {offsets = [0, 0], sizes = [1, 128], strides = [1, 1]} : vector<1x384xf32> to vector<1x128xf32>
    %350 = vector.extract_strided_slice %346 {offsets = [0, 128], sizes = [1, 128], strides = [1, 1]} : vector<1x384xf32> to vector<1x128xf32>
    %351 = vector.extract_strided_slice %346 {offsets = [0, 256], sizes = [1, 128], strides = [1, 1]} : vector<1x384xf32> to vector<1x128xf32>
    %352 = arith.mulf %350, %311 : vector<1x128xf32>
    %353 = arith.mulf %349, %348 : vector<1x128xf32>
    %354 = arith.addf %352, %353 : vector<1x128xf32>
    %355 = math.tanh %354 : vector<1x128xf32>
    %356 = arith.mulf %351, %355 : vector<1x128xf32>
    %c8_i32 = arith.constant 8 : i32
    %c0_69 = arith.constant 0 : index
    %c0_70 = arith.constant 0 : index
    %357 = vector.load %arg6[%c0_69, %c0_70] : memref<128x1xf32, #tpu.memory_space<vmem>>, vector<128x1xf32>
    %cst_71 = arith.constant dense<0.000000e+00> : vector<1x1xf32>
    %358 = tpu.matmul %356, %357, %cst_71 {dimension_numbers = #tpu.dot_dimension_numbers<[1], [0], [0], [1], [0, 0, 1, 1], [], []>} : vector<1x128xf32>, vector<128x1xf32>, vector<1x1xf32> -> vector<1x1xf32>
    %c0_72 = arith.constant 0 : index
    %c0_73 = arith.constant 0 : index
    %359 = vector.load %arg7[%c0_72, %c0_73] : memref<1x1xf32, #tpu.memory_space<vmem>>, vector<1x1xf32>
    %360 = arith.addf %358, %359 : vector<1x1xf32>
    %c0_74 = arith.constant 0 : index
    %c0_75 = arith.constant 0 : index
    %361 = vector.load %arg8[%c0_74, %c0_75] : memref<1x1xf32, #tpu.memory_space<vmem>>, vector<1x1xf32>
    tpu.vector_store %arg8[%c0_74, %c0_75], %360 {strides = array<i32>} : memref<1x1xf32, #tpu.memory_space<vmem>>, vector<1x1xf32>,
    return
  }
}

</mosaic_0001>

<llo_original>
// kernel: tpu_custom_call.1
$region0: #{tpu_custom_call.1}
  #allocation0 [shape = 'u32[]', space=smem, size = 0x4, offset = 0x4, fixed_abs, tag = 'smem constant byte address 0x4 - core index']
  #allocation1 [shape = 'u32[144,128]{1,0:T(1,128)}', space=vmem, size = 0x12000, scoped, tag = 'internal scratch']
  #allocation2 [shape = 'f32[8,512]{1,0:T(8,128)}', space=vmem, size = 0x4000, scoped, tag = 'scratch operand']
  #allocation3 [shape = 'f32[1,1]{1,0:T(1,128)S(1)}', space=vmem, size = 0x200, scoped, tag = 'scoped memory for tpu_custom_call.1']
  %s0 = inlined_call_operand.vmem [shape: f32[8,1], index: 0, kind: input, shape index: {}]
  %s1 = inlined_call_operand.vmem [shape: f32[1,512], index: 1, kind: input, shape index: {}]
  %s2 = inlined_call_operand.hbm [shape: bf16[128,512], index: 2, kind: input, shape index: {}]
  %s3 = inlined_call_operand.vmem [shape: f32[1,512], index: 3, kind: input, shape index: {}]
  %s4 = inlined_call_operand.hbm [shape: bf16[256,512], index: 4, kind: input, shape index: {}]
  %s5 = inlined_call_operand.vmem [shape: f32[1,512], index: 5, kind: input, shape index: {}]
  %s6 = inlined_call_operand.vmem [shape: f32[128,1], index: 6, kind: input, shape index: {}]
  %s7 = inlined_call_operand.<no memory space> [shape: f32[1,1], index: 7, kind: input, shape index: {}]
  %s8 = inlined_call_operand.hbm [shape: f32[1,1], index: 8, kind: output, shape index: {}]
  %s9 = sld [smem:[#allocation0]]
  $region50: #{tpu_custom_call.1} parent=0
    _
  %s11 = ssub.s32 1, %s9
  %s12 = scalar_select 0, %s11, %s9
  %v13 = vstv %s7
  %14 = vst [vmem:[#allocation3] sm:$0x1] %v13
  $region1: #{tpu_custom_call.1} parent=0
    #allocation4 [shape = 'u8[131072]{0}', space=vmem, size = 0x20000, scoped, tag = 'input window, operand 2, single buffered']
    #allocation5 [shape = 's32[1]{0}', space=sflag, size = 0x4, scoped, tag = 'scoped memory for tpu_custom_call.1']
    #allocation6 [shape = 's32[1]{0}', space=sflag, size = 0x4, scoped, tag = 'scoped memory for tpu_custom_call.1']
    #allocation7 [shape = 'u8[262144]{0}', space=vmem, size = 0x40000, scoped, tag = 'input window, operand 4, single buffered']
    #allocation8 [shape = 's32[1]{0}', space=sflag, size = 0x4, scoped, tag = 'scoped memory for tpu_custom_call.1']
    #allocation9 [shape = 'u8[512]{0}', space=vmem, size = 0x400, scoped, tag = 'output window, operand 0, single buffered']
    %15 = vsyncpa [#allocation5], 0
    %16 = vsyncpa [#allocation8], 0
    %17 = vsyncpa [#allocation6], 0
    // Predicated region
    $region2: #{tpu_custom_call.1} parent=1 // pred_check
      _
    $region3: #{tpu_custom_call.1} parent=1 // pred_check_branch
      %19 = sbr.rel (0) target = $region5
    $region4: #{tpu_custom_call.1} parent=1 // pred_region
      _
    $region5: #{tpu_custom_call.1} parent=1 // pred_fallthru
      _
    // Predicated region
    $region6: #{tpu_custom_call.1} parent=1 // pred_check
      _
    $region7: #{tpu_custom_call.1} parent=1 // pred_check_branch
      %21 = sbr.rel (0) target = $region9
    $region8: #{tpu_custom_call.1} parent=1 // pred_region
      _
    $region9: #{tpu_custom_call.1} parent=1 // pred_fallthru
      _
    // Predicated region
    $region10: #{tpu_custom_call.1} parent=1 // pred_check
      _
    $region11: #{tpu_custom_call.1} parent=1 // pred_check_branch
      %23 = sbr.rel (0) target = $region13
    $region12: #{tpu_custom_call.1} parent=1 // pred_region
      %s25 = ssub.s32 4096, 4096
      %26 = vsyncadd [#allocation5], %s25
      %s27 = sshll.u32 [#allocation4], 4
      %s28 = int_to_ptr.vmem [resolvable:$true] %s27
      %33 = dma.hbm_to_vmem [thread:$0]  %s2, 4096, %s28, [#allocation5], 256, 256, 16
    $region13: #{tpu_custom_call.1} parent=1 // pred_fallthru
      _
    // Predicated region
    $region14: #{tpu_custom_call.1} parent=1 // pred_check
      _
    $region15: #{tpu_custom_call.1} parent=1 // pred_check_branch
      %35 = sbr.rel (0) target = $region17
    $region16: #{tpu_custom_call.1} parent=1 // pred_region
      _
    $region17: #{tpu_custom_call.1} parent=1 // pred_fallthru
      _
    // Predicated region
    $region18: #{tpu_custom_call.1} parent=1 // pred_check
      _
    $region19: #{tpu_custom_call.1} parent=1 // pred_check_branch
      %37 = sbr.rel (0) target = $region21
    $region20: #{tpu_custom_call.1} parent=1 // pred_region
      %s39 = ssub.s32 8192, 8192
      %40 = vsyncadd [#allocation8], %s39
      %s41 = sshll.u32 [#allocation7], 4
      %s42 = int_to_ptr.vmem [resolvable:$true] %s41
      %47 = dma.hbm_to_vmem [thread:$0]  %s4, 8192, %s42, [#allocation8], 256, 256, 16
    $region21: #{tpu_custom_call.1} parent=1 // pred_fallthru
      _
    // Predicated region
    $region22: #{tpu_custom_call.1} parent=1 // pred_check
      _
    $region23: #{tpu_custom_call.1} parent=1 // pred_check_branch
      %49 = sbr.rel (0) target = $region25
    $region24: #{tpu_custom_call.1} parent=1 // pred_region
      _
    $region25: #{tpu_custom_call.1} parent=1 // pred_fallthru
      _
    // Predicated region
    $region26: #{tpu_custom_call.1} parent=1 // pred_check
      _
    $region27: #{tpu_custom_call.1} parent=1 // pred_check_branch
      %51 = sbr.rel (0) target = $region29
    $region28: #{tpu_custom_call.1} parent=1 // pred_region
      _
    $region29: #{tpu_custom_call.1} parent=1 // pred_fallthru
      _
    // Predicated region
    $region30: #{tpu_custom_call.1} parent=1 // pred_check
      _
    $region31: #{tpu_custom_call.1} parent=1 // pred_check_branch
      %53 = sbr.rel (0) target = $region33
    $region32: #{tpu_custom_call.1} parent=1 // pred_region
      _
    $region33: #{tpu_custom_call.1} parent=1 // pred_fallthru
      _
    // Predicated region
    $region34: #{tpu_custom_call.1} parent=1 // pred_check
      _
    $region35: #{tpu_custom_call.1} parent=1 // pred_check_branch
      %55 = sbr.rel (0) target = $region37
    $region36: #{tpu_custom_call.1} parent=1 // pred_region
      %56 = dma.done [#allocation5], 4096
    $region37: #{tpu_custom_call.1} parent=1 // pred_fallthru
      _
    // Predicated region
    $region38: #{tpu_custom_call.1} parent=1 // pred_check
      _
    $region39: #{tpu_custom_call.1} parent=1 // pred_check_branch
      %58 = sbr.rel (0) target = $region41
    $region40: #{tpu_custom_call.1} parent=1 // pred_region
      %59 = dma.done [#allocation8], 8192
    $region41: #{tpu_custom_call.1} parent=1 // pred_fallthru
      _
    %v61 = vld [vmem:[%s0] sm:$0xff]
    %v62 = vld [vmem:[%s1] sm:$0xf]
    %64 = vset.pattern.permute.xlu0 0
    %65 = vperm.xlu0 %64, %v61
    %v66 = vpop.permute.xlu0 %65
    %v69 = vlaneseq
    %v70 = vshrl.u32 %v69, 7
    %v71 = vsub.s32 0, %v70
    %v72 = vrot.slane %v62, %v71
    %v73 = vlaneseq
    %v74 = vshrl.u32 %v73, 7
    %v75 = vsub.s32 1, %v74
    %v76 = vrot.slane %v62, %v75
    %v77 = vlaneseq
    %v78 = vshrl.u32 %v77, 7
    %v79 = vsub.s32 2, %v78
    %v80 = vrot.slane %v62, %v79
    %v81 = vlaneseq
    %v82 = vshrl.u32 %v81, 7
    %v83 = vsub.s32 3, %v82
    %v84 = vrot.slane %v62, %v83
    %v89 = vmul.f32 %v66, %v72
    %v90 = vmul.f32 %v66, %v76
    %v91 = vmul.f32 %v66, %v80
    %v92 = vmul.f32 %v66, %v84
    %v93 = vld [vmem:[%s3] sm:$0xf]
    %v95 = vlaneseq
    %v96 = vshrl.u32 %v95, 7
    %v97 = vsub.s32 0, %v96
    %v98 = vrot.slane %v93, %v97
    %v99 = vlaneseq
    %v100 = vshrl.u32 %v99, 7
    %v101 = vsub.s32 1, %v100
    %v102 = vrot.slane %v93, %v101
    %v103 = vlaneseq
    %v104 = vshrl.u32 %v103, 7
    %v105 = vsub.s32 2, %v104
    %v106 = vrot.slane %v93, %v105
    %v107 = vlaneseq
    %v108 = vshrl.u32 %v107, 7
    %v109 = vsub.s32 3, %v108
    %v110 = vrot.slane %v93, %v109
    %v115 = vadd.f32 %v89, %v98
    %v116 = vadd.f32 %v90, %v102
    %v117 = vadd.f32 %v91, %v106
    %v118 = vadd.f32 %v92, %v110
    %119 = vst [vmem:[#allocation2] sm:$0xff] %v115
    %120 = vst [vmem:[#allocation2 + $0x8] sm:$0xff] %v116
    %121 = vst [vmem:[#allocation2 + $0x10] sm:$0xff] %v117
    %122 = vst [vmem:[#allocation2 + $0x18] sm:$0xff] %v118
    %v123 = vld [vmem:[#allocation4] sm:$0xff]
    %v124 = vld [vmem:[#allocation4 + $0x8] sm:$0xff]
    %v125 = vld [vmem:[#allocation4 + $0x10] sm:$0xff]
    %v126 = vld [vmem:[#allocation4 + $0x18] sm:$0xff]
    %v127 = vld [vmem:[#allocation4 + $0x20] sm:$0xff]
    %v128 = vld [vmem:[#allocation4 + $0x28] sm:$0xff]
    %v129 = vld [vmem:[#allocation4 + $0x30] sm:$0xff]
    %v130 = vld [vmem:[#allocation4 + $0x38] sm:$0xff]
    %v131 = vld [vmem:[#allocation4 + $0x40] sm:$0xff]
    %v132 = vld [vmem:[#allocation4 + $0x48] sm:$0xff]
    %v133 = vld [vmem:[#allocation4 + $0x50] sm:$0xff]
    %v134 = vld [vmem:[#allocation4 + $0x58] sm:$0xff]
    %v135 = vld [vmem:[#allocation4 + $0x60] sm:$0xff]
    %v136 = vld [vmem:[#allocation4 + $0x68] sm:$0xff]
    %v137 = vld [vmem:[#allocation4 + $0x70] sm:$0xff]
    %v138 = vld [vmem:[#allocation4 + $0x78] sm:$0xff]
    %v139 = vld [vmem:[#allocation4 + $0x80] sm:$0xff]
    %v140 = vld [vmem:[#allocation4 + $0x88] sm:$0xff]
    %v141 = vld [vmem:[#allocation4 + $0x90] sm:$0xff]
    %v142 = vld [vmem:[#allocation4 + $0x98] sm:$0xff]
    %v143 = vld [vmem:[#allocation4 + $0xa0] sm:$0xff]
    %v144 = vld [vmem:[#allocation4 + $0xa8] sm:$0xff]
    %v145 = vld [vmem:[#allocation4 + $0xb0] sm:$0xff]
    %v146 = vld [vmem:[#allocation4 + $0xb8] sm:$0xff]
    %v147 = vld [vmem:[#allocation4 + $0xc0] sm:$0xff]
    %v148 = vld [vmem:[#allocation4 + $0xc8] sm:$0xff]
    %v149 = vld [vmem:[#allocation4 + $0xd0] sm:$0xff]
    %v150 = vld [vmem:[#allocation4 + $0xd8] sm:$0xff]
    %v151 = vld [vmem:[#allocation4 + $0xe0] sm:$0xff]
    %v152 = vld [vmem:[#allocation4 + $0xe8] sm:$0xff]
    %v153 = vld [vmem:[#allocation4 + $0xf0] sm:$0xff]
    %v154 = vld [vmem:[#allocation4 + $0xf8] sm:$0xff]
    %v155 = vld [vmem:[#allocation7] sm:$0xff]
    %v156 = vld [vmem:[#allocation7 + $0x8] sm:$0xff]
    %v157 = vld [vmem:[#allocation7 + $0x10] sm:$0xff]
    %v158 = vld [vmem:[#allocation7 + $0x18] sm:$0xff]
    %v159 = vld [vmem:[#allocation7 + $0x20] sm:$0xff]
    %v160 = vld [vmem:[#allocation7 + $0x28] sm:$0xff]
    %v161 = vld [vmem:[#allocation7 + $0x30] sm:$0xff]
    %v162 = vld [vmem:[#allocation7 + $0x38] sm:$0xff]
    %v163 = vld [vmem:[#allocation7 + $0x40] sm:$0xff]
    %v164 = vld [vmem:[#allocation7 + $0x48] sm:$0xff]
    %v165 = vld [vmem:[#allocation7 + $0x50] sm:$0xff]
    %v166 = vld [vmem:[#allocation7 + $0x58] sm:$0xff]
    %v167 = vld [vmem:[#allocation7 + $0x60] sm:$0xff]
    %v168 = vld [vmem:[#allocation7 + $0x68] sm:$0xff]
    %v169 = vld [vmem:[#allocation7 + $0x70] sm:$0xff]
    %v170 = vld [vmem:[#allocation7 + $0x78] sm:$0xff]
    %v171 = vld [vmem:[#allocation7 + $0x80] sm:$0xff]
    %v172 = vld [vmem:[#allocation7 + $0x88] sm:$0xff]
    %v173 = vld [vmem:[#allocation7 + $0x90] sm:$0xff]
    %v174 = vld [vmem:[#allocation7 + $0x98] sm:$0xff]
    %v175 = vld [vmem:[#allocation7 + $0xa0] sm:$0xff]
    %v176 = vld [vmem:[#allocation7 + $0xa8] sm:$0xff]
    %v177 = vld [vmem:[#allocation7 + $0xb0] sm:$0xff]
    %v178 = vld [vmem:[#allocation7 + $0xb8] sm:$0xff]
    %v179 = vld [vmem:[#allocation7 + $0xc0] sm:$0xff]
    %v180 = vld [vmem:[#allocation7 + $0xc8] sm:$0xff]
    %v181 = vld [vmem:[#allocation7 + $0xd0] sm:$0xff]
    %v182 = vld [vmem:[#allocation7 + $0xd8] sm:$0xff]
    %v183 = vld [vmem:[#allocation7 + $0xe0] sm:$0xff]
    %v184 = vld [vmem:[#allocation7 + $0xe8] sm:$0xff]
    %v185 = vld [vmem:[#allocation7 + $0xf0] sm:$0xff]
    %v186 = vld [vmem:[#allocation7 + $0xf8] sm:$0xff]
    %v187 = vld [vmem:[#allocation7 + $0x100] sm:$0xff]
    %v188 = vld [vmem:[#allocation7 + $0x108] sm:$0xff]
    %v189 = vld [vmem:[#allocation7 + $0x110] sm:$0xff]
    %v190 = vld [vmem:[#allocation7 + $0x118] sm:$0xff]
    %v191 = vld [vmem:[#allocation7 + $0x120] sm:$0xff]
    %v192 = vld [vmem:[#allocation7 + $0x128] sm:$0xff]
    %v193 = vld [vmem:[#allocation7 + $0x130] sm:$0xff]
    %v194 = vld [vmem:[#allocation7 + $0x138] sm:$0xff]
    %v195 = vld [vmem:[#allocation7 + $0x140] sm:$0xff]
    %v196 = vld [vmem:[#allocation7 + $0x148] sm:$0xff]
    %v197 = vld [vmem:[#allocation7 + $0x150] sm:$0xff]
    %v198 = vld [vmem:[#allocation7 + $0x158] sm:$0xff]
    %v199 = vld [vmem:[#allocation7 + $0x160] sm:$0xff]
    %v200 = vld [vmem:[#allocation7 + $0x168] sm:$0xff]
    %v201 = vld [vmem:[#allocation7 + $0x170] sm:$0xff]
    %v202 = vld [vmem:[#allocation7 + $0x178] sm:$0xff]
    %v203 = vld [vmem:[#allocation7 + $0x180] sm:$0xff]
    %v204 = vld [vmem:[#allocation7 + $0x188] sm:$0xff]
    %v205 = vld [vmem:[#allocation7 + $0x190] sm:$0xff]
    %v206 = vld [vmem:[#allocation7 + $0x198] sm:$0xff]
    %v207 = vld [vmem:[#allocation7 + $0x1a0] sm:$0xff]
    %v208 = vld [vmem:[#allocation7 + $0x1a8] sm:$0xff]
    %v209 = vld [vmem:[#allocation7 + $0x1b0] sm:$0xff]
    %v210 = vld [vmem:[#allocation7 + $0x1b8] sm:$0xff]
    %v211 = vld [vmem:[#allocation7 + $0x1c0] sm:$0xff]
    %v212 = vld [vmem:[#allocation7 + $0x1c8] sm:$0xff]
    %v213 = vld [vmem:[#allocation7 + $0x1d0] sm:$0xff]
    %v214 = vld [vmem:[#allocation7 + $0x1d8] sm:$0xff]
    %v215 = vld [vmem:[#allocation7 + $0x1e0] sm:$0xff]
    %v216 = vld [vmem:[#allocation7 + $0x1e8] sm:$0xff]
    %v217 = vld [vmem:[#allocation7 + $0x1f0] sm:$0xff]
    %v218 = vld [vmem:[#allocation7 + $0x1f8] sm:$0xff]
    %v219 = vld [vmem:[%s5] sm:$0xf]
    %v220 = vld [vmem:[#allocation2] ss:$8 sm:$0xf]
    %v253 = vunpack.c.l.b16 %v123
    %v254 = vunpack.c.h.b16 %v123
    %v255 = vunpack.c.l.b16 %v124
    %v256 = vunpack.c.h.b16 %v124
    %v257 = vunpack.c.l.b16 %v125
    %v258 = vunpack.c.h.b16 %v125
    %v259 = vunpack.c.l.b16 %v126
    %v260 = vunpack.c.h.b16 %v126
    %v261 = vunpack.c.l.b16 %v127
    %v262 = vunpack.c.h.b16 %v127
    %v263 = vunpack.c.l.b16 %v128
    %v264 = vunpack.c.h.b16 %v128
    %v265 = vunpack.c.l.b16 %v129
    %v266 = vunpack.c.h.b16 %v129
    %v267 = vunpack.c.l.b16 %v130
    %v268 = vunpack.c.h.b16 %v130
    %v269 = vunpack.c.l.b16 %v131
    %v270 = vunpack.c.h.b16 %v131
    %v271 = vunpack.c.l.b16 %v132
    %v272 = vunpack.c.h.b16 %v132
    %v273 = vunpack.c.l.b16 %v133
    %v274 = vunpack.c.h.b16 %v133
    %v275 = vunpack.c.l.b16 %v134
    %v276 = vunpack.c.h.b16 %v134
    %v277 = vunpack.c.l.b16 %v135
    %v278 = vunpack.c.h.b16 %v135
    %v279 = vunpack.c.l.b16 %v136
    %v280 = vunpack.c.h.b16 %v136
    %v281 = vunpack.c.l.b16 %v137
    %v282 = vunpack.c.h.b16 %v137
    %v283 = vunpack.c.l.b16 %v138
    %v284 = vunpack.c.h.b16 %v138
    %v285 = vunpack.c.l.b16 %v139
    %v286 = vunpack.c.h.b16 %v139
    %v287 = vunpack.c.l.b16 %v140
    %v288 = vunpack.c.h.b16 %v140
    %v289 = vunpack.c.l.b16 %v141
    %v290 = vunpack.c.h.b16 %v141
    %v291 = vunpack.c.l.b16 %v142
    %v292 = vunpack.c.h.b16 %v142
    %v293 = vunpack.c.l.b16 %v143
    %v294 = vunpack.c.h.b16 %v143
    %v295 = vunpack.c.l.b16 %v144
    %v296 = vunpack.c.h.b16 %v144
    %v297 = vunpack.c.l.b16 %v145
    %v298 = vunpack.c.h.b16 %v145
    %v299 = vunpack.c.l.b16 %v146
    %v300 = vunpack.c.h.b16 %v146
    %v301 = vunpack.c.l.b16 %v147
    %v302 = vunpack.c.h.b16 %v147
    %v303 = vunpack.c.l.b16 %v148
    %v304 = vunpack.c.h.b16 %v148
    %v305 = vunpack.c.l.b16 %v149
    %v306 = vunpack.c.h.b16 %v149
    %v307 = vunpack.c.l.b16 %v150
    %v308 = vunpack.c.h.b16 %v150
    %v309 = vunpack.c.l.b16 %v151
    %v310 = vunpack.c.h.b16 %v151
    %v311 = vunpack.c.l.b16 %v152
    %v312 = vunpack.c.h.b16 %v152
    %v313 = vunpack.c.l.b16 %v153
    %v314 = vunpack.c.h.b16 %v153
    %v315 = vunpack.c.l.b16 %v154
    %v316 = vunpack.c.h.b16 %v154
    %v317 = vpack.c.b16 %v257, %v253
    %v318 = vpack.c.b16 %v258, %v254
    %v319 = vpack.c.b16 %v259, %v255
    %v320 = vpack.c.b16 %v260, %v256
    %v321 = vpack.c.b16 %v265, %v261
    %v322 = vpack.c.b16 %v266, %v262
    %v323 = vpack.c.b16 %v267, %v263
    %v324 = vpack.c.b16 %v268, %v264
    %v325 = vpack.c.b16 %v273, %v269
    %v326 = vpack.c.b16 %v274, %v270
    %v327 = vpack.c.b16 %v275, %v271
    %v328 = vpack.c.b16 %v276, %v272
    %v329 = vpack.c.b16 %v281, %v277
    %v330 = vpack.c.b16 %v282, %v278
    %v331 = vpack.c.b16 %v283, %v279
    %v332 = vpack.c.b16 %v284, %v280
    %v333 = vpack.c.b16 %v289, %v285
    %v334 = vpack.c.b16 %v290, %v286
    %v335 = vpack.c.b16 %v291, %v287
    %v336 = vpack.c.b16 %v292, %v288
    %v337 = vpack.c.b16 %v297, %v293
    %v338 = vpack.c.b16 %v298, %v294
    %v339 = vpack.c.b16 %v299, %v295
    %v340 = vpack.c.b16 %v300, %v296
    %v341 = vpack.c.b16 %v305, %v301
    %v342 = vpack.c.b16 %v306, %v302
    %v343 = vpack.c.b16 %v307, %v303
    %v344 = vpack.c.b16 %v308, %v304
    %v345 = vpack.c.b16 %v313, %v309
    %v346 = vpack.c.b16 %v314, %v310
    %v347 = vpack.c.b16 %v315, %v311
    %v348 = vpack.c.b16 %v316, %v312
    %381 = vmatprep.subr.bf16.mxu0 %v318
    %382 = vmatpush1.bf16.msra.mxu0 %v317
    %383 = vmatprep.subr.bf16.mxu0 %v322
    %384 = vmatpush1.bf16.msra.mxu0 %v321
    %385 = vmatprep.subr.bf16.mxu0 %v326
    %386 = vmatpush1.bf16.msra.mxu0 %v325
    %387 = vmatprep.subr.bf16.mxu0 %v330
    %388 = vmatpush1.bf16.msra.mxu0 %v329
    %389 = vmatprep.subr.bf16.mxu0 %v334
    %390 = vmatpush1.bf16.msra.mxu0 %v333
    %391 = vmatprep.subr.bf16.mxu0 %v338
    %392 = vmatpush1.bf16.msra.mxu0 %v337
    %393 = vmatprep.subr.bf16.mxu0 %v342
    %394 = vmatpush1.bf16.msra.mxu0 %v341
    %395 = vmatprep.subr.bf16.mxu0 %v346
    %396 = vmatpush1.bf16.msra.mxu0 %v345
    %397 = vmatprep.subr.bf16.mxu0 0
    %398 = vmatpush1.bf16.msra.mxu0 0
    %399 = vmatprep.subr.bf16.mxu0 0
    %400 = vmatpush1.bf16.msra.mxu0 0
    %401 = vmatprep.subr.bf16.mxu0 0
    %402 = vmatpush1.bf16.msra.mxu0 0
    %403 = vmatprep.subr.bf16.mxu0 0
    %404 = vmatpush1.bf16.msra.mxu0 0
    %405 = vmatprep.subr.bf16.mxu0 0
    %406 = vmatpush1.bf16.msra.mxu0 0
    %407 = vmatprep.subr.bf16.mxu0 0
    %408 = vmatpush1.bf16.msra.mxu0 0
    %409 = vmatprep.subr.bf16.mxu0 0
    %410 = vmatpush1.bf16.msra.mxu0 0
    %411 = vmatprep.subr.bf16.mxu0 0
    %412 = vmatpush1.bf16.msra.mxu0 0
    %413 = vmatprep.mubr.bf16.mxu0 0
    %414 = vmatmul.mubr.bf16.gmra.mrb[0].mxu0 0
    %v415 = vpop.f32.mrb[0].mxu0
    %v416 = vadd.f32 0.0, %v415
    %v417 = vpop.f32.mrb[0].mxu0
    %v418 = vadd.f32 0.0, %v417
    %v419 = vpop.f32.mrb[0].mxu0
    %v420 = vpop.f32.mrb[0].mxu0
    %421 = vdwg.mxu0
    %422 = vmatprep.subr.bf16.mxu0 %v320
    %423 = vmatpush1.bf16.msra.mxu0 %v319
    %424 = vmatprep.subr.bf16.mxu0 %v324
    %425 = vmatpush1.bf16.msra.mxu0 %v323
    %426 = vmatprep.subr.bf16.mxu0 %v328
    %427 = vmatpush1.bf16.msra.mxu0 %v327
    %428 = vmatprep.subr.bf16.mxu0 %v332
    %429 = vmatpush1.bf16.msra.mxu0 %v331
    %430 = vmatprep.subr.bf16.mxu0 %v336
    %431 = vmatpush1.bf16.msra.mxu0 %v335
    %432 = vmatprep.subr.bf16.mxu0 %v340
    %433 = vmatpush1.bf16.msra.mxu0 %v339
    %434 = vmatprep.subr.bf16.mxu0 %v344
    %435 = vmatpush1.bf16.msra.mxu0 %v343
    %436 = vmatprep.subr.bf16.mxu0 %v348
    %437 = vmatpush1.bf16.msra.mxu0 %v347
    %438 = vmatprep.subr.bf16.mxu0 0
    %439 = vmatpush1.bf16.msra.mxu0 0
    %440 = vmatprep.subr.bf16.mxu0 0
    %441 = vmatpush1.bf16.msra.mxu0 0
    %442 = vmatprep.subr.bf16.mxu0 0
    %443 = vmatpush1.bf16.msra.mxu0 0
    %444 = vmatprep.subr.bf16.mxu0 0
    %445 = vmatpush1.bf16.msra.mxu0 0
    %446 = vmatprep.subr.bf16.mxu0 0
    %447 = vmatpush1.bf16.msra.mxu0 0
    %448 = vmatprep.subr.bf16.mxu0 0
    %449 = vmatpush1.bf16.msra.mxu0 0
    %450 = vmatprep.subr.bf16.mxu0 0
    %451 = vmatpush1.bf16.msra.mxu0 0
    %452 = vmatprep.subr.bf16.mxu0 0
    %453 = vmatpush1.bf16.msra.mxu0 0
    %454 = vmatprep.mubr.bf16.mxu0 0
    %455 = vmatmul.mubr.bf16.gmra.mrb[0].mxu0 0
    %v456 = vpop.f32.mrb[0].mxu0
    %v457 = vadd.f32 0.0, %v456
    %v458 = vpop.f32.mrb[0].mxu0
    %v459 = vadd.f32 0.0, %v458
    %v460 = vpop.f32.mrb[0].mxu0
    %v461 = vpop.f32.mrb[0].mxu0
    %462 = vdwg.mxu0
    %v467 = vcombine.low %v416, %v418
    %v468 = vcombine.low %v457, %v459
    %v470 = vunpack.c.l.s4 1966171168
    %v471 = vunpack.c.0.s8 %v470
    %v472 = vlaneseq
    %v473 = vshrl.u32 %v472, 7
    %v474 = vsub.s32 %v471, %v473
    %v475 = vrot.slane %v467, %v474
    %v477 = vunpack.c.l.s4 1966171168
    %v478 = vunpack.c.0.s8 %v477
    %v479 = vlaneseq
    %v480 = vshrl.u32 %v479, 7
    %v481 = vsub.s32 %v478, %v480
    %v482 = vrot.slane %v468, %v481
    %v483 = vcombine.low %v475, %v482
    %v485 = vunpack.c.l.s4 1966171168
    %v486 = vunpack.c.0.s8 %v485
    %v487 = vlaneseq
    %v488 = vshrl.u32 %v487, 7
    %v489 = vsub.s32 %v486, %v488
    %v490 = vrot.slane %v483, %v489
    %v492 = vadd.f32 %v220, %v490
    %v493 = vsub.f32 0.0, %v492
    %v494 = vmul.f32 %v493, 1.442695
    %v495 = vpow.pop %v494
    %v496 = vadd.f32 %v495, 1.0
    %v497 = vrcp.pop %v496
    %v499 = vrot.slane %v492, 3
    %v501 = vtanh.pop %v499
    %v503 = vrot.slane %v497, 1
    %v505 = vmul.f32 %v503, 0.0
    %v506 = vmul.f32 %v497, %v501
    %v507 = vadd.f32 %v505, %v506
    %v508 = vtanh.pop %v507
    %v509 = vrot.slane %v497, 2
    %v511 = vmul.f32 %v509, %v508
    %v512 = vpack.c.bf16 %v511, %v511
    %v513 = vpack.c.bf16 0.0, 0.0
    %v578 = vunpack.c.l.b16 %v155
    %v579 = vunpack.c.h.b16 %v155
    %v580 = vunpack.c.l.b16 %v156
    %v581 = vunpack.c.h.b16 %v156
    %v582 = vunpack.c.l.b16 %v157
    %v583 = vunpack.c.h.b16 %v157
    %v584 = vunpack.c.l.b16 %v158
    %v585 = vunpack.c.h.b16 %v158
    %v586 = vunpack.c.l.b16 %v159
    %v587 = vunpack.c.h.b16 %v159
    %v588 = vunpack.c.l.b16 %v160
    %v589 = vunpack.c.h.b16 %v160
    %v590 = vunpack.c.l.b16 %v161
    %v591 = vunpack.c.h.b16 %v161
    %v592 = vunpack.c.l.b16 %v162
    %v593 = vunpack.c.h.b16 %v162
    %v594 = vunpack.c.l.b16 %v163
    %v595 = vunpack.c.h.b16 %v163
    %v596 = vunpack.c.l.b16 %v164
    %v597 = vunpack.c.h.b16 %v164
    %v598 = vunpack.c.l.b16 %v165
    %v599 = vunpack.c.h.b16 %v165
    %v600 = vunpack.c.l.b16 %v166
    %v601 = vunpack.c.h.b16 %v166
    %v602 = vunpack.c.l.b16 %v167
    %v603 = vunpack.c.h.b16 %v167
    %v604 = vunpack.c.l.b16 %v168
    %v605 = vunpack.c.h.b16 %v168
    %v606 = vunpack.c.l.b16 %v169
    %v607 = vunpack.c.h.b16 %v169
    %v608 = vunpack.c.l.b16 %v170
    %v609 = vunpack.c.h.b16 %v170
    %v610 = vunpack.c.l.b16 %v171
    %v611 = vunpack.c.h.b16 %v171
    %v612 = vunpack.c.l.b16 %v172
    %v613 = vunpack.c.h.b16 %v172
    %v614 = vunpack.c.l.b16 %v173
    %v615 = vunpack.c.h.b16 %v173
    %v616 = vunpack.c.l.b16 %v174
    %v617 = vunpack.c.h.b16 %v174
    %v618 = vunpack.c.l.b16 %v175
    %v619 = vunpack.c.h.b16 %v175
    %v620 = vunpack.c.l.b16 %v176
    %v621 = vunpack.c.h.b16 %v176
    %v622 = vunpack.c.l.b16 %v177
    %v623 = vunpack.c.h.b16 %v177
    %v624 = vunpack.c.l.b16 %v178
    %v625 = vunpack.c.h.b16 %v178
    %v626 = vunpack.c.l.b16 %v179
    %v627 = vunpack.c.h.b16 %v179
    %v628 = vunpack.c.l.b16 %v180
    %v629 = vunpack.c.h.b16 %v180
    %v630 = vunpack.c.l.b16 %v181
    %v631 = vunpack.c.h.b16 %v181
    %v632 = vunpack.c.l.b16 %v182
    %v633 = vunpack.c.h.b16 %v182
    %v634 = vunpack.c.l.b16 %v183
    %v635 = vunpack.c.h.b16 %v183
    %v636 = vunpack.c.l.b16 %v184
    %v637 = vunpack.c.h.b16 %v184
    %v638 = vunpack.c.l.b16 %v185
    %v639 = vunpack.c.h.b16 %v185
    %v640 = vunpack.c.l.b16 %v186
    %v641 = vunpack.c.h.b16 %v186
    %v642 = vunpack.c.l.b16 %v187
    %v643 = vunpack.c.h.b16 %v187
    %v644 = vunpack.c.l.b16 %v188
    %v645 = vunpack.c.h.b16 %v188
    %v646 = vunpack.c.l.b16 %v189
    %v647 = vunpack.c.h.b16 %v189
    %v648 = vunpack.c.l.b16 %v190
    %v649 = vunpack.c.h.b16 %v190
    %v650 = vunpack.c.l.b16 %v191
    %v651 = vunpack.c.h.b16 %v191
    %v652 = vunpack.c.l.b16 %v192
    %v653 = vunpack.c.h.b16 %v192
    %v654 = vunpack.c.l.b16 %v193
    %v655 = vunpack.c.h.b16 %v193
    %v656 = vunpack.c.l.b16 %v194
    %v657 = vunpack.c.h.b16 %v194
    %v658 = vunpack.c.l.b16 %v195
    %v659 = vunpack.c.h.b16 %v195
    %v660 = vunpack.c.l.b16 %v196
    %v661 = vunpack.c.h.b16 %v196
    %v662 = vunpack.c.l.b16 %v197
    %v663 = vunpack.c.h.b16 %v197
    %v664 = vunpack.c.l.b16 %v198
    %v665 = vunpack.c.h.b16 %v198
    %v666 = vunpack.c.l.b16 %v199
    %v667 = vunpack.c.h.b16 %v199
    %v668 = vunpack.c.l.b16 %v200
    %v669 = vunpack.c.h.b16 %v200
    %v670 = vunpack.c.l.b16 %v201
    %v671 = vunpack.c.h.b16 %v201
    %v672 = vunpack.c.l.b16 %v202
    %v673 = vunpack.c.h.b16 %v202
    %v674 = vunpack.c.l.b16 %v203
    %v675 = vunpack.c.h.b16 %v203
    %v676 = vunpack.c.l.b16 %v204
    %v677 = vunpack.c.h.b16 %v204
    %v678 = vunpack.c.l.b16 %v205
    %v679 = vunpack.c.h.b16 %v205
    %v680 = vunpack.c.l.b16 %v206
    %v681 = vunpack.c.h.b16 %v206
    %v682 = vunpack.c.l.b16 %v207
    %v683 = vunpack.c.h.b16 %v207
    %v684 = vunpack.c.l.b16 %v208
    %v685 = vunpack.c.h.b16 %v208
    %v686 = vunpack.c.l.b16 %v209
    %v687 = vunpack.c.h.b16 %v209
    %v688 = vunpack.c.l.b16 %v210
    %v689 = vunpack.c.h.b16 %v210
    %v690 = vunpack.c.l.b16 %v211
    %v691 = vunpack.c.h.b16 %v211
    %v692 = vunpack.c.l.b16 %v212
    %v693 = vunpack.c.h.b16 %v212
    %v694 = vunpack.c.l.b16 %v213
    %v695 = vunpack.c.h.b16 %v213
    %v696 = vunpack.c.l.b16 %v214
    %v697 = vunpack.c.h.b16 %v214
    %v698 = vunpack.c.l.b16 %v215
    %v699 = vunpack.c.h.b16 %v215
    %v700 = vunpack.c.l.b16 %v216
    %v701 = vunpack.c.h.b16 %v216
    %v702 = vunpack.c.l.b16 %v217
    %v703 = vunpack.c.h.b16 %v217
    %v704 = vunpack.c.l.b16 %v218
    %v705 = vunpack.c.h.b16 %v218
    %v706 = vpack.c.b16 %v582, %v578
    %v707 = vpack.c.b16 %v583, %v579
    %v708 = vpack.c.b16 %v584, %v580
    %v709 = vpack.c.b16 %v585, %v581
    %v710 = vpack.c.b16 %v590, %v586
    %v711 = vpack.c.b16 %v591, %v587
    %v712 = vpack.c.b16 %v592, %v588
    %v713 = vpack.c.b16 %v593, %v589
    %v714 = vpack.c.b16 %v598, %v594
    %v715 = vpack.c.b16 %v599, %v595
    %v716 = vpack.c.b16 %v600, %v596
    %v717 = vpack.c.b16 %v601, %v597
    %v718 = vpack.c.b16 %v606, %v602
    %v719 = vpack.c.b16 %v607, %v603
    %v720 = vpack.c.b16 %v608, %v604
    %v721 = vpack.c.b16 %v609, %v605
    %v722 = vpack.c.b16 %v614, %v610
    %v723 = vpack.c.b16 %v615, %v611
    %v724 = vpack.c.b16 %v616, %v612
    %v725 = vpack.c.b16 %v617, %v613
    %v726 = vpack.c.b16 %v622, %v618
    %v727 = vpack.c.b16 %v623, %v619
    %v728 = vpack.c.b16 %v624, %v620
    %v729 = vpack.c.b16 %v625, %v621
    %v730 = vpack.c.b16 %v630, %v626
    %v731 = vpack.c.b16 %v631, %v627
    %v732 = vpack.c.b16 %v632, %v628
    %v733 = vpack.c.b16 %v633, %v629
    %v734 = vpack.c.b16 %v638, %v634
    %v735 = vpack.c.b16 %v639, %v635
    %v736 = vpack.c.b16 %v640, %v636
    %v737 = vpack.c.b16 %v641, %v637
    %v738 = vpack.c.b16 %v646, %v642
    %v739 = vpack.c.b16 %v647, %v643
    %v740 = vpack.c.b16 %v648, %v644
    %v741 = vpack.c.b16 %v649, %v645
    %v742 = vpack.c.b16 %v654, %v650
    %v743 = vpack.c.b16 %v655, %v651
    %v744 = vpack.c.b16 %v656, %v652
    %v745 = vpack.c.b16 %v657, %v653
    %v746 = vpack.c.b16 %v662, %v658
    %v747 = vpack.c.b16 %v663, %v659
    %v748 = vpack.c.b16 %v664, %v660
    %v749 = vpack.c.b16 %v665, %v661
    %v750 = vpack.c.b16 %v670, %v666
    %v751 = vpack.c.b16 %v671, %v667
    %v752 = vpack.c.b16 %v672, %v668
    %v753 = vpack.c.b16 %v673, %v669
    %v754 = vpack.c.b16 %v678, %v674
    %v755 = vpack.c.b16 %v679, %v675
    %v756 = vpack.c.b16 %v680, %v676
    %v757 = vpack.c.b16 %v681, %v677
    %v758 = vpack.c.b16 %v686, %v682
    %v759 = vpack.c.b16 %v687, %v683
    %v760 = vpack.c.b16 %v688, %v684
    %v761 = vpack.c.b16 %v689, %v685
    %v762 = vpack.c.b16 %v694, %v690
    %v763 = vpack.c.b16 %v695, %v691
    %v764 = vpack.c.b16 %v696, %v692
    %v765 = vpack.c.b16 %v697, %v693
    %v766 = vpack.c.b16 %v702, %v698
    %v767 = vpack.c.b16 %v703, %v699
    %v768 = vpack.c.b16 %v704, %v700
    %v769 = vpack.c.b16 %v705, %v701
    %v835 = vlaneseq
    %v836 = vshrl.u32 %v835, 7
    %v837 = vsub.s32 0, %v836
    %v838 = vrot.slane %v219, %v837
    %v839 = vlaneseq
    %v840 = vshrl.u32 %v839, 7
    %v841 = vsub.s32 1, %v840
    %v842 = vrot.slane %v219, %v841
    %v843 = vlaneseq
    %v844 = vshrl.u32 %v843, 7
    %v845 = vsub.s32 2, %v844
    %v846 = vrot.slane %v219, %v845
    %v847 = vlaneseq
    %v848 = vshrl.u32 %v847, 7
    %v849 = vsub.s32 3, %v848
    %v850 = vrot.slane %v219, %v849
    %855 = vmatprep.subr.bf16.mxu0 %v707
    %856 = vmatpush1.bf16.msra.mxu0 %v706
    %857 = vmatprep.subr.bf16.mxu0 %v711
    %858 = vmatpush1.bf16.msra.mxu0 %v710
    %859 = vmatprep.subr.bf16.mxu0 %v715
    %860 = vmatpush1.bf16.msra.mxu0 %v714
    %861 = vmatprep.subr.bf16.mxu0 %v719
    %862 = vmatpush1.bf16.msra.mxu0 %v718
    %863 = vmatprep.subr.bf16.mxu0 %v723
    %864 = vmatpush1.bf16.msra.mxu0 %v722
    %865 = vmatprep.subr.bf16.mxu0 %v727
    %866 = vmatpush1.bf16.msra.mxu0 %v726
    %867 = vmatprep.subr.bf16.mxu0 %v731
    %868 = vmatpush1.bf16.msra.mxu0 %v730
    %869 = vmatprep.subr.bf16.mxu0 %v735
    %870 = vmatpush1.bf16.msra.mxu0 %v734
    %871 = vmatprep.subr.bf16.mxu0 %v739
    %872 = vmatpush1.bf16.msra.mxu0 %v738
    %873 = vmatprep.subr.bf16.mxu0 %v743
    %874 = vmatpush1.bf16.msra.mxu0 %v742
    %875 = vmatprep.subr.bf16.mxu0 %v747
    %876 = vmatpush1.bf16.msra.mxu0 %v746
    %877 = vmatprep.subr.bf16.mxu0 %v751
    %878 = vmatpush1.bf16.msra.mxu0 %v750
    %879 = vmatprep.subr.bf16.mxu0 %v755
    %880 = vmatpush1.bf16.msra.mxu0 %v754
    %881 = vmatprep.subr.bf16.mxu0 %v759
    %882 = vmatpush1.bf16.msra.mxu0 %v758
    %883 = vmatprep.subr.bf16.mxu0 %v763
    %884 = vmatpush1.bf16.msra.mxu0 %v762
    %885 = vmatprep.subr.bf16.mxu0 %v767
    %886 = vmatpush1.bf16.msra.mxu0 %v766
    %887 = vmatprep.mubr.bf16.mxu0 %v513
    %888 = vmatmul.mubr.bf16.gmra.mrb[0].mxu0 %v512
    %v889 = vpop.f32.mrb[0].mxu0
    %v890 = vadd.f32 %v838, %v889
    %v891 = vpop.f32.mrb[0].mxu0
    %v892 = vadd.f32 %v842, %v891
    %v893 = vpop.f32.mrb[0].mxu0
    %v894 = vpop.f32.mrb[0].mxu0
    %895 = vdwg.mxu0
    %896 = vmatprep.subr.bf16.mxu0 %v709
    %897 = vmatpush1.bf16.msra.mxu0 %v708
    %898 = vmatprep.subr.bf16.mxu0 %v713
    %899 = vmatpush1.bf16.msra.mxu0 %v712
    %900 = vmatprep.subr.bf16.mxu0 %v717
    %901 = vmatpush1.bf16.msra.mxu0 %v716
    %902 = vmatprep.subr.bf16.mxu0 %v721
    %903 = vmatpush1.bf16.msra.mxu0 %v720
    %904 = vmatprep.subr.bf16.mxu0 %v725
    %905 = vmatpush1.bf16.msra.mxu0 %v724
    %906 = vmatprep.subr.bf16.mxu0 %v729
    %907 = vmatpush1.bf16.msra.mxu0 %v728
    %908 = vmatprep.subr.bf16.mxu0 %v733
    %909 = vmatpush1.bf16.msra.mxu0 %v732
    %910 = vmatprep.subr.bf16.mxu0 %v737
    %911 = vmatpush1.bf16.msra.mxu0 %v736
    %912 = vmatprep.subr.bf16.mxu0 %v741
    %913 = vmatpush1.bf16.msra.mxu0 %v740
    %914 = vmatprep.subr.bf16.mxu0 %v745
    %915 = vmatpush1.bf16.msra.mxu0 %v744
    %916 = vmatprep.subr.bf16.mxu0 %v749
    %917 = vmatpush1.bf16.msra.mxu0 %v748
    %918 = vmatprep.subr.bf16.mxu0 %v753
    %919 = vmatpush1.bf16.msra.mxu0 %v752
    %920 = vmatprep.subr.bf16.mxu0 %v757
    %921 = vmatpush1.bf16.msra.mxu0 %v756
    %922 = vmatprep.subr.bf16.mxu0 %v761
    %923 = vmatpush1.bf16.msra.mxu0 %v760
    %924 = vmatprep.subr.bf16.mxu0 %v765
    %925 = vmatpush1.bf16.msra.mxu0 %v764
    %926 = vmatprep.subr.bf16.mxu0 %v769
    %927 = vmatpush1.bf16.msra.mxu0 %v768
    %928 = vmatprep.mubr.bf16.mxu0 %v513
    %929 = vmatmul.mubr.bf16.gmra.mrb[0].mxu0 %v512
    %v930 = vpop.f32.mrb[0].mxu0
    %v931 = vadd.f32 %v846, %v930
    %v932 = vpop.f32.mrb[0].mxu0
    %v933 = vadd.f32 %v850, %v932
    %v934 = vpop.f32.mrb[0].mxu0
    %v935 = vpop.f32.mrb[0].mxu0
    %936 = vdwg.mxu0
    %v937 = vsub.f32 0.0, %v890
    %v938 = vsub.f32 0.0, %v892
    %v939 = vsub.f32 0.0, %v931
    %v940 = vmul.f32 %v937, 1.442695
    %v941 = vpow.pop %v940
    %v942 = vmul.f32 %v938, 1.442695
    %v943 = vpow.pop %v942
    %v944 = vmul.f32 %v939, 1.442695
    %v945 = vpow.pop %v944
    %v946 = vadd.f32 %v941, 1.0
    %v947 = vadd.f32 %v943, 1.0
    %v948 = vadd.f32 %v945, 1.0
    %v949 = vrcp.pop %v946
    %v950 = vrcp.pop %v947
    %v951 = vrcp.pop %v948
    %v952 = vtanh.pop %v933
    %v953 = vmul.f32 %v950, 0.0
    %v954 = vmul.f32 %v949, %v952
    %v955 = vadd.f32 %v953, %v954
    %v956 = vtanh.pop %v955
    %v957 = vmul.f32 %v951, %v956
    %s958 = scalar_lea.vmem [#allocation2], 1
    %v959 = vld [vmem:[%s958] ss:$8 sm:$0xf]
    %960 = vmatprep.subr.bf16.mxu0 %v318
    %961 = vmatpush1.bf16.msra.mxu0 %v317
    %962 = vmatprep.subr.bf16.mxu0 %v322
    %963 = vmatpush1.bf16.msra.mxu0 %v321
    %964 = vmatprep.subr.bf16.mxu0 %v326
    %965 = vmatpush1.bf16.msra.mxu0 %v325
    %966 = vmatprep.subr.bf16.mxu0 %v330
    %967 = vmatpush1.bf16.msra.mxu0 %v329
    %968 = vmatprep.subr.bf16.mxu0 %v334
    %969 = vmatpush1.bf16.msra.mxu0 %v333
    %970 = vmatprep.subr.bf16.mxu0 %v338
    %971 = vmatpush1.bf16.msra.mxu0 %v337
    %972 = vmatprep.subr.bf16.mxu0 %v342
    %973 = vmatpush1.bf16.msra.mxu0 %v341
    %974 = vmatprep.subr.bf16.mxu0 %v346
    %975 = vmatpush1.bf16.msra.mxu0 %v345
    %976 = vmatprep.subr.bf16.mxu0 0
    %977 = vmatpush1.bf16.msra.mxu0 0
    %978 = vmatprep.subr.bf16.mxu0 0
    %979 = vmatpush1.bf16.msra.mxu0 0
    %980 = vmatprep.subr.bf16.mxu0 0
    %981 = vmatpush1.bf16.msra.mxu0 0
    %982 = vmatprep.subr.bf16.mxu0 0
    %983 = vmatpush1.bf16.msra.mxu0 0
    %984 = vmatprep.subr.bf16.mxu0 0
    %985 = vmatpush1.bf16.msra.mxu0 0
    %986 = vmatprep.subr.bf16.mxu0 0
    %987 = vmatpush1.bf16.msra.mxu0 0
    %988 = vmatprep.subr.bf16.mxu0 0
    %989 = vmatpush1.bf16.msra.mxu0 0
    %990 = vmatprep.subr.bf16.mxu0 0
    %991 = vmatpush1.bf16.msra.mxu0 0
    %992 = vmatprep.mubr.bf16.mxu0 0
    %993 = vmatmul.mubr.bf16.gmra.mrb[0].mxu0 %v512
    %v994 = vpop.f32.mrb[0].mxu0
    %v995 = vadd.f32 0.0, %v994
    %v996 = vpop.f32.mrb[0].mxu0
    %v997 = vadd.f32 0.0, %v996
    %v998 = vpop.f32.mrb[0].mxu0
    %v999 = vpop.f32.mrb[0].mxu0
    %1000 = vdwg.mxu0
    %1001 = vmatprep.subr.bf16.mxu0 %v320
    %1002 = vmatpush1.bf16.msra.mxu0 %v319
    %1003 = vmatprep.subr.bf16.mxu0 %v324
    %1004 = vmatpush1.bf16.msra.mxu0 %v323
    %1005 = vmatprep.subr.bf16.mxu0 %v328
    %1006 = vmatpush1.bf16.msra.mxu0 %v327
    %1007 = vmatprep.subr.bf16.mxu0 %v332
    %1008 = vmatpush1.bf16.msra.mxu0 %v331
    %1009 = vmatprep.subr.bf16.mxu0 %v336
    %1010 = vmatpush1.bf16.msra.mxu0 %v335
    %1011 = vmatprep.subr.bf16.mxu0 %v340
    %1012 = vmatpush1.bf16.msra.mxu0 %v339
    %1013 = vmatprep.subr.bf16.mxu0 %v344
    %1014 = vmatpush1.bf16.msra.mxu0 %v343
    %1015 = vmatprep.subr.bf16.mxu0 %v348
    %1016 = vmatpush1.bf16.msra.mxu0 %v347
    %1017 = vmatprep.subr.bf16.mxu0 0
    %1018 = vmatpush1.bf16.msra.mxu0 0
    %1019 = vmatprep.subr.bf16.mxu0 0
    %1020 = vmatpush1.bf16.msra.mxu0 0
    %1021 = vmatprep.subr.bf16.mxu0 0
    %1022 = vmatpush1.bf16.msra.mxu0 0
    %1023 = vmatprep.subr.bf16.mxu0 0
    %1024 = vmatpush1.bf16.msra.mxu0 0
    %1025 = vmatprep.subr.bf16.mxu0 0
    %1026 = vmatpush1.bf16.msra.mxu0 0
    %1027 = vmatprep.subr.bf16.mxu0 0
    %1028 = vmatpush1.bf16.msra.mxu0 0
    %1029 = vmatprep.subr.bf16.mxu0 0
    %1030 = vmatpush1.bf16.msra.mxu0 0
    %1031 = vmatprep.subr.bf16.mxu0 0
    %1032 = vmatpush1.bf16.msra.mxu0 0
    %1033 = vmatprep.mubr.bf16.mxu0 0
    %1034 = vmatmul.mubr.bf16.gmra.mrb[0].mxu0 %v512
    %v1035 = vpop.f32.mrb[0].mxu0
    %v1036 = vadd.f32 0.0, %v1035
    %v1037 = vpop.f32.mrb[0].mxu0
    %v1038 = vadd.f32 0.0, %v1037
    %v1039 = vpop.f32.mrb[0].mxu0
    %v1040 = vpop.f32.mrb[0].mxu0
    %1041 = vdwg.mxu0
    %v1046 = vcombine.low %v995, %v997
    %v1047 = vcombine.low %v1036, %v1038
    %v1049 = vunpack.c.l.s4 1966171168
    %v1050 = vunpack.c.0.s8 %v1049
    %v1051 = vlaneseq
    %v1052 = vshrl.u32 %v1051, 7
    %v1053 = vsub.s32 %v1050, %v1052
    %v1054 = vrot.slane %v1046, %v1053
    %v1056 = vunpack.c.l.s4 1966171168
    %v1057 = vunpack.c.0.s8 %v1056
    %v1058 = vlaneseq
    %v1059 = vshrl.u32 %v1058, 7
    %v1060 = vsub.s32 %v1057, %v1059
    %v1061 = vrot.slane %v1047, %v1060
    %v1062 = vcombine.low %v1054, %v1061
    %v1064 = vunpack.c.l.s4 1966171168
    %v1065 = vunpack.c.0.s8 %v1064
    %v1066 = vlaneseq
    %v1067 = vshrl.u32 %v1066, 7
    %v1068 = vsub.s32 %v1065, %v1067
    %v1069 = vrot.slane %v1062, %v1068
    %v1071 = vadd.f32 %v959, %v1069
    %v1072 = vsub.f32 0.0, %v1071
    %v1073 = vmul.f32 %v1072, 1.442695
    %v1074 = vpow.pop %v1073
    %v1075 = vadd.f32 %v1074, 1.0
    %v1076 = vrcp.pop %v1075
    %v1078 = vrot.slane %v1071, 3
    %v1080 = vtanh.pop %v1078
    %v1082 = vrot.slane %v1076, 1
    %v1084 = vmul.f32 %v1082, %v507
    %v1085 = vmul.f32 %v1076, %v1080
    %v1086 = vadd.f32 %v1084, %v1085
    %v1087 = vtanh.pop %v1086
    %v1088 = vrot.slane %v1076, 2
    %v1090 = vmul.f32 %v1088, %v1087
    %v1091 = vpack.c.bf16 %v1090, %v1090
    %v1092 = vpack.c.bf16 %v957, %v957
    %1093 = vmatprep.subr.bf16.mxu0 %v707
    %1094 = vmatpush1.bf16.msra.mxu0 %v706
    %1095 = vmatprep.subr.bf16.mxu0 %v711
    %1096 = vmatpush1.bf16.msra.mxu0 %v710
    %1097 = vmatprep.subr.bf16.mxu0 %v715
    %1098 = vmatpush1.bf16.msra.mxu0 %v714
    %1099 = vmatprep.subr.bf16.mxu0 %v719
    %1100 = vmatpush1.bf16.msra.mxu0 %v718
    %1101 = vmatprep.subr.bf16.mxu0 %v723
    %1102 = vmatpush1.bf16.msra.mxu0 %v722
    %1103 = vmatprep.subr.bf16.mxu0 %v727
    %1104 = vmatpush1.bf16.msra.mxu0 %v726
    %1105 = vmatprep.subr.bf16.mxu0 %v731
    %1106 = vmatpush1.bf16.msra.mxu0 %v730
    %1107 = vmatprep.subr.bf16.mxu0 %v735
    %1108 = vmatpush1.bf16.msra.mxu0 %v734
    %1109 = vmatprep.subr.bf16.mxu0 %v739
    %1110 = vmatpush1.bf16.msra.mxu0 %v738
    %1111 = vmatprep.subr.bf16.mxu0 %v743
    %1112 = vmatpush1.bf16.msra.mxu0 %v742
    %1113 = vmatprep.subr.bf16.mxu0 %v747
    %1114 = vmatpush1.bf16.msra.mxu0 %v746
    %1115 = vmatprep.subr.bf16.mxu0 %v751
    %1116 = vmatpush1.bf16.msra.mxu0 %v750
    %1117 = vmatprep.subr.bf16.mxu0 %v755
    %1118 = vmatpush1.bf16.msra.mxu0 %v754
    %1119 = vmatprep.subr.bf16.mxu0 %v759
    %1120 = vmatpush1.bf16.msra.mxu0 %v758
    %1121 = vmatprep.subr.bf16.mxu0 %v763
    %1122 = vmatpush1.bf16.msra.mxu0 %v762
    %1123 = vmatprep.subr.bf16.mxu0 %v767
    %1124 = vmatpush1.bf16.msra.mxu0 %v766
    %1125 = vmatprep.mubr.bf16.mxu0 %v1092
    %1126 = vmatmul.mubr.bf16.gmra.mrb[0].mxu0 %v1091
    %v1127 = vpop.f32.mrb[0].mxu0
    %v1128 = vadd.f32 %v838, %v1127
    %v1129 = vpop.f32.mrb[0].mxu0
    %v1130 = vadd.f32 %v842, %v1129
    %v1131 = vpop.f32.mrb[0].mxu0
    %v1132 = vpop.f32.mrb[0].mxu0
    %1133 = vdwg.mxu0
    %1134 = vmatprep.subr.bf16.mxu0 %v709
    %1135 = vmatpush1.bf16.msra.mxu0 %v708
    %1136 = vmatprep.subr.bf16.mxu0 %v713
    %1137 = vmatpush1.bf16.msra.mxu0 %v712
    %1138 = vmatprep.subr.bf16.mxu0 %v717
    %1139 = vmatpush1.bf16.msra.mxu0 %v716
    %1140 = vmatprep.subr.bf16.mxu0 %v721
    %1141 = vmatpush1.bf16.msra.mxu0 %v720
    %1142 = vmatprep.subr.bf16.mxu0 %v725
    %1143 = vmatpush1.bf16.msra.mxu0 %v724
    %1144 = vmatprep.subr.bf16.mxu0 %v729
    %1145 = vmatpush1.bf16.msra.mxu0 %v728
    %1146 = vmatprep.subr.bf16.mxu0 %v733
    %1147 = vmatpush1.bf16.msra.mxu0 %v732
    %1148 = vmatprep.subr.bf16.mxu0 %v737
    %1149 = vmatpush1.bf16.msra.mxu0 %v736
    %1150 = vmatprep.subr.bf16.mxu0 %v741
    %1151 = vmatpush1.bf16.msra.mxu0 %v740
    %1152 = vmatprep.subr.bf16.mxu0 %v745
    %1153 = vmatpush1.bf16.msra.mxu0 %v744
    %1154 = vmatprep.subr.bf16.mxu0 %v749
    %1155 = vmatpush1.bf16.msra.mxu0 %v748
    %1156 = vmatprep.subr.bf16.mxu0 %v753
    %1157 = vmatpush1.bf16.msra.mxu0 %v752
    %1158 = vmatprep.subr.bf16.mxu0 %v757
    %1159 = vmatpush1.bf16.msra.mxu0 %v756
    %1160 = vmatprep.subr.bf16.mxu0 %v761
    %1161 = vmatpush1.bf16.msra.mxu0 %v760
    %1162 = vmatprep.subr.bf16.mxu0 %v765
    %1163 = vmatpush1.bf16.msra.mxu0 %v764
    %1164 = vmatprep.subr.bf16.mxu0 %v769
    %1165 = vmatpush1.bf16.msra.mxu0 %v768
    %1166 = vmatprep.mubr.bf16.mxu0 %v1092
    %1167 = vmatmul.mubr.bf16.gmra.mrb[0].mxu0 %v1091
    %v1168 = vpop.f32.mrb[0].mxu0
    %v1169 = vadd.f32 %v846, %v1168
    %v1170 = vpop.f32.mrb[0].mxu0
    %v1171 = vadd.f32 %v850, %v1170
    %v1172 = vpop.f32.mrb[0].mxu0
    %v1173 = vpop.f32.mrb[0].mxu0
    %1174 = vdwg.mxu0
    %v1175 = vsub.f32 0.0, %v1128
    %v1176 = vsub.f32 0.0, %v1130
    %v1177 = vsub.f32 0.0, %v1169
    %v1178 = vmul.f32 %v1175, 1.442695
    %v1179 = vpow.pop %v1178
    %v1180 = vmul.f32 %v1176, 1.442695
    %v1181 = vpow.pop %v1180
    %v1182 = vmul.f32 %v1177, 1.442695
    %v1183 = vpow.pop %v1182
    %v1184 = vadd.f32 %v1179, 1.0
    %v1185 = vadd.f32 %v1181, 1.0
    %v1186 = vadd.f32 %v1183, 1.0
    %v1187 = vrcp.pop %v1184
    %v1188 = vrcp.pop %v1185
    %v1189 = vrcp.pop %v1186
    %v1190 = vtanh.pop %v1171
    %v1191 = vmul.f32 %v1188, %v955
    %v1192 = vmul.f32 %v1187, %v1190
    %v1193 = vadd.f32 %v1191, %v1192
    %v1194 = vtanh.pop %v1193
    %v1195 = vmul.f32 %v1189, %v1194
    %s1196 = scalar_lea.vmem [#allocation2], 2
    %v1197 = vld [vmem:[%s1196] ss:$8 sm:$0xf]
    %1198 = vmatprep.subr.bf16.mxu0 %v318
    %1199 = vmatpush1.bf16.msra.mxu0 %v317
    %1200 = vmatprep.subr.bf16.mxu0 %v322
    %1201 = vmatpush1.bf16.msra.mxu0 %v321
    %1202 = vmatprep.subr.bf16.mxu0 %v326
    %1203 = vmatpush1.bf16.msra.mxu0 %v325
    %1204 = vmatprep.subr.bf16.mxu0 %v330
    %1205 = vmatpush1.bf16.msra.mxu0 %v329
    %1206 = vmatprep.subr.bf16.mxu0 %v334
    %1207 = vmatpush1.bf16.msra.mxu0 %v333
    %1208 = vmatprep.subr.bf16.mxu0 %v338
    %1209 = vmatpush1.bf16.msra.mxu0 %v337
    %1210 = vmatprep.subr.bf16.mxu0 %v342
    %1211 = vmatpush1.bf16.msra.mxu0 %v341
    %1212 = vmatprep.subr.bf16.mxu0 %v346
    %1213 = vmatpush1.bf16.msra.mxu0 %v345
    %1214 = vmatprep.subr.bf16.mxu0 0
    %1215 = vmatpush1.bf16.msra.mxu0 0
    %1216 = vmatprep.subr.bf16.mxu0 0
    %1217 = vmatpush1.bf16.msra.mxu0 0
    %1218 = vmatprep.subr.bf16.mxu0 0
    %1219 = vmatpush1.bf16.msra.mxu0 0
    %1220 = vmatprep.subr.bf16.mxu0 0
    %1221 = vmatpush1.bf16.msra.mxu0 0
    %1222 = vmatprep.subr.bf16.mxu0 0
    %1223 = vmatpush1.bf16.msra.mxu0 0
    %1224 = vmatprep.subr.bf16.mxu0 0
    %1225 = vmatpush1.bf16.msra.mxu0 0
    %1226 = vmatprep.subr.bf16.mxu0 0
    %1227 = vmatpush1.bf16.msra.mxu0 0
    %1228 = vmatprep.subr.bf16.mxu0 0
    %1229 = vmatpush1.bf16.msra.mxu0 0
    %1230 = vmatprep.mubr.bf16.mxu0 0
    %1231 = vmatmul.mubr.bf16.gmra.mrb[0].mxu0 %v1091
    %v1232 = vpop.f32.mrb[0].mxu0
    %v1233 = vadd.f32 0.0, %v1232
    %v1234 = vpop.f32.mrb[0].mxu0
    %v1235 = vadd.f32 0.0, %v1234
    %v1236 = vpop.f32.mrb[0].mxu0
    %v1237 = vpop.f32.mrb[0].mxu0
    %1238 = vdwg.mxu0
    %1239 = vmatprep.subr.bf16.mxu0 %v320
    %1240 = vmatpush1.bf16.msra.mxu0 %v319
    %1241 = vmatprep.subr.bf16.mxu0 %v324
    %1242 = vmatpush1.bf16.msra.mxu0 %v323
    %1243 = vmatprep.subr.bf16.mxu0 %v328
    %1244 = vmatpush1.bf16.msra.mxu0 %v327
    %1245 = vmatprep.subr.bf16.mxu0 %v332
    %1246 = vmatpush1.bf16.msra.mxu0 %v331
    %1247 = vmatprep.subr.bf16.mxu0 %v336
    %1248 = vmatpush1.bf16.msra.mxu0 %v335
    %1249 = vmatprep.subr.bf16.mxu0 %v340
    %1250 = vmatpush1.bf16.msra.mxu0 %v339
    %1251 = vmatprep.subr.bf16.mxu0 %v344
    %1252 = vmatpush1.bf16.msra.mxu0 %v343
    %1253 = vmatprep.subr.bf16.mxu0 %v348
    %1254 = vmatpush1.bf16.msra.mxu0 %v347
    %1255 = vmatprep.subr.bf16.mxu0 0
    %1256 = vmatpush1.bf16.msra.mxu0 0
    %1257 = vmatprep.subr.bf16.mxu0 0
    %1258 = vmatpush1.bf16.msra.mxu0 0
    %1259 = vmatprep.subr.bf16.mxu0 0
    %1260 = vmatpush1.bf16.msra.mxu0 0
    %1261 = vmatprep.subr.bf16.mxu0 0
    %1262 = vmatpush1.bf16.msra.mxu0 0
    %1263 = vmatprep.subr.bf16.mxu0 0
    %1264 = vmatpush1.bf16.msra.mxu0 0
    %1265 = vmatprep.subr.bf16.mxu0 0
    %1266 = vmatpush1.bf16.msra.mxu0 0
    %1267 = vmatprep.subr.bf16.mxu0 0
    %1268 = vmatpush1.bf16.msra.mxu0 0
    %1269 = vmatprep.subr.bf16.mxu0 0
    %1270 = vmatpush1.bf16.msra.mxu0 0
    %1271 = vmatprep.mubr.bf16.mxu0 0
    %1272 = vmatmul.mubr.bf16.gmra.mrb[0].mxu0 %v1091
    %v1273 = vpop.f32.mrb[0].mxu0
    %v1274 = vadd.f32 0.0, %v1273
    %v1275 = vpop.f32.mrb[0].mxu0
    %v1276 = vadd.f32 0.0, %v1275
    %v1277 = vpop.f32.mrb[0].mxu0
    %v1278 = vpop.f32.mrb[0].mxu0
    %1279 = vdwg.mxu0
    %v1284 = vcombine.low %v1233, %v1235
    %v1285 = vcombine.low %v1274, %v1276
    %v1287 = vunpack.c.l.s4 1966171168
    %v1288 = vunpack.c.0.s8 %v1287
    %v1289 = vlaneseq
    %v1290 = vshrl.u32 %v1289, 7
    %v1291 = vsub.s32 %v1288, %v1290
    %v1292 = vrot.slane %v1284, %v1291
    %v1294 = vunpack.c.l.s4 1966171168
    %v1295 = vunpack.c.0.s8 %v1294
    %v1296 = vlaneseq
    %v1297 = vshrl.u32 %v1296, 7
    %v1298 = vsub.s32 %v1295, %v1297
    %v1299 = vrot.slane %v1285, %v1298
    %v1300 = vcombine.low %v1292, %v1299
    %v1302 = vunpack.c.l.s4 1966171168
    %v1303 = vunpack.c.0.s8 %v1302
    %v1304 = vlaneseq
    %v1305 = vshrl.u32 %v1304, 7
    %v1306 = vsub.s32 %v1303, %v1305
    %v1307 = vrot.slane %v1300, %v1306
    %v1309 = vadd.f32 %v1197, %v1307
    %v1310 = vsub.f32 0.0, %v1309
    %v1311 = vmul.f32 %v1310, 1.442695
    %v1312 = vpow.pop %v1311
    %v1313 = vadd.f32 %v1312, 1.0
    %v1314 = vrcp.pop %v1313
    %v1316 = vrot.slane %v1309, 3
    %v1318 = vtanh.pop %v1316
    %v1320 = vrot.slane %v1314, 1
    %v1322 = vmul.f32 %v1320, %v1086
    %v1323 = vmul.f32 %v1314, %v1318
    %v1324 = vadd.f32 %v1322, %v1323
    %v1325 = vtanh.pop %v1324
    %v1326 = vrot.slane %v1314, 2
    %v1328 = vmul.f32 %v1326, %v1325
    %v1329 = vpack.c.bf16 %v1328, %v1328
    %v1330 = vpack.c.bf16 %v1195, %v1195
    %1331 = vmatprep.subr.bf16.mxu0 %v707
    %1332 = vmatpush1.bf16.msra.mxu0 %v706
    %1333 = vmatprep.subr.bf16.mxu0 %v711
    %1334 = vmatpush1.bf16.msra.mxu0 %v710
    %1335 = vmatprep.subr.bf16.mxu0 %v715
    %1336 = vmatpush1.bf16.msra.mxu0 %v714
    %1337 = vmatprep.subr.bf16.mxu0 %v719
    %1338 = vmatpush1.bf16.msra.mxu0 %v718
    %1339 = vmatprep.subr.bf16.mxu0 %v723
    %1340 = vmatpush1.bf16.msra.mxu0 %v722
    %1341 = vmatprep.subr.bf16.mxu0 %v727
    %1342 = vmatpush1.bf16.msra.mxu0 %v726
    %1343 = vmatprep.subr.bf16.mxu0 %v731
    %1344 = vmatpush1.bf16.msra.mxu0 %v730
    %1345 = vmatprep.subr.bf16.mxu0 %v735
    %1346 = vmatpush1.bf16.msra.mxu0 %v734
    %1347 = vmatprep.subr.bf16.mxu0 %v739
    %1348 = vmatpush1.bf16.msra.mxu0 %v738
    %1349 = vmatprep.subr.bf16.mxu0 %v743
    %1350 = vmatpush1.bf16.msra.mxu0 %v742
    %1351 = vmatprep.subr.bf16.mxu0 %v747
    %1352 = vmatpush1.bf16.msra.mxu0 %v746
    %1353 = vmatprep.subr.bf16.mxu0 %v751
    %1354 = vmatpush1.bf16.msra.mxu0 %v750
    %1355 = vmatprep.subr.bf16.mxu0 %v755
    %1356 = vmatpush1.bf16.msra.mxu0 %v754
    %1357 = vmatprep.subr.bf16.mxu0 %v759
    %1358 = vmatpush1.bf16.msra.mxu0 %v758
    %1359 = vmatprep.subr.bf16.mxu0 %v763
    %1360 = vmatpush1.bf16.msra.mxu0 %v762
    %1361 = vmatprep.subr.bf16.mxu0 %v767
    %1362 = vmatpush1.bf16.msra.mxu0 %v766
    %1363 = vmatprep.mubr.bf16.mxu0 %v1330
    %1364 = vmatmul.mubr.bf16.gmra.mrb[0].mxu0 %v1329
    %v1365 = vpop.f32.mrb[0].mxu0
    %v1366 = vadd.f32 %v838, %v1365
    %v1367 = vpop.f32.mrb[0].mxu0
    %v1368 = vadd.f32 %v842, %v1367
    %v1369 = vpop.f32.mrb[0].mxu0
    %v1370 = vpop.f32.mrb[0].mxu0
    %1371 = vdwg.mxu0
    %1372 = vmatprep.subr.bf16.mxu0 %v709
    %1373 = vmatpush1.bf16.msra.mxu0 %v708
    %1374 = vmatprep.subr.bf16.mxu0 %v713
    %1375 = vmatpush1.bf16.msra.mxu0 %v712
    %1376 = vmatprep.subr.bf16.mxu0 %v717
    %1377 = vmatpush1.bf16.msra.mxu0 %v716
    %1378 = vmatprep.subr.bf16.mxu0 %v721
    %1379 = vmatpush1.bf16.msra.mxu0 %v720
    %1380 = vmatprep.subr.bf16.mxu0 %v725
    %1381 = vmatpush1.bf16.msra.mxu0 %v724
    %1382 = vmatprep.subr.bf16.mxu0 %v729
    %1383 = vmatpush1.bf16.msra.mxu0 %v728
    %1384 = vmatprep.subr.bf16.mxu0 %v733
    %1385 = vmatpush1.bf16.msra.mxu0 %v732
    %1386 = vmatprep.subr.bf16.mxu0 %v737
    %1387 = vmatpush1.bf16.msra.mxu0 %v736
    %1388 = vmatprep.subr.bf16.mxu0 %v741
    %1389 = vmatpush1.bf16.msra.mxu0 %v740
    %1390 = vmatprep.subr.bf16.mxu0 %v745
    %1391 = vmatpush1.bf16.msra.mxu0 %v744
    %1392 = vmatprep.subr.bf16.mxu0 %v749
    %1393 = vmatpush1.bf16.msra.mxu0 %v748
    %1394 = vmatprep.subr.bf16.mxu0 %v753
    %1395 = vmatpush1.bf16.msra.mxu0 %v752
    %1396 = vmatprep.subr.bf16.mxu0 %v757
    %1397 = vmatpush1.bf16.msra.mxu0 %v756
    %1398 = vmatprep.subr.bf16.mxu0 %v761
    %1399 = vmatpush1.bf16.msra.mxu0 %v760
    %1400 = vmatprep.subr.bf16.mxu0 %v765
    %1401 = vmatpush1.bf16.msra.mxu0 %v764
    %1402 = vmatprep.subr.bf16.mxu0 %v769
    %1403 = vmatpush1.bf16.msra.mxu0 %v768
    %1404 = vmatprep.mubr.bf16.mxu0 %v1330
    %1405 = vmatmul.mubr.bf16.gmra.mrb[0].mxu0 %v1329
    %v1406 = vpop.f32.mrb[0].mxu0
    %v1407 = vadd.f32 %v846, %v1406
    %v1408 = vpop.f32.mrb[0].mxu0
    %v1409 = vadd.f32 %v850, %v1408
    %v1410 = vpop.f32.mrb[0].mxu0
    %v1411 = vpop.f32.mrb[0].mxu0
    %1412 = vdwg.mxu0
    %v1413 = vsub.f32 0.0, %v1366
    %v1414 = vsub.f32 0.0, %v1368
    %v1415 = vsub.f32 0.0, %v1407
    %v1416 = vmul.f32 %v1413, 1.442695
    %v1417 = vpow.pop %v1416
    %v1418 = vmul.f32 %v1414, 1.442695
    %v1419 = vpow.pop %v1418
    %v1420 = vmul.f32 %v1415, 1.442695
    %v1421 = vpow.pop %v1420
    %v1422 = vadd.f32 %v1417, 1.0
    %v1423 = vadd.f32 %v1419, 1.0
    %v1424 = vadd.f32 %v1421, 1.0
    %v1425 = vrcp.pop %v1422
    %v1426 = vrcp.pop %v1423
    %v1427 = vrcp.pop %v1424
    %v1428 = vtanh.pop %v1409
    %v1429 = vmul.f32 %v1426, %v1193
    %v1430 = vmul.f32 %v1425, %v1428
    %v1431 = vadd.f32 %v1429, %v1430
    %v1432 = vtanh.pop %v1431
    %v1433 = vmul.f32 %v1427, %v1432
    %s1434 = scalar_lea.vmem [#allocation2], 3
    %v1435 = vld [vmem:[%s1434] ss:$8 sm:$0xf]
    %1436 = vmatprep.subr.bf16.mxu0 %v318
    %1437 = vmatpush1.bf16.msra.mxu0 %v317
    %1438 = vmatprep.subr.bf16.mxu0 %v322
    %1439 = vmatpush1.bf16.msra.mxu0 %v321
    %1440 = vmatprep.subr.bf16.mxu0 %v326
    %1441 = vmatpush1.bf16.msra.mxu0 %v325
    %1442 = vmatprep.subr.bf16.mxu0 %v330
    %1443 = vmatpush1.bf16.msra.mxu0 %v329
    %1444 = vmatprep.subr.bf16.mxu0 %v334
    %1445 = vmatpush1.bf16.msra.mxu0 %v333
    %1446 = vmatprep.subr.bf16.mxu0 %v338
    %1447 = vmatpush1.bf16.msra.mxu0 %v337
    %1448 = vmatprep.subr.bf16.mxu0 %v342
    %1449 = vmatpush1.bf16.msra.mxu0 %v341
    %1450 = vmatprep.subr.bf16.mxu0 %v346
    %1451 = vmatpush1.bf16.msra.mxu0 %v345
    %1452 = vmatprep.subr.bf16.mxu0 0
    %1453 = vmatpush1.bf16.msra.mxu0 0
    %1454 = vmatprep.subr.bf16.mxu0 0
    %1455 = vmatpush1.bf16.msra.mxu0 0
    %1456 = vmatprep.subr.bf16.mxu0 0
    %1457 = vmatpush1.bf16.msra.mxu0 0
    %1458 = vmatprep.subr.bf16.mxu0 0
    %1459 = vmatpush1.bf16.msra.mxu0 0
    %1460 = vmatprep.subr.bf16.mxu0 0
    %1461 = vmatpush1.bf16.msra.mxu0 0
    %1462 = vmatprep.subr.bf16.mxu0 0
    %1463 = vmatpush1.bf16.msra.mxu0 0
    %1464 = vmatprep.subr.bf16.mxu0 0
    %1465 = vmatpush1.bf16.msra.mxu0 0
    %1466 = vmatprep.subr.bf16.mxu0 0
    %1467 = vmatpush1.bf16.msra.mxu0 0
    %1468 = vmatprep.mubr.bf16.mxu0 0
    %1469 = vmatmul.mubr.bf16.gmra.mrb[0].mxu0 %v1329
    %v1470 = vpop.f32.mrb[0].mxu0
    %v1471 = vadd.f32 0.0, %v1470
    %v1472 = vpop.f32.mrb[0].mxu0
    %v1473 = vadd.f32 0.0, %v1472
    %v1474 = vpop.f32.mrb[0].mxu0
    %v1475 = vpop.f32.mrb[0].mxu0
    %1476 = vdwg.mxu0
    %1477 = vmatprep.subr.bf16.mxu0 %v320
    %1478 = vmatpush1.bf16.msra.mxu0 %v319
    %1479 = vmatprep.subr.bf16.mxu0 %v324
    %1480 = vmatpush1.bf16.msra.mxu0 %v323
    %1481 = vmatprep.subr.bf16.mxu0 %v328
    %1482 = vmatpush1.bf16.msra.mxu0 %v327
    %1483 = vmatprep.subr.bf16.mxu0 %v332
    %1484 = vmatpush1.bf16.msra.mxu0 %v331
    %1485 = vmatprep.subr.bf16.mxu0 %v336
    %1486 = vmatpush1.bf16.msra.mxu0 %v335
    %1487 = vmatprep.subr.bf16.mxu0 %v340
    %1488 = vmatpush1.bf16.msra.mxu0 %v339
    %1489 = vmatprep.subr.bf16.mxu0 %v344
    %1490 = vmatpush1.bf16.msra.mxu0 %v343
    %1491 = vmatprep.subr.bf16.mxu0 %v348
    %1492 = vmatpush1.bf16.msra.mxu0 %v347
    %1493 = vmatprep.subr.bf16.mxu0 0
    %1494 = vmatpush1.bf16.msra.mxu0 0
    %1495 = vmatprep.subr.bf16.mxu0 0
    %1496 = vmatpush1.bf16.msra.mxu0 0
    %1497 = vmatprep.subr.bf16.mxu0 0
    %1498 = vmatpush1.bf16.msra.mxu0 0
    %1499 = vmatprep.subr.bf16.mxu0 0
    %1500 = vmatpush1.bf16.msra.mxu0 0
    %1501 = vmatprep.subr.bf16.mxu0 0
    %1502 = vmatpush1.bf16.msra.mxu0 0
    %1503 = vmatprep.subr.bf16.mxu0 0
    %1504 = vmatpush1.bf16.msra.mxu0 0
    %1505 = vmatprep.subr.bf16.mxu0 0
    %1506 = vmatpush1.bf16.msra.mxu0 0
    %1507 = vmatprep.subr.bf16.mxu0 0
    %1508 = vmatpush1.bf16.msra.mxu0 0
    %1509 = vmatprep.mubr.bf16.mxu0 0
    %1510 = vmatmul.mubr.bf16.gmra.mrb[0].mxu0 %v1329
    %v1511 = vpop.f32.mrb[0].mxu0
    %v1512 = vadd.f32 0.0, %v1511
    %v1513 = vpop.f32.mrb[0].mxu0
    %v1514 = vadd.f32 0.0, %v1513
    %v1515 = vpop.f32.mrb[0].mxu0
    %v1516 = vpop.f32.mrb[0].mxu0
    %1517 = vdwg.mxu0
    %v1522 = vcombine.low %v1471, %v1473
    %v1523 = vcombine.low %v1512, %v1514
    %v1525 = vunpack.c.l.s4 1966171168
    %v1526 = vunpack.c.0.s8 %v1525
    %v1527 = vlaneseq
    %v1528 = vshrl.u32 %v1527, 7
    %v1529 = vsub.s32 %v1526, %v1528
    %v1530 = vrot.slane %v1522, %v1529
    %v1532 = vunpack.c.l.s4 1966171168
    %v1533 = vunpack.c.0.s8 %v1532
    %v1534 = vlaneseq
    %v1535 = vshrl.u32 %v1534, 7
    %v1536 = vsub.s32 %v1533, %v1535
    %v1537 = vrot.slane %v1523, %v1536
    %v1538 = vcombine.low %v1530, %v1537
    %v1540 = vunpack.c.l.s4 1966171168
    %v1541 = vunpack.c.0.s8 %v1540
    %v1542 = vlaneseq
    %v1543 = vshrl.u32 %v1542, 7
    %v1544 = vsub.s32 %v1541, %v1543
    %v1545 = vrot.slane %v1538, %v1544
    %v1547 = vadd.f32 %v1435, %v1545
    %v1548 = vsub.f32 0.0, %v1547
    %v1549 = vmul.f32 %v1548, 1.442695
    %v1550 = vpow.pop %v1549
    %v1551 = vadd.f32 %v1550, 1.0
    %v1552 = vrcp.pop %v1551
    %v1554 = vrot.slane %v1547, 3
    %v1556 = vtanh.pop %v1554
    %v1558 = vrot.slane %v1552, 1
    %v1560 = vmul.f32 %v1558, %v1324
    %v1561 = vmul.f32 %v1552, %v1556
    %v1562 = vadd.f32 %v1560, %v1561
    %v1563 = vtanh.pop %v1562
    %v1564 = vrot.slane %v1552, 2
    %v1566 = vmul.f32 %v1564, %v1563
    %v1567 = vpack.c.bf16 %v1566, %v1566
    %v1568 = vpack.c.bf16 %v1433, %v1433
    %1569 = vmatprep.subr.bf16.mxu0 %v707
    %1570 = vmatpush1.bf16.msra.mxu0 %v706
    %1571 = vmatprep.subr.bf16.mxu0 %v711
    %1572 = vmatpush1.bf16.msra.mxu0 %v710
    %1573 = vmatprep.subr.bf16.mxu0 %v715
    %1574 = vmatpush1.bf16.msra.mxu0 %v714
    %1575 = vmatprep.subr.bf16.mxu0 %v719
    %1576 = vmatpush1.bf16.msra.mxu0 %v718
    %1577 = vmatprep.subr.bf16.mxu0 %v723
    %1578 = vmatpush1.bf16.msra.mxu0 %v722
    %1579 = vmatprep.subr.bf16.mxu0 %v727
    %1580 = vmatpush1.bf16.msra.mxu0 %v726
    %1581 = vmatprep.subr.bf16.mxu0 %v731
    %1582 = vmatpush1.bf16.msra.mxu0 %v730
    %1583 = vmatprep.subr.bf16.mxu0 %v735
    %1584 = vmatpush1.bf16.msra.mxu0 %v734
    %1585 = vmatprep.subr.bf16.mxu0 %v739
    %1586 = vmatpush1.bf16.msra.mxu0 %v738
    %1587 = vmatprep.subr.bf16.mxu0 %v743
    %1588 = vmatpush1.bf16.msra.mxu0 %v742
    %1589 = vmatprep.subr.bf16.mxu0 %v747
    %1590 = vmatpush1.bf16.msra.mxu0 %v746
    %1591 = vmatprep.subr.bf16.mxu0 %v751
    %1592 = vmatpush1.bf16.msra.mxu0 %v750
    %1593 = vmatprep.subr.bf16.mxu0 %v755
    %1594 = vmatpush1.bf16.msra.mxu0 %v754
    %1595 = vmatprep.subr.bf16.mxu0 %v759
    %1596 = vmatpush1.bf16.msra.mxu0 %v758
    %1597 = vmatprep.subr.bf16.mxu0 %v763
    %1598 = vmatpush1.bf16.msra.mxu0 %v762
    %1599 = vmatprep.subr.bf16.mxu0 %v767
    %1600 = vmatpush1.bf16.msra.mxu0 %v766
    %1601 = vmatprep.mubr.bf16.mxu0 %v1568
    %1602 = vmatmul.mubr.bf16.gmra.mrb[0].mxu0 %v1567
    %v1603 = vpop.f32.mrb[0].mxu0
    %v1604 = vadd.f32 %v838, %v1603
    %v1605 = vpop.f32.mrb[0].mxu0
    %v1606 = vadd.f32 %v842, %v1605
    %v1607 = vpop.f32.mrb[0].mxu0
    %v1608 = vpop.f32.mrb[0].mxu0
    %1609 = vdwg.mxu0
    %1610 = vmatprep.subr.bf16.mxu0 %v709
    %1611 = vmatpush1.bf16.msra.mxu0 %v708
    %1612 = vmatprep.subr.bf16.mxu0 %v713
    %1613 = vmatpush1.bf16.msra.mxu0 %v712
    %1614 = vmatprep.subr.bf16.mxu0 %v717
    %1615 = vmatpush1.bf16.msra.mxu0 %v716
    %1616 = vmatprep.subr.bf16.mxu0 %v721
    %1617 = vmatpush1.bf16.msra.mxu0 %v720
    %1618 = vmatprep.subr.bf16.mxu0 %v725
    %1619 = vmatpush1.bf16.msra.mxu0 %v724
    %1620 = vmatprep.subr.bf16.mxu0 %v729
    %1621 = vmatpush1.bf16.msra.mxu0 %v728
    %1622 = vmatprep.subr.bf16.mxu0 %v733
    %1623 = vmatpush1.bf16.msra.mxu0 %v732
    %1624 = vmatprep.subr.bf16.mxu0 %v737
    %1625 = vmatpush1.bf16.msra.mxu0 %v736
    %1626 = vmatprep.subr.bf16.mxu0 %v741
    %1627 = vmatpush1.bf16.msra.mxu0 %v740
    %1628 = vmatprep.subr.bf16.mxu0 %v745
    %1629 = vmatpush1.bf16.msra.mxu0 %v744
    %1630 = vmatprep.subr.bf16.mxu0 %v749
    %1631 = vmatpush1.bf16.msra.mxu0 %v748
    %1632 = vmatprep.subr.bf16.mxu0 %v753
    %1633 = vmatpush1.bf16.msra.mxu0 %v752
    %1634 = vmatprep.subr.bf16.mxu0 %v757
    %1635 = vmatpush1.bf16.msra.mxu0 %v756
    %1636 = vmatprep.subr.bf16.mxu0 %v761
    %1637 = vmatpush1.bf16.msra.mxu0 %v760
    %1638 = vmatprep.subr.bf16.mxu0 %v765
    %1639 = vmatpush1.bf16.msra.mxu0 %v764
    %1640 = vmatprep.subr.bf16.mxu0 %v769
    %1641 = vmatpush1.bf16.msra.mxu0 %v768
    %1642 = vmatprep.mubr.bf16.mxu0 %v1568
    %1643 = vmatmul.mubr.bf16.gmra.mrb[0].mxu0 %v1567
    %v1644 = vpop.f32.mrb[0].mxu0
    %v1645 = vadd.f32 %v846, %v1644
    %v1646 = vpop.f32.mrb[0].mxu0
    %v1647 = vadd.f32 %v850, %v1646
    %v1648 = vpop.f32.mrb[0].mxu0
    %v1649 = vpop.f32.mrb[0].mxu0
    %1650 = vdwg.mxu0
    %v1651 = vsub.f32 0.0, %v1604
    %v1652 = vsub.f32 0.0, %v1606
    %v1653 = vsub.f32 0.0, %v1645
    %v1654 = vmul.f32 %v1651, 1.442695
    %v1655 = vpow.pop %v1654
    %v1656 = vmul.f32 %v1652, 1.442695
    %v1657 = vpow.pop %v1656
    %v1658 = vmul.f32 %v1653, 1.442695
    %v1659 = vpow.pop %v1658
    %v1660 = vadd.f32 %v1655, 1.0
    %v1661 = vadd.f32 %v1657, 1.0
    %v1662 = vadd.f32 %v1659, 1.0
    %v1663 = vrcp.pop %v1660
    %v1664 = vrcp.pop %v1661
    %v1665 = vrcp.pop %v1662
    %v1666 = vtanh.pop %v1647
    %v1667 = vmul.f32 %v1664, %v1431
    %v1668 = vmul.f32 %v1663, %v1666
    %v1669 = vadd.f32 %v1667, %v1668
    %v1670 = vtanh.pop %v1669
    %v1671 = vmul.f32 %v1665, %v1670
    %s1672 = scalar_lea.vmem [#allocation2], 4
    %v1673 = vld [vmem:[%s1672] ss:$8 sm:$0xf]
    %1674 = vmatprep.subr.bf16.mxu0 %v318
    %1675 = vmatpush1.bf16.msra.mxu0 %v317
    %1676 = vmatprep.subr.bf16.mxu0 %v322
    %1677 = vmatpush1.bf16.msra.mxu0 %v321
    %1678 = vmatprep.subr.bf16.mxu0 %v326
    %1679 = vmatpush1.bf16.msra.mxu0 %v325
    %1680 = vmatprep.subr.bf16.mxu0 %v330
    %1681 = vmatpush1.bf16.msra.mxu0 %v329
    %1682 = vmatprep.subr.bf16.mxu0 %v334
    %1683 = vmatpush1.bf16.msra.mxu0 %v333
    %1684 = vmatprep.subr.bf16.mxu0 %v338
    %1685 = vmatpush1.bf16.msra.mxu0 %v337
    %1686 = vmatprep.subr.bf16.mxu0 %v342
    %1687 = vmatpush1.bf16.msra.mxu0 %v341
    %1688 = vmatprep.subr.bf16.mxu0 %v346
    %1689 = vmatpush1.bf16.msra.mxu0 %v345
    %1690 = vmatprep.subr.bf16.mxu0 0
    %1691 = vmatpush1.bf16.msra.mxu0 0
    %1692 = vmatprep.subr.bf16.mxu0 0
    %1693 = vmatpush1.bf16.msra.mxu0 0
    %1694 = vmatprep.subr.bf16.mxu0 0
    %1695 = vmatpush1.bf16.msra.mxu0 0
    %1696 = vmatprep.subr.bf16.mxu0 0
    %1697 = vmatpush1.bf16.msra.mxu0 0
    %1698 = vmatprep.subr.bf16.mxu0 0
    %1699 = vmatpush1.bf16.msra.mxu0 0
    %1700 = vmatprep.subr.bf16.mxu0 0
    %1701 = vmatpush1.bf16.msra.mxu0 0
    %1702 = vmatprep.subr.bf16.mxu0 0
    %1703 = vmatpush1.bf16.msra.mxu0 0
    %1704 = vmatprep.subr.bf16.mxu0 0
    %1705 = vmatpush1.bf16.msra.mxu0 0
    %1706 = vmatprep.mubr.bf16.mxu0 0
    %1707 = vmatmul.mubr.bf16.gmra.mrb[0].mxu0 %v1567
    %v1708 = vpop.f32.mrb[0].mxu0
    %v1709 = vadd.f32 0.0, %v1708
    %v1710 = vpop.f32.mrb[0].mxu0
    %v1711 = vadd.f32 0.0, %v1710
    %v1712 = vpop.f32.mrb[0].mxu0
    %v1713 = vpop.f32.mrb[0].mxu0
    %1714 = vdwg.mxu0
    %1715 = vmatprep.subr.bf16.mxu0 %v320
    %1716 = vmatpush1.bf16.msra.mxu0 %v319
    %1717 = vmatprep.subr.bf16.mxu0 %v324
    %1718 = vmatpush1.bf16.msra.mxu0 %v323
    %1719 = vmatprep.subr.bf16.mxu0 %v328
    %1720 = vmatpush1.bf16.msra.mxu0 %v327
    %1721 = vmatprep.subr.bf16.mxu0 %v332
    %1722 = vmatpush1.bf16.msra.mxu0 %v331
    %1723 = vmatprep.subr.bf16.mxu0 %v336
    %1724 = vmatpush1.bf16.msra.mxu0 %v335
    %1725 = vmatprep.subr.bf16.mxu0 %v340
    %1726 = vmatpush1.bf16.msra.mxu0 %v339
    %1727 = vmatprep.subr.bf16.mxu0 %v344
    %1728 = vmatpush1.bf16.msra.mxu0 %v343
    %1729 = vmatprep.subr.bf16.mxu0 %v348
    %1730 = vmatpush1.bf16.msra.mxu0 %v347
    %1731 = vmatprep.subr.bf16.mxu0 0
    %1732 = vmatpush1.bf16.msra.mxu0 0
    %1733 = vmatprep.subr.bf16.mxu0 0
    %1734 = vmatpush1.bf16.msra.mxu0 0
    %1735 = vmatprep.subr.bf16.mxu0 0
    %1736 = vmatpush1.bf16.msra.mxu0 0
    %1737 = vmatprep.subr.bf16.mxu0 0
    %1738 = vmatpush1.bf16.msra.mxu0 0
    %1739 = vmatprep.subr.bf16.mxu0 0
    %1740 = vmatpush1.bf16.msra.mxu0 0
    %1741 = vmatprep.subr.bf16.mxu0 0
    %1742 = vmatpush1.bf16.msra.mxu0 0
    %1743 = vmatprep.subr.bf16.mxu0 0
    %1744 = vmatpush1.bf16.msra.mxu0 0
    %1745 = vmatprep.subr.bf16.mxu0 0
    %1746 = vmatpush1.bf16.msra.mxu0 0
    %1747 = vmatprep.mubr.bf16.mxu0 0
    %1748 = vmatmul.mubr.bf16.gmra.mrb[0].mxu0 %v1567
    %v1749 = vpop.f32.mrb[0].mxu0
    %v1750 = vadd.f32 0.0, %v1749
    %v1751 = vpop.f32.mrb[0].mxu0
    %v1752 = vadd.f32 0.0, %v1751
    %v1753 = vpop.f32.mrb[0].mxu0
    %v1754 = vpop.f32.mrb[0].mxu0
    %1755 = vdwg.mxu0
    %v1760 = vcombine.low %v1709, %v1711
    %v1761 = vcombine.low %v1750, %v1752
    %v1763 = vunpack.c.l.s4 1966171168
    %v1764 = vunpack.c.0.s8 %v1763
    %v1765 = vlaneseq
    %v1766 = vshrl.u32 %v1765, 7
    %v1767 = vsub.s32 %v1764, %v1766
    %v1768 = vrot.slane %v1760, %v1767
    %v1770 = vunpack.c.l.s4 1966171168
    %v1771 = vunpack.c.0.s8 %v1770
    %v1772 = vlaneseq
    %v1773 = vshrl.u32 %v1772, 7
    %v1774 = vsub.s32 %v1771, %v1773
    %v1775 = vrot.slane %v1761, %v1774
    %v1776 = vcombine.low %v1768, %v1775
    %v1778 = vunpack.c.l.s4 1966171168
    %v1779 = vunpack.c.0.s8 %v1778
    %v1780 = vlaneseq
    %v1781 = vshrl.u32 %v1780, 7
    %v1782 = vsub.s32 %v1779, %v1781
    %v1783 = vrot.slane %v1776, %v1782
    %v1785 = vadd.f32 %v1673, %v1783
    %v1786 = vsub.f32 0.0, %v1785
    %v1787 = vmul.f32 %v1786, 1.442695
    %v1788 = vpow.pop %v1787
    %v1789 = vadd.f32 %v1788, 1.0
    %v1790 = vrcp.pop %v1789
    %v1792 = vrot.slane %v1785, 3
    %v1794 = vtanh.pop %v1792
    %v1796 = vrot.slane %v1790, 1
    %v1798 = vmul.f32 %v1796, %v1562
    %v1799 = vmul.f32 %v1790, %v1794
    %v1800 = vadd.f32 %v1798, %v1799
    %v1801 = vtanh.pop %v1800
    %v1802 = vrot.slane %v1790, 2
    %v1804 = vmul.f32 %v1802, %v1801
    %v1805 = vpack.c.bf16 %v1804, %v1804
    %v1806 = vpack.c.bf16 %v1671, %v1671
    %1807 = vmatprep.subr.bf16.mxu0 %v707
    %1808 = vmatpush1.bf16.msra.mxu0 %v706
    %1809 = vmatprep.subr.bf16.mxu0 %v711
    %1810 = vmatpush1.bf16.msra.mxu0 %v710
    %1811 = vmatprep.subr.bf16.mxu0 %v715
    %1812 = vmatpush1.bf16.msra.mxu0 %v714
    %1813 = vmatprep.subr.bf16.mxu0 %v719
    %1814 = vmatpush1.bf16.msra.mxu0 %v718
    %1815 = vmatprep.subr.bf16.mxu0 %v723
    %1816 = vmatpush1.bf16.msra.mxu0 %v722
    %1817 = vmatprep.subr.bf16.mxu0 %v727
    %1818 = vmatpush1.bf16.msra.mxu0 %v726
    %1819 = vmatprep.subr.bf16.mxu0 %v731
    %1820 = vmatpush1.bf16.msra.mxu0 %v730
    %1821 = vmatprep.subr.bf16.mxu0 %v735
    %1822 = vmatpush1.bf16.msra.mxu0 %v734
    %1823 = vmatprep.subr.bf16.mxu0 %v739
    %1824 = vmatpush1.bf16.msra.mxu0 %v738
    %1825 = vmatprep.subr.bf16.mxu0 %v743
    %1826 = vmatpush1.bf16.msra.mxu0 %v742
    %1827 = vmatprep.subr.bf16.mxu0 %v747
    %1828 = vmatpush1.bf16.msra.mxu0 %v746
    %1829 = vmatprep.subr.bf16.mxu0 %v751
    %1830 = vmatpush1.bf16.msra.mxu0 %v750
    %1831 = vmatprep.subr.bf16.mxu0 %v755
    %1832 = vmatpush1.bf16.msra.mxu0 %v754
    %1833 = vmatprep.subr.bf16.mxu0 %v759
    %1834 = vmatpush1.bf16.msra.mxu0 %v758
    %1835 = vmatprep.subr.bf16.mxu0 %v763
    %1836 = vmatpush1.bf16.msra.mxu0 %v762
    %1837 = vmatprep.subr.bf16.mxu0 %v767
    %1838 = vmatpush1.bf16.msra.mxu0 %v766
    %1839 = vmatprep.mubr.bf16.mxu0 %v1806
    %1840 = vmatmul.mubr.bf16.gmra.mrb[0].mxu0 %v1805
    %v1841 = vpop.f32.mrb[0].mxu0
    %v1842 = vadd.f32 %v838, %v1841
    %v1843 = vpop.f32.mrb[0].mxu0
    %v1844 = vadd.f32 %v842, %v1843
    %v1845 = vpop.f32.mrb[0].mxu0
    %v1846 = vpop.f32.mrb[0].mxu0
    %1847 = vdwg.mxu0
    %1848 = vmatprep.subr.bf16.mxu0 %v709
    %1849 = vmatpush1.bf16.msra.mxu0 %v708
    %1850 = vmatprep.subr.bf16.mxu0 %v713
    %1851 = vmatpush1.bf16.msra.mxu0 %v712
    %1852 = vmatprep.subr.bf16.mxu0 %v717
    %1853 = vmatpush1.bf16.msra.mxu0 %v716
    %1854 = vmatprep.subr.bf16.mxu0 %v721
    %1855 = vmatpush1.bf16.msra.mxu0 %v720
    %1856 = vmatprep.subr.bf16.mxu0 %v725
    %1857 = vmatpush1.bf16.msra.mxu0 %v724
    %1858 = vmatprep.subr.bf16.mxu0 %v729
    %1859 = vmatpush1.bf16.msra.mxu0 %v728
    %1860 = vmatprep.subr.bf16.mxu0 %v733
    %1861 = vmatpush1.bf16.msra.mxu0 %v732
    %1862 = vmatprep.subr.bf16.mxu0 %v737
    %1863 = vmatpush1.bf16.msra.mxu0 %v736
    %1864 = vmatprep.subr.bf16.mxu0 %v741
    %1865 = vmatpush1.bf16.msra.mxu0 %v740
    %1866 = vmatprep.subr.bf16.mxu0 %v745
    %1867 = vmatpush1.bf16.msra.mxu0 %v744
    %1868 = vmatprep.subr.bf16.mxu0 %v749
    %1869 = vmatpush1.bf16.msra.mxu0 %v748
    %1870 = vmatprep.subr.bf16.mxu0 %v753
    %1871 = vmatpush1.bf16.msra.mxu0 %v752
    %1872 = vmatprep.subr.bf16.mxu0 %v757
    %1873 = vmatpush1.bf16.msra.mxu0 %v756
    %1874 = vmatprep.subr.bf16.mxu0 %v761
    %1875 = vmatpush1.bf16.msra.mxu0 %v760
    %1876 = vmatprep.subr.bf16.mxu0 %v765
    %1877 = vmatpush1.bf16.msra.mxu0 %v764
    %1878 = vmatprep.subr.bf16.mxu0 %v769
    %1879 = vmatpush1.bf16.msra.mxu0 %v768
    %1880 = vmatprep.mubr.bf16.mxu0 %v1806
    %1881 = vmatmul.mubr.bf16.gmra.mrb[0].mxu0 %v1805
    %v1882 = vpop.f32.mrb[0].mxu0
    %v1883 = vadd.f32 %v846, %v1882
    %v1884 = vpop.f32.mrb[0].mxu0
    %v1885 = vadd.f32 %v850, %v1884
    %v1886 = vpop.f32.mrb[0].mxu0
    %v1887 = vpop.f32.mrb[0].mxu0
    %1888 = vdwg.mxu0
    %v1889 = vsub.f32 0.0, %v1842
    %v1890 = vsub.f32 0.0, %v1844
    %v1891 = vsub.f32 0.0, %v1883
    %v1892 = vmul.f32 %v1889, 1.442695
    %v1893 = vpow.pop %v1892
    %v1894 = vmul.f32 %v1890, 1.442695
    %v1895 = vpow.pop %v1894
    %v1896 = vmul.f32 %v1891, 1.442695
    %v1897 = vpow.pop %v1896
    %v1898 = vadd.f32 %v1893, 1.0
    %v1899 = vadd.f32 %v1895, 1.0
    %v1900 = vadd.f32 %v1897, 1.0
    %v1901 = vrcp.pop %v1898
    %v1902 = vrcp.pop %v1899
    %v1903 = vrcp.pop %v1900
    %v1904 = vtanh.pop %v1885
    %v1905 = vmul.f32 %v1902, %v1669
    %v1906 = vmul.f32 %v1901, %v1904
    %v1907 = vadd.f32 %v1905, %v1906
    %v1908 = vtanh.pop %v1907
    %v1909 = vmul.f32 %v1903, %v1908
    %s1910 = scalar_lea.vmem [#allocation2], 5
    %v1911 = vld [vmem:[%s1910] ss:$8 sm:$0xf]
    %1912 = vmatprep.subr.bf16.mxu0 %v318
    %1913 = vmatpush1.bf16.msra.mxu0 %v317
    %1914 = vmatprep.subr.bf16.mxu0 %v322
    %1915 = vmatpush1.bf16.msra.mxu0 %v321
    %1916 = vmatprep.subr.bf16.mxu0 %v326
    %1917 = vmatpush1.bf16.msra.mxu0 %v325
    %1918 = vmatprep.subr.bf16.mxu0 %v330
    %1919 = vmatpush1.bf16.msra.mxu0 %v329
    %1920 = vmatprep.subr.bf16.mxu0 %v334
    %1921 = vmatpush1.bf16.msra.mxu0 %v333
    %1922 = vmatprep.subr.bf16.mxu0 %v338
    %1923 = vmatpush1.bf16.msra.mxu0 %v337
    %1924 = vmatprep.subr.bf16.mxu0 %v342
    %1925 = vmatpush1.bf16.msra.mxu0 %v341
    %1926 = vmatprep.subr.bf16.mxu0 %v346
    %1927 = vmatpush1.bf16.msra.mxu0 %v345
    %1928 = vmatprep.subr.bf16.mxu0 0
    %1929 = vmatpush1.bf16.msra.mxu0 0
    %1930 = vmatprep.subr.bf16.mxu0 0
    %1931 = vmatpush1.bf16.msra.mxu0 0
    %1932 = vmatprep.subr.bf16.mxu0 0
    %1933 = vmatpush1.bf16.msra.mxu0 0
    %1934 = vmatprep.subr.bf16.mxu0 0
    %1935 = vmatpush1.bf16.msra.mxu0 0
    %1936 = vmatprep.subr.bf16.mxu0 0
    %1937 = vmatpush1.bf16.msra.mxu0 0
    %1938 = vmatprep.subr.bf16.mxu0 0
    %1939 = vmatpush1.bf16.msra.mxu0 0
    %1940 = vmatprep.subr.bf16.mxu0 0
    %1941 = vmatpush1.bf16.msra.mxu0 0
    %1942 = vmatprep.subr.bf16.mxu0 0
    %1943 = vmatpush1.bf16.msra.mxu0 0
    %1944 = vmatprep.mubr.bf16.mxu0 0
    %1945 = vmatmul.mubr.bf16.gmra.mrb[0].mxu0 %v1805
    %v1946 = vpop.f32.mrb[0].mxu0
    %v1947 = vadd.f32 0.0, %v1946
    %v1948 = vpop.f32.mrb[0].mxu0
    %v1949 = vadd.f32 0.0, %v1948
    %v1950 = vpop.f32.mrb[0].mxu0
    %v1951 = vpop.f32.mrb[0].mxu0
    %1952 = vdwg.mxu0
    %1953 = vmatprep.subr.bf16.mxu0 %v320
    %1954 = vmatpush1.bf16.msra.mxu0 %v319
    %1955 = vmatprep.subr.bf16.mxu0 %v324
    %1956 = vmatpush1.bf16.msra.mxu0 %v323
    %1957 = vmatprep.subr.bf16.mxu0 %v328
    %1958 = vmatpush1.bf16.msra.mxu0 %v327
    %1959 = vmatprep.subr.bf16.mxu0 %v332
    %1960 = vmatpush1.bf16.msra.mxu0 %v331
    %1961 = vmatprep.subr.bf16.mxu0 %v336
    %1962 = vmatpush1.bf16.msra.mxu0 %v335
    %1963 = vmatprep.subr.bf16.mxu0 %v340
    %1964 = vmatpush1.bf16.msra.mxu0 %v339
    %1965 = vmatprep.subr.bf16.mxu0 %v344
    %1966 = vmatpush1.bf16.msra.mxu0 %v343
    %1967 = vmatprep.subr.bf16.mxu0 %v348
    %1968 = vmatpush1.bf16.msra.mxu0 %v347
    %1969 = vmatprep.subr.bf16.mxu0 0
    %1970 = vmatpush1.bf16.msra.mxu0 0
    %1971 = vmatprep.subr.bf16.mxu0 0
    %1972 = vmatpush1.bf16.msra.mxu0 0
    %1973 = vmatprep.subr.bf16.mxu0 0
    %1974 = vmatpush1.bf16.msra.mxu0 0
    %1975 = vmatprep.subr.bf16.mxu0 0
    %1976 = vmatpush1.bf16.msra.mxu0 0
    %1977 = vmatprep.subr.bf16.mxu0 0
    %1978 = vmatpush1.bf16.msra.mxu0 0
    %1979 = vmatprep.subr.bf16.mxu0 0
    %1980 = vmatpush1.bf16.msra.mxu0 0
    %1981 = vmatprep.subr.bf16.mxu0 0
    %1982 = vmatpush1.bf16.msra.mxu0 0
    %1983 = vmatprep.subr.bf16.mxu0 0
    %1984 = vmatpush1.bf16.msra.mxu0 0
    %1985 = vmatprep.mubr.bf16.mxu0 0
    %1986 = vmatmul.mubr.bf16.gmra.mrb[0].mxu0 %v1805
    %v1987 = vpop.f32.mrb[0].mxu0
    %v1988 = vadd.f32 0.0, %v1987
    %v1989 = vpop.f32.mrb[0].mxu0
    %v1990 = vadd.f32 0.0, %v1989
    %v1991 = vpop.f32.mrb[0].mxu0
    %v1992 = vpop.f32.mrb[0].mxu0
    %1993 = vdwg.mxu0
    %v1998 = vcombine.low %v1947, %v1949
    %v1999 = vcombine.low %v1988, %v1990
    %v2001 = vunpack.c.l.s4 1966171168
    %v2002 = vunpack.c.0.s8 %v2001
    %v2003 = vlaneseq
    %v2004 = vshrl.u32 %v2003, 7
    %v2005 = vsub.s32 %v2002, %v2004
    %v2006 = vrot.slane %v1998, %v2005
    %v2008 = vunpack.c.l.s4 1966171168
    %v2009 = vunpack.c.0.s8 %v2008
    %v2010 = vlaneseq
    %v2011 = vshrl.u32 %v2010, 7
    %v2012 = vsub.s32 %v2009, %v2011
    %v2013 = vrot.slane %v1999, %v2012
    %v2014 = vcombine.low %v2006, %v2013
    %v2016 = vunpack.c.l.s4 1966171168
    %v2017 = vunpack.c.0.s8 %v2016
    %v2018 = vlaneseq
    %v2019 = vshrl.u32 %v2018, 7
    %v2020 = vsub.s32 %v2017, %v2019
    %v2021 = vrot.slane %v2014, %v2020
    %v2023 = vadd.f32 %v1911, %v2021
    %v2024 = vsub.f32 0.0, %v2023
    %v2025 = vmul.f32 %v2024, 1.442695
    %v2026 = vpow.pop %v2025
    %v2027 = vadd.f32 %v2026, 1.0
    %v2028 = vrcp.pop %v2027
    %v2030 = vrot.slane %v2023, 3
    %v2032 = vtanh.pop %v2030
    %v2034 = vrot.slane %v2028, 1
    %v2036 = vmul.f32 %v2034, %v1800
    %v2037 = vmul.f32 %v2028, %v2032
    %v2038 = vadd.f32 %v2036, %v2037
    %v2039 = vtanh.pop %v2038
    %v2040 = vrot.slane %v2028, 2
    %v2042 = vmul.f32 %v2040, %v2039
    %v2043 = vpack.c.bf16 %v2042, %v2042
    %v2044 = vpack.c.bf16 %v1909, %v1909
    %2045 = vmatprep.subr.bf16.mxu0 %v707
    %2046 = vmatpush1.bf16.msra.mxu0 %v706
    %2047 = vmatprep.subr.bf16.mxu0 %v711
    %2048 = vmatpush1.bf16.msra.mxu0 %v710
    %2049 = vmatprep.subr.bf16.mxu0 %v715
    %2050 = vmatpush1.bf16.msra.mxu0 %v714
    %2051 = vmatprep.subr.bf16.mxu0 %v719
    %2052 = vmatpush1.bf16.msra.mxu0 %v718
    %2053 = vmatprep.subr.bf16.mxu0 %v723
    %2054 = vmatpush1.bf16.msra.mxu0 %v722
    %2055 = vmatprep.subr.bf16.mxu0 %v727
    %2056 = vmatpush1.bf16.msra.mxu0 %v726
    %2057 = vmatprep.subr.bf16.mxu0 %v731
    %2058 = vmatpush1.bf16.msra.mxu0 %v730
    %2059 = vmatprep.subr.bf16.mxu0 %v735
    %2060 = vmatpush1.bf16.msra.mxu0 %v734
    %2061 = vmatprep.subr.bf16.mxu0 %v739
    %2062 = vmatpush1.bf16.msra.mxu0 %v738
    %2063 = vmatprep.subr.bf16.mxu0 %v743
    %2064 = vmatpush1.bf16.msra.mxu0 %v742
    %2065 = vmatprep.subr.bf16.mxu0 %v747
    %2066 = vmatpush1.bf16.msra.mxu0 %v746
    %2067 = vmatprep.subr.bf16.mxu0 %v751
    %2068 = vmatpush1.bf16.msra.mxu0 %v750
    %2069 = vmatprep.subr.bf16.mxu0 %v755
    %2070 = vmatpush1.bf16.msra.mxu0 %v754
    %2071 = vmatprep.subr.bf16.mxu0 %v759
    %2072 = vmatpush1.bf16.msra.mxu0 %v758
    %2073 = vmatprep.subr.bf16.mxu0 %v763
    %2074 = vmatpush1.bf16.msra.mxu0 %v762
    %2075 = vmatprep.subr.bf16.mxu0 %v767
    %2076 = vmatpush1.bf16.msra.mxu0 %v766
    %2077 = vmatprep.mubr.bf16.mxu0 %v2044
    %2078 = vmatmul.mubr.bf16.gmra.mrb[0].mxu0 %v2043
    %v2079 = vpop.f32.mrb[0].mxu0
    %v2080 = vadd.f32 %v838, %v2079
    %v2081 = vpop.f32.mrb[0].mxu0
    %v2082 = vadd.f32 %v842, %v2081
    %v2083 = vpop.f32.mrb[0].mxu0
    %v2084 = vpop.f32.mrb[0].mxu0
    %2085 = vdwg.mxu0
    %2086 = vmatprep.subr.bf16.mxu0 %v709
    %2087 = vmatpush1.bf16.msra.mxu0 %v708
    %2088 = vmatprep.subr.bf16.mxu0 %v713
    %2089 = vmatpush1.bf16.msra.mxu0 %v712
    %2090 = vmatprep.subr.bf16.mxu0 %v717
    %2091 = vmatpush1.bf16.msra.mxu0 %v716
    %2092 = vmatprep.subr.bf16.mxu0 %v721
    %2093 = vmatpush1.bf16.msra.mxu0 %v720
    %2094 = vmatprep.subr.bf16.mxu0 %v725
    %2095 = vmatpush1.bf16.msra.mxu0 %v724
    %2096 = vmatprep.subr.bf16.mxu0 %v729
    %2097 = vmatpush1.bf16.msra.mxu0 %v728
    %2098 = vmatprep.subr.bf16.mxu0 %v733
    %2099 = vmatpush1.bf16.msra.mxu0 %v732
    %2100 = vmatprep.subr.bf16.mxu0 %v737
    %2101 = vmatpush1.bf16.msra.mxu0 %v736
    %2102 = vmatprep.subr.bf16.mxu0 %v741
    %2103 = vmatpush1.bf16.msra.mxu0 %v740
    %2104 = vmatprep.subr.bf16.mxu0 %v745
    %2105 = vmatpush1.bf16.msra.mxu0 %v744
    %2106 = vmatprep.subr.bf16.mxu0 %v749
    %2107 = vmatpush1.bf16.msra.mxu0 %v748
    %2108 = vmatprep.subr.bf16.mxu0 %v753
    %2109 = vmatpush1.bf16.msra.mxu0 %v752
    %2110 = vmatprep.subr.bf16.mxu0 %v757
    %2111 = vmatpush1.bf16.msra.mxu0 %v756
    %2112 = vmatprep.subr.bf16.mxu0 %v761
    %2113 = vmatpush1.bf16.msra.mxu0 %v760
    %2114 = vmatprep.subr.bf16.mxu0 %v765
    %2115 = vmatpush1.bf16.msra.mxu0 %v764
    %2116 = vmatprep.subr.bf16.mxu0 %v769
    %2117 = vmatpush1.bf16.msra.mxu0 %v768
    %2118 = vmatprep.mubr.bf16.mxu0 %v2044
    %2119 = vmatmul.mubr.bf16.gmra.mrb[0].mxu0 %v2043
    %v2120 = vpop.f32.mrb[0].mxu0
    %v2121 = vadd.f32 %v846, %v2120
    %v2122 = vpop.f32.mrb[0].mxu0
    %v2123 = vadd.f32 %v850, %v2122
    %v2124 = vpop.f32.mrb[0].mxu0
    %v2125 = vpop.f32.mrb[0].mxu0
    %2126 = vdwg.mxu0
    %v2127 = vsub.f32 0.0, %v2080
    %v2128 = vsub.f32 0.0, %v2082
    %v2129 = vsub.f32 0.0, %v2121
    %v2130 = vmul.f32 %v2127, 1.442695
    %v2131 = vpow.pop %v2130
    %v2132 = vmul.f32 %v2128, 1.442695
    %v2133 = vpow.pop %v2132
    %v2134 = vmul.f32 %v2129, 1.442695
    %v2135 = vpow.pop %v2134
    %v2136 = vadd.f32 %v2131, 1.0
    %v2137 = vadd.f32 %v2133, 1.0
    %v2138 = vadd.f32 %v2135, 1.0
    %v2139 = vrcp.pop %v2136
    %v2140 = vrcp.pop %v2137
    %v2141 = vrcp.pop %v2138
    %v2142 = vtanh.pop %v2123
    %v2143 = vmul.f32 %v2140, %v1907
    %v2144 = vmul.f32 %v2139, %v2142
    %v2145 = vadd.f32 %v2143, %v2144
    %v2146 = vtanh.pop %v2145
    %v2147 = vmul.f32 %v2141, %v2146
    %s2148 = scalar_lea.vmem [#allocation2], 6
    %v2149 = vld [vmem:[%s2148] ss:$8 sm:$0xf]
    %2150 = vmatprep.subr.bf16.mxu0 %v318
    %2151 = vmatpush1.bf16.msra.mxu0 %v317
    %2152 = vmatprep.subr.bf16.mxu0 %v322
    %2153 = vmatpush1.bf16.msra.mxu0 %v321
    %2154 = vmatprep.subr.bf16.mxu0 %v326
    %2155 = vmatpush1.bf16.msra.mxu0 %v325
    %2156 = vmatprep.subr.bf16.mxu0 %v330
    %2157 = vmatpush1.bf16.msra.mxu0 %v329
    %2158 = vmatprep.subr.bf16.mxu0 %v334
    %2159 = vmatpush1.bf16.msra.mxu0 %v333
    %2160 = vmatprep.subr.bf16.mxu0 %v338
    %2161 = vmatpush1.bf16.msra.mxu0 %v337
    %2162 = vmatprep.subr.bf16.mxu0 %v342
    %2163 = vmatpush1.bf16.msra.mxu0 %v341
    %2164 = vmatprep.subr.bf16.mxu0 %v346
    %2165 = vmatpush1.bf16.msra.mxu0 %v345
    %2166 = vmatprep.subr.bf16.mxu0 0
    %2167 = vmatpush1.bf16.msra.mxu0 0
    %2168 = vmatprep.subr.bf16.mxu0 0
    %2169 = vmatpush1.bf16.msra.mxu0 0
    %2170 = vmatprep.subr.bf16.mxu0 0
    %2171 = vmatpush1.bf16.msra.mxu0 0
    %2172 = vmatprep.subr.bf16.mxu0 0
    %2173 = vmatpush1.bf16.msra.mxu0 0
    %2174 = vmatprep.subr.bf16.mxu0 0
    %2175 = vmatpush1.bf16.msra.mxu0 0
    %2176 = vmatprep.subr.bf16.mxu0 0
    %2177 = vmatpush1.bf16.msra.mxu0 0
    %2178 = vmatprep.subr.bf16.mxu0 0
    %2179 = vmatpush1.bf16.msra.mxu0 0
    %2180 = vmatprep.subr.bf16.mxu0 0
    %2181 = vmatpush1.bf16.msra.mxu0 0
    %2182 = vmatprep.mubr.bf16.mxu0 0
    %2183 = vmatmul.mubr.bf16.gmra.mrb[0].mxu0 %v2043
    %v2184 = vpop.f32.mrb[0].mxu0
    %v2185 = vadd.f32 0.0, %v2184
    %v2186 = vpop.f32.mrb[0].mxu0
    %v2187 = vadd.f32 0.0, %v2186
    %v2188 = vpop.f32.mrb[0].mxu0
    %v2189 = vpop.f32.mrb[0].mxu0
    %2190 = vdwg.mxu0
    %2191 = vmatprep.subr.bf16.mxu0 %v320
    %2192 = vmatpush1.bf16.msra.mxu0 %v319
    %2193 = vmatprep.subr.bf16.mxu0 %v324
    %2194 = vmatpush1.bf16.msra.mxu0 %v323
    %2195 = vmatprep.subr.bf16.mxu0 %v328
    %2196 = vmatpush1.bf16.msra.mxu0 %v327
    %2197 = vmatprep.subr.bf16.mxu0 %v332
    %2198 = vmatpush1.bf16.msra.mxu0 %v331
    %2199 = vmatprep.subr.bf16.mxu0 %v336
    %2200 = vmatpush1.bf16.msra.mxu0 %v335
    %2201 = vmatprep.subr.bf16.mxu0 %v340
    %2202 = vmatpush1.bf16.msra.mxu0 %v339
    %2203 = vmatprep.subr.bf16.mxu0 %v344
    %2204 = vmatpush1.bf16.msra.mxu0 %v343
    %2205 = vmatprep.subr.bf16.mxu0 %v348
    %2206 = vmatpush1.bf16.msra.mxu0 %v347
    %2207 = vmatprep.subr.bf16.mxu0 0
    %2208 = vmatpush1.bf16.msra.mxu0 0
    %2209 = vmatprep.subr.bf16.mxu0 0
    %2210 = vmatpush1.bf16.msra.mxu0 0
    %2211 = vmatprep.subr.bf16.mxu0 0
    %2212 = vmatpush1.bf16.msra.mxu0 0
    %2213 = vmatprep.subr.bf16.mxu0 0
    %2214 = vmatpush1.bf16.msra.mxu0 0
    %2215 = vmatprep.subr.bf16.mxu0 0
    %2216 = vmatpush1.bf16.msra.mxu0 0
    %2217 = vmatprep.subr.bf16.mxu0 0
    %2218 = vmatpush1.bf16.msra.mxu0 0
    %2219 = vmatprep.subr.bf16.mxu0 0
    %2220 = vmatpush1.bf16.msra.mxu0 0
    %2221 = vmatprep.subr.bf16.mxu0 0
    %2222 = vmatpush1.bf16.msra.mxu0 0
    %2223 = vmatprep.mubr.bf16.mxu0 0
    %2224 = vmatmul.mubr.bf16.gmra.mrb[0].mxu0 %v2043
    %v2225 = vpop.f32.mrb[0].mxu0
    %v2226 = vadd.f32 0.0, %v2225
    %v2227 = vpop.f32.mrb[0].mxu0
    %v2228 = vadd.f32 0.0, %v2227
    %v2229 = vpop.f32.mrb[0].mxu0
    %v2230 = vpop.f32.mrb[0].mxu0
    %2231 = vdwg.mxu0
    %v2236 = vcombine.low %v2185, %v2187
    %v2237 = vcombine.low %v2226, %v2228
    %v2239 = vunpack.c.l.s4 1966171168
    %v2240 = vunpack.c.0.s8 %v2239
    %v2241 = vlaneseq
    %v2242 = vshrl.u32 %v2241, 7
    %v2243 = vsub.s32 %v2240, %v2242
    %v2244 = vrot.slane %v2236, %v2243
    %v2246 = vunpack.c.l.s4 1966171168
    %v2247 = vunpack.c.0.s8 %v2246
    %v2248 = vlaneseq
    %v2249 = vshrl.u32 %v2248, 7
    %v2250 = vsub.s32 %v2247, %v2249
    %v2251 = vrot.slane %v2237, %v2250
    %v2252 = vcombine.low %v2244, %v2251
    %v2254 = vunpack.c.l.s4 1966171168
    %v2255 = vunpack.c.0.s8 %v2254
    %v2256 = vlaneseq
    %v2257 = vshrl.u32 %v2256, 7
    %v2258 = vsub.s32 %v2255, %v2257
    %v2259 = vrot.slane %v2252, %v2258
    %v2261 = vadd.f32 %v2149, %v2259
    %v2262 = vsub.f32 0.0, %v2261
    %v2263 = vmul.f32 %v2262, 1.442695
    %v2264 = vpow.pop %v2263
    %v2265 = vadd.f32 %v2264, 1.0
    %v2266 = vrcp.pop %v2265
    %v2268 = vrot.slane %v2261, 3
    %v2270 = vtanh.pop %v2268
    %v2272 = vrot.slane %v2266, 1
    %v2274 = vmul.f32 %v2272, %v2038
    %v2275 = vmul.f32 %v2266, %v2270
    %v2276 = vadd.f32 %v2274, %v2275
    %v2277 = vtanh.pop %v2276
    %v2278 = vrot.slane %v2266, 2
    %v2280 = vmul.f32 %v2278, %v2277
    %v2281 = vpack.c.bf16 %v2280, %v2280
    %v2282 = vpack.c.bf16 %v2147, %v2147
    %2283 = vmatprep.subr.bf16.mxu0 %v707
    %2284 = vmatpush1.bf16.msra.mxu0 %v706
    %2285 = vmatprep.subr.bf16.mxu0 %v711
    %2286 = vmatpush1.bf16.msra.mxu0 %v710
    %2287 = vmatprep.subr.bf16.mxu0 %v715
    %2288 = vmatpush1.bf16.msra.mxu0 %v714
    %2289 = vmatprep.subr.bf16.mxu0 %v719
    %2290 = vmatpush1.bf16.msra.mxu0 %v718
    %2291 = vmatprep.subr.bf16.mxu0 %v723
    %2292 = vmatpush1.bf16.msra.mxu0 %v722
    %2293 = vmatprep.subr.bf16.mxu0 %v727
    %2294 = vmatpush1.bf16.msra.mxu0 %v726
    %2295 = vmatprep.subr.bf16.mxu0 %v731
    %2296 = vmatpush1.bf16.msra.mxu0 %v730
    %2297 = vmatprep.subr.bf16.mxu0 %v735
    %2298 = vmatpush1.bf16.msra.mxu0 %v734
    %2299 = vmatprep.subr.bf16.mxu0 %v739
    %2300 = vmatpush1.bf16.msra.mxu0 %v738
    %2301 = vmatprep.subr.bf16.mxu0 %v743
    %2302 = vmatpush1.bf16.msra.mxu0 %v742
    %2303 = vmatprep.subr.bf16.mxu0 %v747
    %2304 = vmatpush1.bf16.msra.mxu0 %v746
    %2305 = vmatprep.subr.bf16.mxu0 %v751
    %2306 = vmatpush1.bf16.msra.mxu0 %v750
    %2307 = vmatprep.subr.bf16.mxu0 %v755
    %2308 = vmatpush1.bf16.msra.mxu0 %v754
    %2309 = vmatprep.subr.bf16.mxu0 %v759
    %2310 = vmatpush1.bf16.msra.mxu0 %v758
    %2311 = vmatprep.subr.bf16.mxu0 %v763
    %2312 = vmatpush1.bf16.msra.mxu0 %v762
    %2313 = vmatprep.subr.bf16.mxu0 %v767
    %2314 = vmatpush1.bf16.msra.mxu0 %v766
    %2315 = vmatprep.mubr.bf16.mxu0 %v2282
    %2316 = vmatmul.mubr.bf16.gmra.mrb[0].mxu0 %v2281
    %v2317 = vpop.f32.mrb[0].mxu0
    %v2318 = vadd.f32 %v838, %v2317
    %v2319 = vpop.f32.mrb[0].mxu0
    %v2320 = vadd.f32 %v842, %v2319
    %v2321 = vpop.f32.mrb[0].mxu0
    %v2322 = vpop.f32.mrb[0].mxu0
    %2323 = vdwg.mxu0
    %2324 = vmatprep.subr.bf16.mxu0 %v709
    %2325 = vmatpush1.bf16.msra.mxu0 %v708
    %2326 = vmatprep.subr.bf16.mxu0 %v713
    %2327 = vmatpush1.bf16.msra.mxu0 %v712
    %2328 = vmatprep.subr.bf16.mxu0 %v717
    %2329 = vmatpush1.bf16.msra.mxu0 %v716
    %2330 = vmatprep.subr.bf16.mxu0 %v721
    %2331 = vmatpush1.bf16.msra.mxu0 %v720
    %2332 = vmatprep.subr.bf16.mxu0 %v725
    %2333 = vmatpush1.bf16.msra.mxu0 %v724
    %2334 = vmatprep.subr.bf16.mxu0 %v729
    %2335 = vmatpush1.bf16.msra.mxu0 %v728
    %2336 = vmatprep.subr.bf16.mxu0 %v733
    %2337 = vmatpush1.bf16.msra.mxu0 %v732
    %2338 = vmatprep.subr.bf16.mxu0 %v737
    %2339 = vmatpush1.bf16.msra.mxu0 %v736
    %2340 = vmatprep.subr.bf16.mxu0 %v741
    %2341 = vmatpush1.bf16.msra.mxu0 %v740
    %2342 = vmatprep.subr.bf16.mxu0 %v745
    %2343 = vmatpush1.bf16.msra.mxu0 %v744
    %2344 = vmatprep.subr.bf16.mxu0 %v749
    %2345 = vmatpush1.bf16.msra.mxu0 %v748
    %2346 = vmatprep.subr.bf16.mxu0 %v753
    %2347 = vmatpush1.bf16.msra.mxu0 %v752
    %2348 = vmatprep.subr.bf16.mxu0 %v757
    %2349 = vmatpush1.bf16.msra.mxu0 %v756
    %2350 = vmatprep.subr.bf16.mxu0 %v761
    %2351 = vmatpush1.bf16.msra.mxu0 %v760
    %2352 = vmatprep.subr.bf16.mxu0 %v765
    %2353 = vmatpush1.bf16.msra.mxu0 %v764
    %2354 = vmatprep.subr.bf16.mxu0 %v769
    %2355 = vmatpush1.bf16.msra.mxu0 %v768
    %2356 = vmatprep.mubr.bf16.mxu0 %v2282
    %2357 = vmatmul.mubr.bf16.gmra.mrb[0].mxu0 %v2281
    %v2358 = vpop.f32.mrb[0].mxu0
    %v2359 = vadd.f32 %v846, %v2358
    %v2360 = vpop.f32.mrb[0].mxu0
    %v2361 = vadd.f32 %v850, %v2360
    %v2362 = vpop.f32.mrb[0].mxu0
    %v2363 = vpop.f32.mrb[0].mxu0
    %2364 = vdwg.mxu0
    %v2365 = vsub.f32 0.0, %v2318
    %v2366 = vsub.f32 0.0, %v2320
    %v2367 = vsub.f32 0.0, %v2359
    %v2368 = vmul.f32 %v2365, 1.442695
    %v2369 = vpow.pop %v2368
    %v2370 = vmul.f32 %v2366, 1.442695
    %v2371 = vpow.pop %v2370
    %v2372 = vmul.f32 %v2367, 1.442695
    %v2373 = vpow.pop %v2372
    %v2374 = vadd.f32 %v2369, 1.0
    %v2375 = vadd.f32 %v2371, 1.0
    %v2376 = vadd.f32 %v2373, 1.0
    %v2377 = vrcp.pop %v2374
    %v2378 = vrcp.pop %v2375
    %v2379 = vrcp.pop %v2376
    %v2380 = vtanh.pop %v2361
    %v2381 = vmul.f32 %v2378, %v2145
    %v2382 = vmul.f32 %v2377, %v2380
    %v2383 = vadd.f32 %v2381, %v2382
    %v2384 = vtanh.pop %v2383
    %v2385 = vmul.f32 %v2379, %v2384
    %s2386 = scalar_lea.vmem [#allocation2], 7
    %v2387 = vld [vmem:[%s2386] ss:$8 sm:$0xf]
    %2388 = vmatprep.subr.bf16.mxu0 %v318
    %2389 = vmatpush1.bf16.msra.mxu0 %v317
    %2390 = vmatprep.subr.bf16.mxu0 %v322
    %2391 = vmatpush1.bf16.msra.mxu0 %v321
    %2392 = vmatprep.subr.bf16.mxu0 %v326
    %2393 = vmatpush1.bf16.msra.mxu0 %v325
    %2394 = vmatprep.subr.bf16.mxu0 %v330
    %2395 = vmatpush1.bf16.msra.mxu0 %v329
    %2396 = vmatprep.subr.bf16.mxu0 %v334
    %2397 = vmatpush1.bf16.msra.mxu0 %v333
    %2398 = vmatprep.subr.bf16.mxu0 %v338
    %2399 = vmatpush1.bf16.msra.mxu0 %v337
    %2400 = vmatprep.subr.bf16.mxu0 %v342
    %2401 = vmatpush1.bf16.msra.mxu0 %v341
    %2402 = vmatprep.subr.bf16.mxu0 %v346
    %2403 = vmatpush1.bf16.msra.mxu0 %v345
    %2404 = vmatprep.subr.bf16.mxu0 0
    %2405 = vmatpush1.bf16.msra.mxu0 0
    %2406 = vmatprep.subr.bf16.mxu0 0
    %2407 = vmatpush1.bf16.msra.mxu0 0
    %2408 = vmatprep.subr.bf16.mxu0 0
    %2409 = vmatpush1.bf16.msra.mxu0 0
    %2410 = vmatprep.subr.bf16.mxu0 0
    %2411 = vmatpush1.bf16.msra.mxu0 0
    %2412 = vmatprep.subr.bf16.mxu0 0
    %2413 = vmatpush1.bf16.msra.mxu0 0
    %2414 = vmatprep.subr.bf16.mxu0 0
    %2415 = vmatpush1.bf16.msra.mxu0 0
    %2416 = vmatprep.subr.bf16.mxu0 0
    %2417 = vmatpush1.bf16.msra.mxu0 0
    %2418 = vmatprep.subr.bf16.mxu0 0
    %2419 = vmatpush1.bf16.msra.mxu0 0
    %2420 = vmatprep.mubr.bf16.mxu0 0
    %2421 = vmatmul.mubr.bf16.gmra.mrb[0].mxu0 %v2281
    %v2422 = vpop.f32.mrb[0].mxu0
    %v2423 = vadd.f32 0.0, %v2422
    %v2424 = vpop.f32.mrb[0].mxu0
    %v2425 = vadd.f32 0.0, %v2424
    %v2426 = vpop.f32.mrb[0].mxu0
    %v2427 = vpop.f32.mrb[0].mxu0
    %2428 = vdwg.mxu0
    %2429 = vmatprep.subr.bf16.mxu0 %v320
    %2430 = vmatpush1.bf16.msra.mxu0 %v319
    %2431 = vmatprep.subr.bf16.mxu0 %v324
    %2432 = vmatpush1.bf16.msra.mxu0 %v323
    %2433 = vmatprep.subr.bf16.mxu0 %v328
    %2434 = vmatpush1.bf16.msra.mxu0 %v327
    %2435 = vmatprep.subr.bf16.mxu0 %v332
    %2436 = vmatpush1.bf16.msra.mxu0 %v331
    %2437 = vmatprep.subr.bf16.mxu0 %v336
    %2438 = vmatpush1.bf16.msra.mxu0 %v335
    %2439 = vmatprep.subr.bf16.mxu0 %v340
    %2440 = vmatpush1.bf16.msra.mxu0 %v339
    %2441 = vmatprep.subr.bf16.mxu0 %v344
    %2442 = vmatpush1.bf16.msra.mxu0 %v343
    %2443 = vmatprep.subr.bf16.mxu0 %v348
    %2444 = vmatpush1.bf16.msra.mxu0 %v347
    %2445 = vmatprep.subr.bf16.mxu0 0
    %2446 = vmatpush1.bf16.msra.mxu0 0
    %2447 = vmatprep.subr.bf16.mxu0 0
    %2448 = vmatpush1.bf16.msra.mxu0 0
    %2449 = vmatprep.subr.bf16.mxu0 0
    %2450 = vmatpush1.bf16.msra.mxu0 0
    %2451 = vmatprep.subr.bf16.mxu0 0
    %2452 = vmatpush1.bf16.msra.mxu0 0
    %2453 = vmatprep.subr.bf16.mxu0 0
    %2454 = vmatpush1.bf16.msra.mxu0 0
    %2455 = vmatprep.subr.bf16.mxu0 0
    %2456 = vmatpush1.bf16.msra.mxu0 0
    %2457 = vmatprep.subr.bf16.mxu0 0
    %2458 = vmatpush1.bf16.msra.mxu0 0
    %2459 = vmatprep.subr.bf16.mxu0 0
    %2460 = vmatpush1.bf16.msra.mxu0 0
    %2461 = vmatprep.mubr.bf16.mxu0 0
    %2462 = vmatmul.mubr.bf16.gmra.mrb[0].mxu0 %v2281
    %v2463 = vpop.f32.mrb[0].mxu0
    %v2464 = vadd.f32 0.0, %v2463
    %v2465 = vpop.f32.mrb[0].mxu0
    %v2466 = vadd.f32 0.0, %v2465
    %v2467 = vpop.f32.mrb[0].mxu0
    %v2468 = vpop.f32.mrb[0].mxu0
    %2469 = vdwg.mxu0
    %v2474 = vcombine.low %v2423, %v2425
    %v2475 = vcombine.low %v2464, %v2466
    %v2477 = vunpack.c.l.s4 1966171168
    %v2478 = vunpack.c.0.s8 %v2477
    %v2479 = vlaneseq
    %v2480 = vshrl.u32 %v2479, 7
    %v2481 = vsub.s32 %v2478, %v2480
    %v2482 = vrot.slane %v2474, %v2481
    %v2484 = vunpack.c.l.s4 1966171168
    %v2485 = vunpack.c.0.s8 %v2484
    %v2486 = vlaneseq
    %v2487 = vshrl.u32 %v2486, 7
    %v2488 = vsub.s32 %v2485, %v2487
    %v2489 = vrot.slane %v2475, %v2488
    %v2490 = vcombine.low %v2482, %v2489
    %v2492 = vunpack.c.l.s4 1966171168
    %v2493 = vunpack.c.0.s8 %v2492
    %v2494 = vlaneseq
    %v2495 = vshrl.u32 %v2494, 7
    %v2496 = vsub.s32 %v2493, %v2495
    %v2497 = vrot.slane %v2490, %v2496
    %v2499 = vadd.f32 %v2387, %v2497
    %v2500 = vsub.f32 0.0, %v2499
    %v2501 = vmul.f32 %v2500, 1.442695
    %v2502 = vpow.pop %v2501
    %v2503 = vadd.f32 %v2502, 1.0
    %v2504 = vrcp.pop %v2503
    %v2506 = vrot.slane %v2499, 3
    %v2508 = vtanh.pop %v2506
    %v2510 = vrot.slane %v2504, 1
    %v2512 = vmul.f32 %v2510, %v2276
    %v2513 = vmul.f32 %v2504, %v2508
    %v2514 = vadd.f32 %v2512, %v2513
    %v2515 = vtanh.pop %v2514
    %v2516 = vrot.slane %v2504, 2
    %v2518 = vmul.f32 %v2516, %v2515
    %v2519 = vpack.c.bf16 %v2518, %v2518
    %v2520 = vpack.c.bf16 %v2385, %v2385
    %2521 = vmatprep.subr.bf16.mxu0 %v707
    %2522 = vmatpush1.bf16.msra.mxu0 %v706
    %2523 = vmatprep.subr.bf16.mxu0 %v711
    %2524 = vmatpush1.bf16.msra.mxu0 %v710
    %2525 = vmatprep.subr.bf16.mxu0 %v715
    %2526 = vmatpush1.bf16.msra.mxu0 %v714
    %2527 = vmatprep.subr.bf16.mxu0 %v719
    %2528 = vmatpush1.bf16.msra.mxu0 %v718
    %2529 = vmatprep.subr.bf16.mxu0 %v723
    %2530 = vmatpush1.bf16.msra.mxu0 %v722
    %2531 = vmatprep.subr.bf16.mxu0 %v727
    %2532 = vmatpush1.bf16.msra.mxu0 %v726
    %2533 = vmatprep.subr.bf16.mxu0 %v731
    %2534 = vmatpush1.bf16.msra.mxu0 %v730
    %2535 = vmatprep.subr.bf16.mxu0 %v735
    %2536 = vmatpush1.bf16.msra.mxu0 %v734
    %2537 = vmatprep.subr.bf16.mxu0 %v739
    %2538 = vmatpush1.bf16.msra.mxu0 %v738
    %2539 = vmatprep.subr.bf16.mxu0 %v743
    %2540 = vmatpush1.bf16.msra.mxu0 %v742
    %2541 = vmatprep.subr.bf16.mxu0 %v747
    %2542 = vmatpush1.bf16.msra.mxu0 %v746
    %2543 = vmatprep.subr.bf16.mxu0 %v751
    %2544 = vmatpush1.bf16.msra.mxu0 %v750
    %2545 = vmatprep.subr.bf16.mxu0 %v755
    %2546 = vmatpush1.bf16.msra.mxu0 %v754
    %2547 = vmatprep.subr.bf16.mxu0 %v759
    %2548 = vmatpush1.bf16.msra.mxu0 %v758
    %2549 = vmatprep.subr.bf16.mxu0 %v763
    %2550 = vmatpush1.bf16.msra.mxu0 %v762
    %2551 = vmatprep.subr.bf16.mxu0 %v767
    %2552 = vmatpush1.bf16.msra.mxu0 %v766
    %2553 = vmatprep.mubr.bf16.mxu0 %v2520
    %2554 = vmatmul.mubr.bf16.gmra.mrb[0].mxu0 %v2519
    %v2555 = vpop.f32.mrb[0].mxu0
    %v2556 = vadd.f32 %v838, %v2555
    %v2557 = vpop.f32.mrb[0].mxu0
    %v2558 = vadd.f32 %v842, %v2557
    %v2559 = vpop.f32.mrb[0].mxu0
    %v2560 = vpop.f32.mrb[0].mxu0
    %2561 = vdwg.mxu0
    %2562 = vmatprep.subr.bf16.mxu0 %v709
    %2563 = vmatpush1.bf16.msra.mxu0 %v708
    %2564 = vmatprep.subr.bf16.mxu0 %v713
    %2565 = vmatpush1.bf16.msra.mxu0 %v712
    %2566 = vmatprep.subr.bf16.mxu0 %v717
    %2567 = vmatpush1.bf16.msra.mxu0 %v716
    %2568 = vmatprep.subr.bf16.mxu0 %v721
    %2569 = vmatpush1.bf16.msra.mxu0 %v720
    %2570 = vmatprep.subr.bf16.mxu0 %v725
    %2571 = vmatpush1.bf16.msra.mxu0 %v724
    %2572 = vmatprep.subr.bf16.mxu0 %v729
    %2573 = vmatpush1.bf16.msra.mxu0 %v728
    %2574 = vmatprep.subr.bf16.mxu0 %v733
    %2575 = vmatpush1.bf16.msra.mxu0 %v732
    %2576 = vmatprep.subr.bf16.mxu0 %v737
    %2577 = vmatpush1.bf16.msra.mxu0 %v736
    %2578 = vmatprep.subr.bf16.mxu0 %v741
    %2579 = vmatpush1.bf16.msra.mxu0 %v740
    %2580 = vmatprep.subr.bf16.mxu0 %v745
    %2581 = vmatpush1.bf16.msra.mxu0 %v744
    %2582 = vmatprep.subr.bf16.mxu0 %v749
    %2583 = vmatpush1.bf16.msra.mxu0 %v748
    %2584 = vmatprep.subr.bf16.mxu0 %v753
    %2585 = vmatpush1.bf16.msra.mxu0 %v752
    %2586 = vmatprep.subr.bf16.mxu0 %v757
    %2587 = vmatpush1.bf16.msra.mxu0 %v756
    %2588 = vmatprep.subr.bf16.mxu0 %v761
    %2589 = vmatpush1.bf16.msra.mxu0 %v760
    %2590 = vmatprep.subr.bf16.mxu0 %v765
    %2591 = vmatpush1.bf16.msra.mxu0 %v764
    %2592 = vmatprep.subr.bf16.mxu0 %v769
    %2593 = vmatpush1.bf16.msra.mxu0 %v768
    %2594 = vmatprep.mubr.bf16.mxu0 %v2520
    %2595 = vmatmul.mubr.bf16.gmra.mrb[0].mxu0 %v2519
    %v2596 = vpop.f32.mrb[0].mxu0
    %v2597 = vadd.f32 %v846, %v2596
    %v2598 = vpop.f32.mrb[0].mxu0
    %v2599 = vadd.f32 %v850, %v2598
    %v2600 = vpop.f32.mrb[0].mxu0
    %v2601 = vpop.f32.mrb[0].mxu0
    %2602 = vdwg.mxu0
    %v2603 = vsub.f32 0.0, %v2556
    %v2604 = vsub.f32 0.0, %v2558
    %v2605 = vsub.f32 0.0, %v2597
    %v2606 = vmul.f32 %v2603, 1.442695
    %v2607 = vpow.pop %v2606
    %v2608 = vmul.f32 %v2604, 1.442695
    %v2609 = vpow.pop %v2608
    %v2610 = vmul.f32 %v2605, 1.442695
    %v2611 = vpow.pop %v2610
    %v2612 = vadd.f32 %v2607, 1.0
    %v2613 = vadd.f32 %v2609, 1.0
    %v2614 = vadd.f32 %v2611, 1.0
    %v2615 = vrcp.pop %v2612
    %v2616 = vrcp.pop %v2613
    %v2617 = vrcp.pop %v2614
    %v2618 = vtanh.pop %v2599
    %v2619 = vmul.f32 %v2616, %v2383
    %v2620 = vmul.f32 %v2615, %v2618
    %v2621 = vadd.f32 %v2619, %v2620
    %v2622 = vtanh.pop %v2621
    %v2623 = vmul.f32 %v2617, %v2622
    %v2624 = vld [vmem:[%s6] sm:$0xff]
    %v2625 = vld [vmem:[%s6 + $0x8] sm:$0xff]
    %v2626 = vld [vmem:[%s6 + $0x10] sm:$0xff]
    %v2627 = vld [vmem:[%s6 + $0x18] sm:$0xff]
    %v2628 = vld [vmem:[%s6 + $0x20] sm:$0xff]
    %v2629 = vld [vmem:[%s6 + $0x28] sm:$0xff]
    %v2630 = vld [vmem:[%s6 + $0x30] sm:$0xff]
    %v2631 = vld [vmem:[%s6 + $0x38] sm:$0xff]
    %v2632 = vld [vmem:[%s6 + $0x40] sm:$0xff]
    %v2633 = vld [vmem:[%s6 + $0x48] sm:$0xff]
    %v2634 = vld [vmem:[%s6 + $0x50] sm:$0xff]
    %v2635 = vld [vmem:[%s6 + $0x58] sm:$0xff]
    %v2636 = vld [vmem:[%s6 + $0x60] sm:$0xff]
    %v2637 = vld [vmem:[%s6 + $0x68] sm:$0xff]
    %v2638 = vld [vmem:[%s6 + $0x70] sm:$0xff]
    %v2639 = vld [vmem:[%s6 + $0x78] sm:$0xff]
    %v2640 = vld [vmem:[#allocation3] sm:$0x1]
    %2641 = vmatprep.subr.mxu0 0.0
    %2642 = vmatpush1.msra.mxu0 %v2624
    %2643 = vmatprep.subr.mxu0 0.0
    %2644 = vmatpush1.msra.mxu0 %v2625
    %2645 = vmatprep.subr.mxu0 0.0
    %2646 = vmatpush1.msra.mxu0 %v2626
    %2647 = vmatprep.subr.mxu0 0.0
    %2648 = vmatpush1.msra.mxu0 %v2627
    %2649 = vmatprep.subr.mxu0 0.0
    %2650 = vmatpush1.msra.mxu0 %v2628
    %2651 = vmatprep.subr.mxu0 0.0
    %2652 = vmatpush1.msra.mxu0 %v2629
    %2653 = vmatprep.subr.mxu0 0.0
    %2654 = vmatpush1.msra.mxu0 %v2630
    %2655 = vmatprep.subr.mxu0 0.0
    %2656 = vmatpush1.msra.mxu0 %v2631
    %2657 = vmatprep.subr.mxu0 0.0
    %2658 = vmatpush1.msra.mxu0 %v2632
    %2659 = vmatprep.subr.mxu0 0.0
    %2660 = vmatpush1.msra.mxu0 %v2633
    %2661 = vmatprep.subr.mxu0 0.0
    %2662 = vmatpush1.msra.mxu0 %v2634
    %2663 = vmatprep.subr.mxu0 0.0
    %2664 = vmatpush1.msra.mxu0 %v2635
    %2665 = vmatprep.subr.mxu0 0.0
    %2666 = vmatpush1.msra.mxu0 %v2636
    %2667 = vmatprep.subr.mxu0 0.0
    %2668 = vmatpush1.msra.mxu0 %v2637
    %2669 = vmatprep.subr.mxu0 0.0
    %2670 = vmatpush1.msra.mxu0 %v2638
    %2671 = vmatprep.subr.mxu0 0.0
    %2672 = vmatpush1.msra.mxu0 %v2639
    %2673 = vmatprep.subr.mxu0 0.0
    %2674 = vmatpush1.msra.mxu0 0.0
    %2675 = vmatprep.subr.mxu0 0.0
    %2676 = vmatpush1.msra.mxu0 0.0
    %2677 = vmatprep.subr.mxu0 0.0
    %2678 = vmatpush1.msra.mxu0 0.0
    %2679 = vmatprep.subr.mxu0 0.0
    %2680 = vmatpush1.msra.mxu0 0.0
    %2681 = vmatprep.subr.mxu0 0.0
    %2682 = vmatpush1.msra.mxu0 0.0
    %2683 = vmatprep.subr.mxu0 0.0
    %2684 = vmatpush1.msra.mxu0 0.0
    %2685 = vmatprep.subr.mxu0 0.0
    %2686 = vmatpush1.msra.mxu0 0.0
    %2687 = vmatprep.subr.mxu0 0.0
    %2688 = vmatpush1.msra.mxu0 0.0
    %2689 = vmatprep.subr.mxu0 0.0
    %2690 = vmatpush1.msra.mxu0 0.0
    %2691 = vmatprep.subr.mxu0 0.0
    %2692 = vmatpush1.msra.mxu0 0.0
    %2693 = vmatprep.subr.mxu0 0.0
    %2694 = vmatpush1.msra.mxu0 0.0
    %2695 = vmatprep.subr.mxu0 0.0
    %2696 = vmatpush1.msra.mxu0 0.0
    %2697 = vmatprep.subr.mxu0 0.0
    %2698 = vmatpush1.msra.mxu0 0.0
    %2699 = vmatprep.subr.mxu0 0.0
    %2700 = vmatpush1.msra.mxu0 0.0
    %2701 = vmatprep.subr.mxu0 0.0
    %2702 = vmatpush1.msra.mxu0 0.0
    %2703 = vmatprep.subr.mxu0 0.0
    %2704 = vmatpush1.msra.mxu0 0.0
    %2705 = vmatprep.mubr.f32.mxu0 0.0
    %2706 = vmatmul.mubr.f32.gmra.mrb[0].mxu0 %v2623
    %v2707 = vpop.f32.mrb[0].mxu0
    %v2708 = vadd.f32 %v2640, %v2707
    %v2709 = vpop.f32.mrb[0].mxu0
    %2710 = vdwg.mxu0
    %vm2711 = vcmask 0
    %2712 = vst.msk [vmem:[#allocation9] sm:$0x1] %vm2711, %v2708
    // Predicated region
    $region42: #{tpu_custom_call.1} parent=1 // pred_check
      _
    $region43: #{tpu_custom_call.1} parent=1 // pred_check_branch
      %2714 = sbr.rel (0) target = $region45
    $region44: #{tpu_custom_call.1} parent=1 // pred_region
      %s2716 = ssub.s32 16, 16
      %2717 = vsyncadd [#allocation6], %s2716
      %s2719 = sshll.u32 [#allocation9], 4
      %s2720 = int_to_ptr.vmem [resolvable:$true] %s2719
      %2722 = dma.vmem_to_hbm [thread:$0]  %s2720, 16, %s8, [#allocation6]
    $region45: #{tpu_custom_call.1} parent=1 // pred_fallthru
      _
    // Predicated region
    $region46: #{tpu_custom_call.1} parent=1 // pred_check
      _
    $region47: #{tpu_custom_call.1} parent=1 // pred_check_branch
      %2724 = sbr.rel (0) target = $region49
    $region48: #{tpu_custom_call.1} parent=1 // pred_region
      %2725 = dma.done [#allocation6], 16
    $region49: #{tpu_custom_call.1} parent=1 // pred_fallthru
      _
    %2726 = vsyncpa [#allocation5], 1
    %2727 = vsyncpa [#allocation8], 1
    %2728 = vsyncpa [#allocation6], 1

</llo_original>
